<compile_context>
chip_gen: v7x
topology: tpu7x:2x2x1
jax: 0.10.0
libtpu: 0.0.40
codegen_flags: <defaults>
</compile_context>

<pallas_src>
import functools

import jax
import jax.numpy as jnp
from jax.experimental import pallas as pl
from jax.experimental.pallas import tpu as pltpu

BN_EPS = 1e-5


def _round_up(v, m):
    return (v + m - 1) // m * m


def _vmem_limit_bytes():
    """Generation-dependent scoped-VMEM budget (v5e/v6e: ~96 MiB, v7x: ~48 MiB)."""
    cap = 64 * 1024 * 1024
    try:
        info = pltpu.get_tpu_info()
        cap = int(getattr(info, "vmem_capacity_bytes", cap))
    except Exception:
        pass
    return max(32 << 20, min((cap * 3) // 4, 100 << 20))


def _lane_tile(r, cap=4096):
    """Largest multiple of 128 dividing r, capped at `cap`."""
    if r <= cap:
        return r
    m = r // 128
    for d in range(min(m, cap // 128), 0, -1):
        if m % d == 0:
            return d * 128
    return 128


# --------------------------------------------------------------------------- #
# Kernel 1: fused (optional input-BN+ReLU) + 3x3 conv (9 accumulated MXU dots)
#           + single-pass per-image BN partial sums.
# --------------------------------------------------------------------------- #
def _conv_stats_kernel(*refs, pre_norm, halo, wp, chunk, n_chunks, compute_dtype):
    if pre_norm:
        (x_ref, w_ref, mask_ref, scale_ref, shift_ref,
         out_ref, psum_ref, xs_ref) = refs
    else:
        x_ref, w_ref, mask_ref, out_ref, psum_ref = refs
        xs_ref = scale_ref = shift_ref = None

    # x_ref   : (1, Cin, R)   conv input, halo'd flat layout, bf16
    # w_ref   : (9, Cout, Cin) conv taps, bf16
    # mask_ref: (1, R)        interior mask (1 on valid output positions), f32
    # out_ref : (1, Cout, R)  raw conv output (pre-BN), bf16
    # psum_ref: (1, Cout, 2)  per-image (sum, sum_sq) over interior positions
    # xs_ref  : (Cin, R)      bf16 scratch (only when pre_norm): BN+ReLU'd input
    cout = out_ref.shape[1]
    r = out_ref.shape[2]
    span = n_chunks * chunk

    if pre_norm:
        # Fold the previous layer's BN + ReLU in here (f32 affine, single bf16
        # cast on store); the mask re-zeroes padding/halo lanes so they act as
        # conv zero-padding for this layer.
        xraw = x_ref[0].astype(jnp.float32)                       # (Cin, R)
        xact = jnp.maximum(xraw * scale_ref[...] + shift_ref[...], 0.0)
        xs_ref[...] = (xact * mask_ref[...]).astype(compute_dtype)

    def load_win(start):
        if pre_norm:
            return xs_ref[:, pl.ds(start, chunk)]
        return x_ref[0, :, pl.ds(start, chunk)]                   # conv1: no copy

    # Zero the never-written halo / tail lanes of the output so downstream
    # consumers never read uninitialized VMEM (NaN-safety) and those lanes act
    # as zero padding for the next conv.
    out_ref[0, :, :halo] = jnp.zeros((cout, halo), out_ref.dtype)
    tail = r - halo - span
    if tail > 0:
        out_ref[0, :, halo + span:] = jnp.zeros((cout, tail), out_ref.dtype)

    w_all = w_ref[...]                                            # (9, Cout, Cin)

    def chunk_body(c, carry):
        s_tot, ss_tot = carry
        base = halo + c * chunk
        acc = jnp.zeros((cout, chunk), jnp.float32)
        # 9 accumulated MXU dots -- no im2col concatenate / staging copy.
        for t in range(9):
            dy, dx = t // 3 - 1, t % 3 - 1
            win = load_win(base + dy * wp + dx)                   # (Cin, chunk) bf16
            acc = acc + jnp.dot(w_all[t], win,
                                preferred_element_type=jnp.float32)
        # Single-pass BN statistics over interior positions only, from the f32
        # accumulator (before the bf16 store).
        m = mask_ref[:, pl.ds(base, chunk)]                       # (1, chunk)
        am = acc * m
        s_tot = s_tot + jnp.sum(am, axis=1, keepdims=True)
        ss_tot = ss_tot + jnp.sum(am * acc, axis=1, keepdims=True)
        out_ref[0, :, pl.ds(base, chunk)] = acc.astype(out_ref.dtype)
        return s_tot, ss_tot

    init = (jnp.zeros((cout, 1), jnp.float32),
            jnp.zeros((cout, 1), jnp.float32))
    if n_chunks <= 4:
        carry = init
        for c in range(n_chunks):          # small trip count: static unroll
            carry = chunk_body(c, carry)
        s_tot, ss_tot = carry
    else:                                   # large images: real loop boundary
        s_tot, ss_tot = jax.lax.fori_loop(0, n_chunks, chunk_body, init)

    psum_ref[0] = jnp.concatenate([s_tot, ss_tot], axis=1)        # (Cout, 2)


def _conv_layer(x_halo, w_taps, mask, geom, compute_dtype,
                in_scale=None, in_shift=None):
    n, cin, r = x_halo.shape
    cout = w_taps.shape[1]
    halo, wp, chunk, n_chunks = geom
    pre_norm = in_scale is not None

    in_specs = [
        pl.BlockSpec((1, cin, r), lambda i: (i, 0, 0)),
        pl.BlockSpec((9, cout, cin), lambda i: (0, 0, 0)),        # resident
        pl.BlockSpec((1, r), lambda i: (0, 0)),                   # resident
    ]
    args = [x_halo, w_taps, mask]
    scratch = []
    if pre_norm:
        in_specs += [pl.BlockSpec((cin, 1), lambda i: (0, 0)),
                     pl.BlockSpec((cin, 1), lambda i: (0, 0))]
        args += [in_scale, in_shift]
        scratch = [pltpu.VMEM((cin, r), compute_dtype)]           # bf16 scratch

    kernel = functools.partial(
        _conv_stats_kernel, pre_norm=pre_norm, halo=halo, wp=wp,
        chunk=chunk, n_chunks=n_chunks, compute_dtype=compute_dtype)

    return pl.pallas_call(
        kernel,
        out_shape=(jax.ShapeDtypeStruct((n, cout, r), compute_dtype),
                   jax.ShapeDtypeStruct((n, cout, 2), jnp.float32)),
        grid=(n,),
        in_specs=in_specs,
        out_specs=(pl.BlockSpec((1, cout, r), lambda i: (i, 0, 0)),
                   pl.BlockSpec((1, cout, 2), lambda i: (i, 0, 0))),
        scratch_shapes=scratch,
        compiler_params=pltpu.CompilerParams(
            dimension_semantics=("parallel",),
            vmem_limit_bytes=_vmem_limit_bytes()),
    )(*args)


# --------------------------------------------------------------------------- #
# Kernel 2: final bn2 affine + residual add + ReLU, tiled over the lane axis.
# --------------------------------------------------------------------------- #
def _bn_add_relu_kernel(raw_ref, res_ref, scale_ref, shift_ref, out_ref):
    y = (raw_ref[0].astype(jnp.float32) * scale_ref[...] + shift_ref[...]
         + res_ref[0].astype(jnp.float32))
    out_ref[0] = jnp.maximum(y, 0.0)


def _bn_add_relu(raw, res, scale, shift):
    n, c, r = raw.shape
    tr = _lane_tile(r)
    return pl.pallas_call(
        _bn_add_relu_kernel,
        out_shape=jax.ShapeDtypeStruct((n, c, r), jnp.float32),
        grid=(n, r // tr),
        in_specs=[pl.BlockSpec((1, c, tr), lambda i, j: (i, 0, j)),
                  pl.BlockSpec((1, c, tr), lambda i, j: (i, 0, j)),
                  pl.BlockSpec((c, 1), lambda i, j: (0, 0)),
                  pl.BlockSpec((c, 1), lambda i, j: (0, 0))],
        out_specs=pl.BlockSpec((1, c, tr), lambda i, j: (i, 0, j)),
        compiler_params=pltpu.CompilerParams(
            dimension_semantics=("parallel", "parallel"),
            vmem_limit_bytes=_vmem_limit_bytes()),
    )(raw, res, scale, shift)


# --------------------------------------------------------------------------- #
# Plain-JAX glue (tiny, (C,)-sized): (sum, sum_sq) partials -> BN affine.
# Training-mode batch stats, biased variance.
# --------------------------------------------------------------------------- #
def _bn_affine(psum, count, gamma, beta):
    s = jnp.sum(psum[:, :, 0], axis=0)
    ss = jnp.sum(psum[:, :, 1], axis=0)
    mean = s / count
    var = ss / count - mean * mean
    scale = gamma * jax.lax.rsqrt(var + BN_EPS)
    shift = beta - mean * scale
    return (scale.reshape(-1, 1).astype(jnp.float32),
            shift.reshape(-1, 1).astype(jnp.float32))


def _interior_mask(h, w, halo, r):
    hp, wp = h + 2, w + 2
    q = jnp.arange(r) - halo                  # flattened padded-grid position
    hh = q // wp
    ww = q % wp
    inside = ((q >= 0) & (q < hp * wp) &
              (hh >= 1) & (hh <= h) & (ww >= 1) & (ww <= w))
    return inside.astype(jnp.float32).reshape(1, r)


def basic_block_forward(x_nchw, w1, g1, b1, w2, g2, b2,
                        compute_dtype=jnp.bfloat16):
    """BasicBlock forward (stride=1, downsample=None).  Input/output are NCHW."""
    n, c, h, w = x_nchw.shape
    planes = w1.shape[0]
    hp, wp = h + 2, w + 2
    lp = hp * wp
    halo = wp + 1                              # max 3x3 tap offset in flat coords
    chunk = min(1024, _round_up(lp, 128))      # lane chunk (multiple of 128)
    n_chunks = -(-lp // chunk)
    span = n_chunks * chunk
    r = _round_up(span + 2 * halo, 128)        # lane-dense storage width

    # NCHW -> (N, C, R) bf16: pad spatially, flatten the padded grid onto the
    # lane axis, add zero halo lanes.  Half the HBM bytes of the f32 version;
    # also reused as the residual (bf16 rounding of the residual only).
    x_pad = jnp.pad(x_nchw, ((0, 0), (0, 0), (1, 1), (1, 1)))
    x_halo = jnp.pad(x_pad.reshape(n, c, lp),
                     ((0, 0), (0, 0), (halo, r - lp - halo))).astype(compute_dtype)

    mask = _interior_mask(h, w, halo, r)

    # Conv taps as (9, Cout, Cin), tap index t = ky*3 + kx, bf16.
    w1_t = jnp.transpose(w1, (2, 3, 0, 1)).reshape(9, planes, c).astype(compute_dtype)
    w2_t = jnp.transpose(w2, (2, 3, 0, 1)).reshape(9, planes, planes).astype(compute_dtype)

    count = float(n * h * w)
    geom = (halo, wp, chunk, n_chunks)

    # conv1 (+ BN1 partial stats)
    raw1, psum1 = _conv_layer(x_halo, w1_t, mask, geom, compute_dtype)
    scale1, shift1 = _bn_affine(psum1, count, g1, b1)

    # bn1 + relu folded into conv2's input path; conv2 (+ BN2 partial stats)
    raw2, psum2 = _conv_layer(raw1, w2_t, mask, geom, compute_dtype,
                              in_scale=scale1, in_shift=shift1)
    scale2, shift2 = _bn_affine(psum2, count, g2, b2)

    # bn2 + residual + relu
    out_halo = _bn_add_relu(raw2, x_halo, scale2, shift2)

    # Strip halo + spatial padding; already NCHW (fused into one XLA slice pass).
    out = out_halo[:, :, halo:halo + lp].reshape(n, planes, hp, wp)[:, :, 1:-1, 1:-1]
    return out


# --------------------------------------------------------------------------- #
# Pure-JAX reference (same bf16-operand / f32-accumulate convs) for checking.
# --------------------------------------------------------------------------- #
def _reference(x, w1, g1, b1, w2, g2, b2, compute_dtype):
    def conv(v, wt):
        return jax.lax.conv_general_dilated(
            v.astype(compute_dtype), wt.astype(compute_dtype),
            window_strides=(1, 1), padding=((1, 1), (1, 1)),
            dimension_numbers=("NCHW", "OIHW", "NCHW"),
            preferred_element_type=jnp.float32)

    def bn(v, g, b):
        m = jnp.mean(v, axis=(0, 2, 3), keepdims=True)
        var = jnp.mean((v - m) ** 2, axis=(0, 2, 3), keepdims=True)
        return ((v - m) * jax.lax.rsqrt(var + BN_EPS) * g.reshape(1, -1, 1, 1)
                + b.reshape(1, -1, 1, 1))

    out = jax.nn.relu(bn(conv(x, w1), g1, b1))
    out = bn(conv(out, w2), g2, b2) + x
    return jax.nn.relu(out)


if __name__ == "__main__":
    key = jax.random.PRNGKey(0)
    k_x, k_w1, k_w2, k_g1, k_b1, k_g2, k_b2 = jax.random.split(key, 7)

    N, C, H, W = 2, 4, 16, 16          # inplanes = planes = 4, stride = 1
    planes = C

    x = jax.random.normal(k_x, (N, C, H, W), jnp.float32)
    w1 = jax.random.normal(k_w1, (planes, C, 3, 3), jnp.float32) * 0.2
    w2 = jax.random.normal(k_w2, (planes, planes, 3, 3), jnp.float32) * 0.2
    g1 = 1.0 + 0.1 * jax.random.normal(k_g1, (planes,), jnp.float32)
    b1 = 0.1 * jax.random.normal(k_b1, (planes,), jnp.float32)
    g2 = 1.0 + 0.1 * jax.random.normal(k_g2, (planes,), jnp.float32)
    b2 = 0.1 * jax.random.normal(k_b2, (planes,), jnp.float32)

    fwd = jax.jit(lambda *a: basic_block_forward(*a))
    out = jax.block_until_ready(fwd(x, w1, g1, b1, w2, g2, b2))

    ref = _reference(x, w1, g1, b1, w2, g2, b2, jnp.bfloat16)
    assert out.shape == x.shape and out.dtype == jnp.float32
    max_err = float(jnp.max(jnp.abs(out - ref)))
    assert jnp.allclose(out, ref, atol=2e-2, rtol=2e-2), f"mismatch vs reference: {max_err}"

    print("KERNEL_OK")
</pallas_src>

<mosaic_0001>
module attributes {stable_mosaic.version = 11 : i64} {
  func.func @_bn_add_relu_kernel(%arg0: i32, %arg1: i32, %arg2: memref<1x4x512xbf16, #tpu.memory_space<vmem>>, %arg3: memref<1x4x512xbf16, #tpu.memory_space<vmem>>, %arg4: memref<4x1xf32, #tpu.memory_space<vmem>>, %arg5: memref<4x1xf32, #tpu.memory_space<vmem>>, %arg6: memref<1x4x512xf32, #tpu.memory_space<vmem>>) attributes {dimension_semantics = [#tpu.dimension_semantics<parallel>, #tpu.dimension_semantics<parallel>], iteration_bounds = array<i64: 2, 1>, scalar_prefetch = 0 : i64, scratch_operands = 0 : i64, tpu.core_type = #tpu.core_type<tc>, window_params = [{transform_indices = @transform_0, window_bounds = array<i64: 1, 4, 512>}, {transform_indices = @transform_1, window_bounds = array<i64: 1, 4, 512>}, {pipeline_mode = #tpu.pipeline_mode<synchronous>, transform_indices = @transform_2, window_bounds = array<i64: 4, 1>}, {pipeline_mode = #tpu.pipeline_mode<synchronous>, transform_indices = @transform_3, window_bounds = array<i64: 4, 1>}, {transform_indices = @transform_4, window_bounds = array<i64: 1, 4, 512>}]} {
    %c0 = arith.constant 0 : index
    %c0_0 = arith.constant 0 : index
    %c0_1 = arith.constant 0 : index
    %0 = vector.load %arg2[%c0, %c0_0, %c0_1] : memref<1x4x512xbf16, #tpu.memory_space<vmem>>, vector<1x4x512xbf16>
    %1 = vector.shape_cast %0 : vector<1x4x512xbf16> to vector<4x512xbf16>
    %2 = arith.extf %1 : vector<4x512xbf16> to vector<4x512xf32>
    %c0_2 = arith.constant 0 : index
    %c0_3 = arith.constant 0 : index
    %3 = vector.load %arg4[%c0_2, %c0_3] : memref<4x1xf32, #tpu.memory_space<vmem>>, vector<4x1xf32>
    %4 = vector.broadcast %3 : vector<4x1xf32> to vector<4x512xf32>
    %5 = arith.mulf %2, %4 : vector<4x512xf32>
    %c0_4 = arith.constant 0 : index
    %c0_5 = arith.constant 0 : index
    %6 = vector.load %arg5[%c0_4, %c0_5] : memref<4x1xf32, #tpu.memory_space<vmem>>, vector<4x1xf32>
    %7 = vector.broadcast %6 : vector<4x1xf32> to vector<4x512xf32>
    %8 = arith.addf %5, %7 : vector<4x512xf32>
    %c0_6 = arith.constant 0 : index
    %c0_7 = arith.constant 0 : index
    %c0_8 = arith.constant 0 : index
    %9 = vector.load %arg3[%c0_6, %c0_7, %c0_8] : memref<1x4x512xbf16, #tpu.memory_space<vmem>>, vector<1x4x512xbf16>
    %10 = vector.shape_cast %9 : vector<1x4x512xbf16> to vector<4x512xbf16>
    %11 = arith.extf %10 : vector<4x512xbf16> to vector<4x512xf32>
    %12 = arith.addf %8, %11 : vector<4x512xf32>
    %cst = arith.constant 0.000000e+00 : f32
    %13 = vector.broadcast %cst : f32 to vector<4x512xf32>
    %14 = arith.maximumf %12, %13 : vector<4x512xf32>
    %c0_9 = arith.constant 0 : index
    %c0_10 = arith.constant 0 : index
    %c0_11 = arith.constant 0 : index
    %15 = vector.load %arg6[%c0_9, %c0_10, %c0_11] : memref<1x4x512xf32, #tpu.memory_space<vmem>>, vector<1x4x512xf32>
    %16 = vector.shape_cast %15 : vector<1x4x512xf32> to vector<4x512xf32>
    %17 = vector.shape_cast %14 : vector<4x512xf32> to vector<1x4x512xf32>
    tpu.vector_store %arg6[%c0_9, %c0_10, %c0_11], %17 {strides = array<i32>} : memref<1x4x512xf32, #tpu.memory_space<vmem>>, vector<1x4x512xf32>,
    return
  }
  func.func @transform_0(%arg0: i32, %arg1: i32) -> (i32, i32, i32) {
    %c0_i32 = arith.constant 0 : i32
    %c0_i32_0 = arith.constant 0 : i32
    return %arg0, %c0_i32, %arg1 : i32, i32, i32
  }
  func.func @transform_1(%arg0: i32, %arg1: i32) -> (i32, i32, i32) {
    %c0_i32 = arith.constant 0 : i32
    %c0_i32_0 = arith.constant 0 : i32
    return %arg0, %c0_i32, %arg1 : i32, i32, i32
  }
  func.func @transform_2(%arg0: i32, %arg1: i32) -> (i32, i32) {
    %c0_i32 = arith.constant 0 : i32
    %c0_i32_0 = arith.constant 0 : i32
    %c0_i32_1 = arith.constant 0 : i32
    return %c0_i32, %c0_i32_0 : i32, i32
  }
  func.func @transform_3(%arg0: i32, %arg1: i32) -> (i32, i32) {
    %c0_i32 = arith.constant 0 : i32
    %c0_i32_0 = arith.constant 0 : i32
    %c0_i32_1 = arith.constant 0 : i32
    return %c0_i32, %c0_i32_0 : i32, i32
  }
  func.func @transform_4(%arg0: i32, %arg1: i32) -> (i32, i32, i32) {
    %c0_i32 = arith.constant 0 : i32
    %c0_i32_0 = arith.constant 0 : i32
    return %arg0, %c0_i32, %arg1 : i32, i32, i32
  }
}

module attributes {stable_mosaic.version = 11 : i64} {
  func.func @_conv_stats_kernel(%arg0: i32, %arg1: memref<1x4x512xbf16, #tpu.memory_space<vmem>>, %arg2: memref<9x4x4xbf16, #tpu.memory_space<vmem>>, %arg3: memref<1x512xf32, #tpu.memory_space<vmem>>, %arg4: memref<1x4x512xbf16, #tpu.memory_space<vmem>>, %arg5: memref<1x4x2xf32, #tpu.memory_space<vmem>>) attributes {dimension_semantics = [#tpu.dimension_semantics<parallel>], iteration_bounds = array<i64: 2>, scalar_prefetch = 0 : i64, scratch_operands = 0 : i64, tpu.core_type = #tpu.core_type<tc>, window_params = [{transform_indices = @transform_0, window_bounds = array<i64: 1, 4, 512>}, {pipeline_mode = #tpu.pipeline_mode<synchronous>, transform_indices = @transform_1, window_bounds = array<i64: 9, 4, 4>}, {pipeline_mode = #tpu.pipeline_mode<synchronous>, transform_indices = @transform_2, window_bounds = array<i64: 1, 512>}, {transform_indices = @transform_3, window_bounds = array<i64: 1, 4, 512>}, {transform_indices = @transform_4, window_bounds = array<i64: 1, 4, 2>}]} {
    %cst = arith.constant 0.000000e+00 : bf16
    %0 = vector.broadcast %cst : bf16 to vector<4x19xbf16>
    %c0 = arith.constant 0 : index
    %c0_0 = arith.constant 0 : index
    %c0_1 = arith.constant 0 : index
    %1 = vector.load %arg4[%c0, %c0_0, %c0_1] : memref<1x4x512xbf16, #tpu.memory_space<vmem>>, vector<1x4x19xbf16>
    %2 = vector.shape_cast %1 : vector<1x4x19xbf16> to vector<4x19xbf16>
    %3 = vector.shape_cast %0 : vector<4x19xbf16> to vector<1x4x19xbf16>
    tpu.vector_store %arg4[%c0, %c0_0, %c0_1], %3 {strides = array<i32>} : memref<1x4x512xbf16, #tpu.memory_space<vmem>>, vector<1x4x19xbf16>,
    %cst_2 = arith.constant 0.000000e+00 : bf16
    %4 = vector.broadcast %cst_2 : bf16 to vector<4x109xbf16>
    %c0_3 = arith.constant 0 : index
    %c0_4 = arith.constant 0 : index
    %c403 = arith.constant 403 : index
    %5 = vector.load %arg4[%c0_3, %c0_4, %c403] : memref<1x4x512xbf16, #tpu.memory_space<vmem>>, vector<1x4x109xbf16>
    %6 = vector.shape_cast %5 : vector<1x4x109xbf16> to vector<4x109xbf16>
    %7 = vector.shape_cast %4 : vector<4x109xbf16> to vector<1x4x109xbf16>
    tpu.vector_store %arg4[%c0_3, %c0_4, %c403], %7 {strides = array<i32>} : memref<1x4x512xbf16, #tpu.memory_space<vmem>>, vector<1x4x109xbf16>,
    %c0_5 = arith.constant 0 : index
    %c0_6 = arith.constant 0 : index
    %c0_7 = arith.constant 0 : index
    %8 = vector.load %arg2[%c0_5, %c0_6, %c0_7] : memref<9x4x4xbf16, #tpu.memory_space<vmem>>, vector<9x4x4xbf16>
    %cst_8 = arith.constant 0.000000e+00 : f32
    %9 = vector.broadcast %cst_8 : f32 to vector<4x1xf32>
    %cst_9 = arith.constant 0.000000e+00 : f32
    %10 = vector.broadcast %cst_9 : f32 to vector<4x1xf32>
    %cst_10 = arith.constant 0.000000e+00 : f32
    %11 = vector.broadcast %cst_10 : f32 to vector<4x384xf32>
    %c0_11 = arith.constant 0 : index
    %c0_12 = arith.constant 0 : index
    %c0_13 = arith.constant 0 : index
    %12 = vector.load %arg1[%c0_11, %c0_12, %c0_13] : memref<1x4x512xbf16, #tpu.memory_space<vmem>>, vector<1x4x384xbf16>
    %13 = vector.shape_cast %12 : vector<1x4x384xbf16> to vector<4x384xbf16>
    %14 = vector.extract_strided_slice %8 {offsets = [0, 0, 0], sizes = [1, 4, 4], strides = [1, 1, 1]} : vector<9x4x4xbf16> to vector<1x4x4xbf16>
    %15 = vector.shape_cast %14 : vector<1x4x4xbf16> to vector<4x4xbf16>
    %cst_14 = arith.constant dense<0.000000e+00> : vector<4x384xf32>
    %16 = tpu.matmul %15, %13, %cst_14 {dimension_numbers = #tpu.dot_dimension_numbers<[1], [0], [0], [1], [0, 0, 1, 1], [], []>} : vector<4x4xbf16>, vector<4x384xbf16>, vector<4x384xf32> -> vector<4x384xf32>
    %17 = arith.addf %11, %16 : vector<4x384xf32>
    %c0_15 = arith.constant 0 : index
    %c0_16 = arith.constant 0 : index
    %c1 = arith.constant 1 : index
    %18 = vector.load %arg1[%c0_15, %c0_16, %c1] : memref<1x4x512xbf16, #tpu.memory_space<vmem>>, vector<1x4x384xbf16>
    %19 = vector.shape_cast %18 : vector<1x4x384xbf16> to vector<4x384xbf16>
    %20 = vector.extract_strided_slice %8 {offsets = [1, 0, 0], sizes = [1, 4, 4], strides = [1, 1, 1]} : vector<9x4x4xbf16> to vector<1x4x4xbf16>
    %21 = vector.shape_cast %20 : vector<1x4x4xbf16> to vector<4x4xbf16>
    %cst_17 = arith.constant dense<0.000000e+00> : vector<4x384xf32>
    %22 = tpu.matmul %21, %19, %cst_17 {dimension_numbers = #tpu.dot_dimension_numbers<[1], [0], [0], [1], [0, 0, 1, 1], [], []>} : vector<4x4xbf16>, vector<4x384xbf16>, vector<4x384xf32> -> vector<4x384xf32>
    %23 = arith.addf %17, %22 : vector<4x384xf32>
    %c0_18 = arith.constant 0 : index
    %c0_19 = arith.constant 0 : index
    %c2 = arith.constant 2 : index
    %24 = vector.load %arg1[%c0_18, %c0_19, %c2] : memref<1x4x512xbf16, #tpu.memory_space<vmem>>, vector<1x4x384xbf16>
    %25 = vector.shape_cast %24 : vector<1x4x384xbf16> to vector<4x384xbf16>
    %26 = vector.extract_strided_slice %8 {offsets = [2, 0, 0], sizes = [1, 4, 4], strides = [1, 1, 1]} : vector<9x4x4xbf16> to vector<1x4x4xbf16>
    %27 = vector.shape_cast %26 : vector<1x4x4xbf16> to vector<4x4xbf16>
    %cst_20 = arith.constant dense<0.000000e+00> : vector<4x384xf32>
    %28 = tpu.matmul %27, %25, %cst_20 {dimension_numbers = #tpu.dot_dimension_numbers<[1], [0], [0], [1], [0, 0, 1, 1], [], []>} : vector<4x4xbf16>, vector<4x384xbf16>, vector<4x384xf32> -> vector<4x384xf32>
    %29 = arith.addf %23, %28 : vector<4x384xf32>
    %c0_21 = arith.constant 0 : index
    %c0_22 = arith.constant 0 : index
    %c18 = arith.constant 18 : index
    %30 = vector.load %arg1[%c0_21, %c0_22, %c18] : memref<1x4x512xbf16, #tpu.memory_space<vmem>>, vector<1x4x384xbf16>
    %31 = vector.shape_cast %30 : vector<1x4x384xbf16> to vector<4x384xbf16>
    %32 = vector.extract_strided_slice %8 {offsets = [3, 0, 0], sizes = [1, 4, 4], strides = [1, 1, 1]} : vector<9x4x4xbf16> to vector<1x4x4xbf16>
    %33 = vector.shape_cast %32 : vector<1x4x4xbf16> to vector<4x4xbf16>
    %cst_23 = arith.constant dense<0.000000e+00> : vector<4x384xf32>
    %34 = tpu.matmul %33, %31, %cst_23 {dimension_numbers = #tpu.dot_dimension_numbers<[1], [0], [0], [1], [0, 0, 1, 1], [], []>} : vector<4x4xbf16>, vector<4x384xbf16>, vector<4x384xf32> -> vector<4x384xf32>
    %35 = arith.addf %29, %34 : vector<4x384xf32>
    %c0_24 = arith.constant 0 : index
    %c0_25 = arith.constant 0 : index
    %c19 = arith.constant 19 : index
    %36 = vector.load %arg1[%c0_24, %c0_25, %c19] : memref<1x4x512xbf16, #tpu.memory_space<vmem>>, vector<1x4x384xbf16>
    %37 = vector.shape_cast %36 : vector<1x4x384xbf16> to vector<4x384xbf16>
    %38 = vector.extract_strided_slice %8 {offsets = [4, 0, 0], sizes = [1, 4, 4], strides = [1, 1, 1]} : vector<9x4x4xbf16> to vector<1x4x4xbf16>
    %39 = vector.shape_cast %38 : vector<1x4x4xbf16> to vector<4x4xbf16>
    %cst_26 = arith.constant dense<0.000000e+00> : vector<4x384xf32>
    %40 = tpu.matmul %39, %37, %cst_26 {dimension_numbers = #tpu.dot_dimension_numbers<[1], [0], [0], [1], [0, 0, 1, 1], [], []>} : vector<4x4xbf16>, vector<4x384xbf16>, vector<4x384xf32> -> vector<4x384xf32>
    %41 = arith.addf %35, %40 : vector<4x384xf32>
    %c0_27 = arith.constant 0 : index
    %c0_28 = arith.constant 0 : index
    %c20 = arith.constant 20 : index
    %42 = vector.load %arg1[%c0_27, %c0_28, %c20] : memref<1x4x512xbf16, #tpu.memory_space<vmem>>, vector<1x4x384xbf16>
    %43 = vector.shape_cast %42 : vector<1x4x384xbf16> to vector<4x384xbf16>
    %44 = vector.extract_strided_slice %8 {offsets = [5, 0, 0], sizes = [1, 4, 4], strides = [1, 1, 1]} : vector<9x4x4xbf16> to vector<1x4x4xbf16>
    %45 = vector.shape_cast %44 : vector<1x4x4xbf16> to vector<4x4xbf16>
    %cst_29 = arith.constant dense<0.000000e+00> : vector<4x384xf32>
    %46 = tpu.matmul %45, %43, %cst_29 {dimension_numbers = #tpu.dot_dimension_numbers<[1], [0], [0], [1], [0, 0, 1, 1], [], []>} : vector<4x4xbf16>, vector<4x384xbf16>, vector<4x384xf32> -> vector<4x384xf32>
    %47 = arith.addf %41, %46 : vector<4x384xf32>
    %c0_30 = arith.constant 0 : index
    %c0_31 = arith.constant 0 : index
    %c36 = arith.constant 36 : index
    %48 = vector.load %arg1[%c0_30, %c0_31, %c36] : memref<1x4x512xbf16, #tpu.memory_space<vmem>>, vector<1x4x384xbf16>
    %49 = vector.shape_cast %48 : vector<1x4x384xbf16> to vector<4x384xbf16>
    %50 = vector.extract_strided_slice %8 {offsets = [6, 0, 0], sizes = [1, 4, 4], strides = [1, 1, 1]} : vector<9x4x4xbf16> to vector<1x4x4xbf16>
    %51 = vector.shape_cast %50 : vector<1x4x4xbf16> to vector<4x4xbf16>
    %cst_32 = arith.constant dense<0.000000e+00> : vector<4x384xf32>
    %52 = tpu.matmul %51, %49, %cst_32 {dimension_numbers = #tpu.dot_dimension_numbers<[1], [0], [0], [1], [0, 0, 1, 1], [], []>} : vector<4x4xbf16>, vector<4x384xbf16>, vector<4x384xf32> -> vector<4x384xf32>
    %53 = arith.addf %47, %52 : vector<4x384xf32>
    %c0_33 = arith.constant 0 : index
    %c0_34 = arith.constant 0 : index
    %c37 = arith.constant 37 : index
    %54 = vector.load %arg1[%c0_33, %c0_34, %c37] : memref<1x4x512xbf16, #tpu.memory_space<vmem>>, vector<1x4x384xbf16>
    %55 = vector.shape_cast %54 : vector<1x4x384xbf16> to vector<4x384xbf16>
    %56 = vector.extract_strided_slice %8 {offsets = [7, 0, 0], sizes = [1, 4, 4], strides = [1, 1, 1]} : vector<9x4x4xbf16> to vector<1x4x4xbf16>
    %57 = vector.shape_cast %56 : vector<1x4x4xbf16> to vector<4x4xbf16>
    %cst_35 = arith.constant dense<0.000000e+00> : vector<4x384xf32>
    %58 = tpu.matmul %57, %55, %cst_35 {dimension_numbers = #tpu.dot_dimension_numbers<[1], [0], [0], [1], [0, 0, 1, 1], [], []>} : vector<4x4xbf16>, vector<4x384xbf16>, vector<4x384xf32> -> vector<4x384xf32>
    %59 = arith.addf %53, %58 : vector<4x384xf32>
    %c0_36 = arith.constant 0 : index
    %c0_37 = arith.constant 0 : index
    %c38 = arith.constant 38 : index
    %60 = vector.load %arg1[%c0_36, %c0_37, %c38] : memref<1x4x512xbf16, #tpu.memory_space<vmem>>, vector<1x4x384xbf16>
    %61 = vector.shape_cast %60 : vector<1x4x384xbf16> to vector<4x384xbf16>
    %62 = vector.extract_strided_slice %8 {offsets = [8, 0, 0], sizes = [1, 4, 4], strides = [1, 1, 1]} : vector<9x4x4xbf16> to vector<1x4x4xbf16>
    %63 = vector.shape_cast %62 : vector<1x4x4xbf16> to vector<4x4xbf16>
    %cst_38 = arith.constant dense<0.000000e+00> : vector<4x384xf32>
    %64 = tpu.matmul %63, %61, %cst_38 {dimension_numbers = #tpu.dot_dimension_numbers<[1], [0], [0], [1], [0, 0, 1, 1], [], []>} : vector<4x4xbf16>, vector<4x384xbf16>, vector<4x384xf32> -> vector<4x384xf32>
    %65 = arith.addf %59, %64 : vector<4x384xf32>
    %c0_39 = arith.constant 0 : index
    %c19_40 = arith.constant 19 : index
    %66 = vector.load %arg3[%c0_39, %c19_40] : memref<1x512xf32, #tpu.memory_space<vmem>>, vector<1x384xf32>
    %67 = vector.broadcast %66 : vector<1x384xf32> to vector<4x384xf32>
    %68 = arith.mulf %65, %67 : vector<4x384xf32>
    %cst_41 = arith.constant dense<0.000000e+00> : vector<4xf32>
    %69 = vector.multi_reduction <add>, %68, %cst_41 [1] : vector<4x384xf32> to vector<4xf32>
    %70 = vector.shape_cast %69 : vector<4xf32> to vector<4x1xf32>
    %71 = arith.addf %9, %70 : vector<4x1xf32>
    %72 = arith.mulf %68, %65 : vector<4x384xf32>
    %cst_42 = arith.constant dense<0.000000e+00> : vector<4xf32>
    %73 = vector.multi_reduction <add>, %72, %cst_42 [1] : vector<4x384xf32> to vector<4xf32>
    %74 = vector.shape_cast %73 : vector<4xf32> to vector<4x1xf32>
    %75 = arith.addf %10, %74 : vector<4x1xf32>
    %76 = arith.truncf %65 : vector<4x384xf32> to vector<4x384xbf16>
    %c0_43 = arith.constant 0 : index
    %c0_44 = arith.constant 0 : index
    %c19_45 = arith.constant 19 : index
    %77 = vector.load %arg4[%c0_43, %c0_44, %c19_45] : memref<1x4x512xbf16, #tpu.memory_space<vmem>>, vector<1x4x384xbf16>
    %78 = vector.shape_cast %77 : vector<1x4x384xbf16> to vector<4x384xbf16>
    %79 = vector.shape_cast %76 : vector<4x384xbf16> to vector<1x4x384xbf16>
    tpu.vector_store %arg4[%c0_43, %c0_44, %c19_45], %79 {strides = array<i32>} : memref<1x4x512xbf16, #tpu.memory_space<vmem>>, vector<1x4x384xbf16>,
    %80 = tpu.concatenate %71, %75 in 1 : vector<4x1xf32>, vector<4x1xf32> -> vector<4x2xf32>
    %c0_46 = arith.constant 0 : index
    %c0_47 = arith.constant 0 : index
    %c0_48 = arith.constant 0 : index
    %81 = vector.load %arg5[%c0_46, %c0_47, %c0_48] : memref<1x4x2xf32, #tpu.memory_space<vmem>>, vector<1x4x2xf32>
    %82 = vector.shape_cast %81 : vector<1x4x2xf32> to vector<4x2xf32>
    %83 = vector.shape_cast %80 : vector<4x2xf32> to vector<1x4x2xf32>
    tpu.vector_store %arg5[%c0_46, %c0_47, %c0_48], %83 {strides = array<i32>} : memref<1x4x2xf32, #tpu.memory_space<vmem>>, vector<1x4x2xf32>,
    return
  }
  func.func @transform_0(%arg0: i32) -> (i32, i32, i32) {
    %c0_i32 = arith.constant 0 : i32
    %c0_i32_0 = arith.constant 0 : i32
    %c0_i32_1 = arith.constant 0 : i32
    return %arg0, %c0_i32, %c0_i32_0 : i32, i32, i32
  }
  func.func @transform_1(%arg0: i32) -> (i32, i32, i32) {
    %c0_i32 = arith.constant 0 : i32
    %c0_i32_0 = arith.constant 0 : i32
    %c0_i32_1 = arith.constant 0 : i32
    %c0_i32_2 = arith.constant 0 : i32
    return %c0_i32, %c0_i32_0, %c0_i32_1 : i32, i32, i32
  }
  func.func @transform_2(%arg0: i32) -> (i32, i32) {
    %c0_i32 = arith.constant 0 : i32
    %c0_i32_0 = arith.constant 0 : i32
    %c0_i32_1 = arith.constant 0 : i32
    return %c0_i32, %c0_i32_0 : i32, i32
  }
  func.func @transform_3(%arg0: i32) -> (i32, i32, i32) {
    %c0_i32 = arith.constant 0 : i32
    %c0_i32_0 = arith.constant 0 : i32
    %c0_i32_1 = arith.constant 0 : i32
    return %arg0, %c0_i32, %c0_i32_0 : i32, i32, i32
  }
  func.func @transform_4(%arg0: i32) -> (i32, i32, i32) {
    %c0_i32 = arith.constant 0 : i32
    %c0_i32_0 = arith.constant 0 : i32
    %c0_i32_1 = arith.constant 0 : i32
    return %arg0, %c0_i32, %c0_i32_0 : i32, i32, i32
  }
}

module attributes {stable_mosaic.version = 11 : i64} {
  func.func @_conv_stats_kernel(%arg0: i32, %arg1: memref<1x4x512xbf16, #tpu.memory_space<vmem>>, %arg2: memref<9x4x4xbf16, #tpu.memory_space<vmem>>, %arg3: memref<1x512xf32, #tpu.memory_space<vmem>>, %arg4: memref<4x1xf32, #tpu.memory_space<vmem>>, %arg5: memref<4x1xf32, #tpu.memory_space<vmem>>, %arg6: memref<1x4x512xbf16, #tpu.memory_space<vmem>>, %arg7: memref<1x4x2xf32, #tpu.memory_space<vmem>>, %arg8: memref<4x512xbf16, #tpu.memory_space<vmem>>) attributes {dimension_semantics = [#tpu.dimension_semantics<parallel>], iteration_bounds = array<i64: 2>, scalar_prefetch = 0 : i64, scratch_operands = 1 : i64, tpu.core_type = #tpu.core_type<tc>, window_params = [{transform_indices = @transform_0, window_bounds = array<i64: 1, 4, 512>}, {pipeline_mode = #tpu.pipeline_mode<synchronous>, transform_indices = @transform_1, window_bounds = array<i64: 9, 4, 4>}, {pipeline_mode = #tpu.pipeline_mode<synchronous>, transform_indices = @transform_2, window_bounds = array<i64: 1, 512>}, {pipeline_mode = #tpu.pipeline_mode<synchronous>, transform_indices = @transform_3, window_bounds = array<i64: 4, 1>}, {pipeline_mode = #tpu.pipeline_mode<synchronous>, transform_indices = @transform_4, window_bounds = array<i64: 4, 1>}, {transform_indices = @transform_5, window_bounds = array<i64: 1, 4, 512>}, {transform_indices = @transform_6, window_bounds = array<i64: 1, 4, 2>}]} {
    %c0 = arith.constant 0 : index
    %c0_0 = arith.constant 0 : index
    %c0_1 = arith.constant 0 : index
    %0 = vector.load %arg1[%c0, %c0_0, %c0_1] : memref<1x4x512xbf16, #tpu.memory_space<vmem>>, vector<1x4x512xbf16>
    %1 = vector.shape_cast %0 : vector<1x4x512xbf16> to vector<4x512xbf16>
    %2 = arith.extf %1 : vector<4x512xbf16> to vector<4x512xf32>
    %c0_2 = arith.constant 0 : index
    %c0_3 = arith.constant 0 : index
    %3 = vector.load %arg4[%c0_2, %c0_3] : memref<4x1xf32, #tpu.memory_space<vmem>>, vector<4x1xf32>
    %4 = vector.broadcast %3 : vector<4x1xf32> to vector<4x512xf32>
    %5 = arith.mulf %2, %4 : vector<4x512xf32>
    %c0_4 = arith.constant 0 : index
    %c0_5 = arith.constant 0 : index
    %6 = vector.load %arg5[%c0_4, %c0_5] : memref<4x1xf32, #tpu.memory_space<vmem>>, vector<4x1xf32>
    %7 = vector.broadcast %6 : vector<4x1xf32> to vector<4x512xf32>
    %8 = arith.addf %5, %7 : vector<4x512xf32>
    %cst = arith.constant 0.000000e+00 : f32
    %9 = vector.broadcast %cst : f32 to vector<4x512xf32>
    %10 = arith.maximumf %8, %9 : vector<4x512xf32>
    %c0_6 = arith.constant 0 : index
    %c0_7 = arith.constant 0 : index
    %11 = vector.load %arg3[%c0_6, %c0_7] : memref<1x512xf32, #tpu.memory_space<vmem>>, vector<1x512xf32>
    %12 = vector.broadcast %11 : vector<1x512xf32> to vector<4x512xf32>
    %13 = arith.mulf %10, %12 : vector<4x512xf32>
    %14 = arith.truncf %13 : vector<4x512xf32> to vector<4x512xbf16>
    %c0_8 = arith.constant 0 : index
    %c0_9 = arith.constant 0 : index
    %15 = vector.load %arg8[%c0_8, %c0_9] : memref<4x512xbf16, #tpu.memory_space<vmem>>, vector<4x512xbf16>
    tpu.vector_store %arg8[%c0_8, %c0_9], %14 {strides = array<i32>} : memref<4x512xbf16, #tpu.memory_space<vmem>>, vector<4x512xbf16>,
    %cst_10 = arith.constant 0.000000e+00 : bf16
    %16 = vector.broadcast %cst_10 : bf16 to vector<4x19xbf16>
    %c0_11 = arith.constant 0 : index
    %c0_12 = arith.constant 0 : index
    %c0_13 = arith.constant 0 : index
    %17 = vector.load %arg6[%c0_11, %c0_12, %c0_13] : memref<1x4x512xbf16, #tpu.memory_space<vmem>>, vector<1x4x19xbf16>
    %18 = vector.shape_cast %17 : vector<1x4x19xbf16> to vector<4x19xbf16>
    %19 = vector.shape_cast %16 : vector<4x19xbf16> to vector<1x4x19xbf16>
    tpu.vector_store %arg6[%c0_11, %c0_12, %c0_13], %19 {strides = array<i32>} : memref<1x4x512xbf16, #tpu.memory_space<vmem>>, vector<1x4x19xbf16>,
    %cst_14 = arith.constant 0.000000e+00 : bf16
    %20 = vector.broadcast %cst_14 : bf16 to vector<4x109xbf16>
    %c0_15 = arith.constant 0 : index
    %c0_16 = arith.constant 0 : index
    %c403 = arith.constant 403 : index
    %21 = vector.load %arg6[%c0_15, %c0_16, %c403] : memref<1x4x512xbf16, #tpu.memory_space<vmem>>, vector<1x4x109xbf16>
    %22 = vector.shape_cast %21 : vector<1x4x109xbf16> to vector<4x109xbf16>
    %23 = vector.shape_cast %20 : vector<4x109xbf16> to vector<1x4x109xbf16>
    tpu.vector_store %arg6[%c0_15, %c0_16, %c403], %23 {strides = array<i32>} : memref<1x4x512xbf16, #tpu.memory_space<vmem>>, vector<1x4x109xbf16>,
    %c0_17 = arith.constant 0 : index
    %c0_18 = arith.constant 0 : index
    %c0_19 = arith.constant 0 : index
    %24 = vector.load %arg2[%c0_17, %c0_18, %c0_19] : memref<9x4x4xbf16, #tpu.memory_space<vmem>>, vector<9x4x4xbf16>
    %cst_20 = arith.constant 0.000000e+00 : f32
    %25 = vector.broadcast %cst_20 : f32 to vector<4x1xf32>
    %cst_21 = arith.constant 0.000000e+00 : f32
    %26 = vector.broadcast %cst_21 : f32 to vector<4x1xf32>
    %cst_22 = arith.constant 0.000000e+00 : f32
    %27 = vector.broadcast %cst_22 : f32 to vector<4x384xf32>
    %c0_23 = arith.constant 0 : index
    %c0_24 = arith.constant 0 : index
    %28 = vector.load %arg8[%c0_23, %c0_24] : memref<4x512xbf16, #tpu.memory_space<vmem>>, vector<4x384xbf16>
    %29 = vector.extract_strided_slice %24 {offsets = [0, 0, 0], sizes = [1, 4, 4], strides = [1, 1, 1]} : vector<9x4x4xbf16> to vector<1x4x4xbf16>
    %30 = vector.shape_cast %29 : vector<1x4x4xbf16> to vector<4x4xbf16>
    %cst_25 = arith.constant dense<0.000000e+00> : vector<4x384xf32>
    %31 = tpu.matmul %30, %28, %cst_25 {dimension_numbers = #tpu.dot_dimension_numbers<[1], [0], [0], [1], [0, 0, 1, 1], [], []>} : vector<4x4xbf16>, vector<4x384xbf16>, vector<4x384xf32> -> vector<4x384xf32>
    %32 = arith.addf %27, %31 : vector<4x384xf32>
    %c0_26 = arith.constant 0 : index
    %c1 = arith.constant 1 : index
    %33 = vector.load %arg8[%c0_26, %c1] : memref<4x512xbf16, #tpu.memory_space<vmem>>, vector<4x384xbf16>
    %34 = vector.extract_strided_slice %24 {offsets = [1, 0, 0], sizes = [1, 4, 4], strides = [1, 1, 1]} : vector<9x4x4xbf16> to vector<1x4x4xbf16>
    %35 = vector.shape_cast %34 : vector<1x4x4xbf16> to vector<4x4xbf16>
    %cst_27 = arith.constant dense<0.000000e+00> : vector<4x384xf32>
    %36 = tpu.matmul %35, %33, %cst_27 {dimension_numbers = #tpu.dot_dimension_numbers<[1], [0], [0], [1], [0, 0, 1, 1], [], []>} : vector<4x4xbf16>, vector<4x384xbf16>, vector<4x384xf32> -> vector<4x384xf32>
    %37 = arith.addf %32, %36 : vector<4x384xf32>
    %c0_28 = arith.constant 0 : index
    %c2 = arith.constant 2 : index
    %38 = vector.load %arg8[%c0_28, %c2] : memref<4x512xbf16, #tpu.memory_space<vmem>>, vector<4x384xbf16>
    %39 = vector.extract_strided_slice %24 {offsets = [2, 0, 0], sizes = [1, 4, 4], strides = [1, 1, 1]} : vector<9x4x4xbf16> to vector<1x4x4xbf16>
    %40 = vector.shape_cast %39 : vector<1x4x4xbf16> to vector<4x4xbf16>
    %cst_29 = arith.constant dense<0.000000e+00> : vector<4x384xf32>
    %41 = tpu.matmul %40, %38, %cst_29 {dimension_numbers = #tpu.dot_dimension_numbers<[1], [0], [0], [1], [0, 0, 1, 1], [], []>} : vector<4x4xbf16>, vector<4x384xbf16>, vector<4x384xf32> -> vector<4x384xf32>
    %42 = arith.addf %37, %41 : vector<4x384xf32>
    %c0_30 = arith.constant 0 : index
    %c18 = arith.constant 18 : index
    %43 = vector.load %arg8[%c0_30, %c18] : memref<4x512xbf16, #tpu.memory_space<vmem>>, vector<4x384xbf16>
    %44 = vector.extract_strided_slice %24 {offsets = [3, 0, 0], sizes = [1, 4, 4], strides = [1, 1, 1]} : vector<9x4x4xbf16> to vector<1x4x4xbf16>
    %45 = vector.shape_cast %44 : vector<1x4x4xbf16> to vector<4x4xbf16>
    %cst_31 = arith.constant dense<0.000000e+00> : vector<4x384xf32>
    %46 = tpu.matmul %45, %43, %cst_31 {dimension_numbers = #tpu.dot_dimension_numbers<[1], [0], [0], [1], [0, 0, 1, 1], [], []>} : vector<4x4xbf16>, vector<4x384xbf16>, vector<4x384xf32> -> vector<4x384xf32>
    %47 = arith.addf %42, %46 : vector<4x384xf32>
    %c0_32 = arith.constant 0 : index
    %c19 = arith.constant 19 : index
    %48 = vector.load %arg8[%c0_32, %c19] : memref<4x512xbf16, #tpu.memory_space<vmem>>, vector<4x384xbf16>
    %49 = vector.extract_strided_slice %24 {offsets = [4, 0, 0], sizes = [1, 4, 4], strides = [1, 1, 1]} : vector<9x4x4xbf16> to vector<1x4x4xbf16>
    %50 = vector.shape_cast %49 : vector<1x4x4xbf16> to vector<4x4xbf16>
    %cst_33 = arith.constant dense<0.000000e+00> : vector<4x384xf32>
    %51 = tpu.matmul %50, %48, %cst_33 {dimension_numbers = #tpu.dot_dimension_numbers<[1], [0], [0], [1], [0, 0, 1, 1], [], []>} : vector<4x4xbf16>, vector<4x384xbf16>, vector<4x384xf32> -> vector<4x384xf32>
    %52 = arith.addf %47, %51 : vector<4x384xf32>
    %c0_34 = arith.constant 0 : index
    %c20 = arith.constant 20 : index
    %53 = vector.load %arg8[%c0_34, %c20] : memref<4x512xbf16, #tpu.memory_space<vmem>>, vector<4x384xbf16>
    %54 = vector.extract_strided_slice %24 {offsets = [5, 0, 0], sizes = [1, 4, 4], strides = [1, 1, 1]} : vector<9x4x4xbf16> to vector<1x4x4xbf16>
    %55 = vector.shape_cast %54 : vector<1x4x4xbf16> to vector<4x4xbf16>
    %cst_35 = arith.constant dense<0.000000e+00> : vector<4x384xf32>
    %56 = tpu.matmul %55, %53, %cst_35 {dimension_numbers = #tpu.dot_dimension_numbers<[1], [0], [0], [1], [0, 0, 1, 1], [], []>} : vector<4x4xbf16>, vector<4x384xbf16>, vector<4x384xf32> -> vector<4x384xf32>
    %57 = arith.addf %52, %56 : vector<4x384xf32>
    %c0_36 = arith.constant 0 : index
    %c36 = arith.constant 36 : index
    %58 = vector.load %arg8[%c0_36, %c36] : memref<4x512xbf16, #tpu.memory_space<vmem>>, vector<4x384xbf16>
    %59 = vector.extract_strided_slice %24 {offsets = [6, 0, 0], sizes = [1, 4, 4], strides = [1, 1, 1]} : vector<9x4x4xbf16> to vector<1x4x4xbf16>
    %60 = vector.shape_cast %59 : vector<1x4x4xbf16> to vector<4x4xbf16>
    %cst_37 = arith.constant dense<0.000000e+00> : vector<4x384xf32>
    %61 = tpu.matmul %60, %58, %cst_37 {dimension_numbers = #tpu.dot_dimension_numbers<[1], [0], [0], [1], [0, 0, 1, 1], [], []>} : vector<4x4xbf16>, vector<4x384xbf16>, vector<4x384xf32> -> vector<4x384xf32>
    %62 = arith.addf %57, %61 : vector<4x384xf32>
    %c0_38 = arith.constant 0 : index
    %c37 = arith.constant 37 : index
    %63 = vector.load %arg8[%c0_38, %c37] : memref<4x512xbf16, #tpu.memory_space<vmem>>, vector<4x384xbf16>
    %64 = vector.extract_strided_slice %24 {offsets = [7, 0, 0], sizes = [1, 4, 4], strides = [1, 1, 1]} : vector<9x4x4xbf16> to vector<1x4x4xbf16>
    %65 = vector.shape_cast %64 : vector<1x4x4xbf16> to vector<4x4xbf16>
    %cst_39 = arith.constant dense<0.000000e+00> : vector<4x384xf32>
    %66 = tpu.matmul %65, %63, %cst_39 {dimension_numbers = #tpu.dot_dimension_numbers<[1], [0], [0], [1], [0, 0, 1, 1], [], []>} : vector<4x4xbf16>, vector<4x384xbf16>, vector<4x384xf32> -> vector<4x384xf32>
    %67 = arith.addf %62, %66 : vector<4x384xf32>
    %c0_40 = arith.constant 0 : index
    %c38 = arith.constant 38 : index
    %68 = vector.load %arg8[%c0_40, %c38] : memref<4x512xbf16, #tpu.memory_space<vmem>>, vector<4x384xbf16>
    %69 = vector.extract_strided_slice %24 {offsets = [8, 0, 0], sizes = [1, 4, 4], strides = [1, 1, 1]} : vector<9x4x4xbf16> to vector<1x4x4xbf16>
    %70 = vector.shape_cast %69 : vector<1x4x4xbf16> to vector<4x4xbf16>
    %cst_41 = arith.constant dense<0.000000e+00> : vector<4x384xf32>
    %71 = tpu.matmul %70, %68, %cst_41 {dimension_numbers = #tpu.dot_dimension_numbers<[1], [0], [0], [1], [0, 0, 1, 1], [], []>} : vector<4x4xbf16>, vector<4x384xbf16>, vector<4x384xf32> -> vector<4x384xf32>
    %72 = arith.addf %67, %71 : vector<4x384xf32>
    %c0_42 = arith.constant 0 : index
    %c19_43 = arith.constant 19 : index
    %73 = vector.load %arg3[%c0_42, %c19_43] : memref<1x512xf32, #tpu.memory_space<vmem>>, vector<1x384xf32>
    %74 = vector.broadcast %73 : vector<1x384xf32> to vector<4x384xf32>
    %75 = arith.mulf %72, %74 : vector<4x384xf32>
    %cst_44 = arith.constant dense<0.000000e+00> : vector<4xf32>
    %76 = vector.multi_reduction <add>, %75, %cst_44 [1] : vector<4x384xf32> to vector<4xf32>
    %77 = vector.shape_cast %76 : vector<4xf32> to vector<4x1xf32>
    %78 = arith.addf %25, %77 : vector<4x1xf32>
    %79 = arith.mulf %75, %72 : vector<4x384xf32>
    %cst_45 = arith.constant dense<0.000000e+00> : vector<4xf32>
    %80 = vector.multi_reduction <add>, %79, %cst_45 [1] : vector<4x384xf32> to vector<4xf32>
    %81 = vector.shape_cast %80 : vector<4xf32> to vector<4x1xf32>
    %82 = arith.addf %26, %81 : vector<4x1xf32>
    %83 = arith.truncf %72 : vector<4x384xf32> to vector<4x384xbf16>
    %c0_46 = arith.constant 0 : index
    %c0_47 = arith.constant 0 : index
    %c19_48 = arith.constant 19 : index
    %84 = vector.load %arg6[%c0_46, %c0_47, %c19_48] : memref<1x4x512xbf16, #tpu.memory_space<vmem>>, vector<1x4x384xbf16>
    %85 = vector.shape_cast %84 : vector<1x4x384xbf16> to vector<4x384xbf16>
    %86 = vector.shape_cast %83 : vector<4x384xbf16> to vector<1x4x384xbf16>
    tpu.vector_store %arg6[%c0_46, %c0_47, %c19_48], %86 {strides = array<i32>} : memref<1x4x512xbf16, #tpu.memory_space<vmem>>, vector<1x4x384xbf16>,
    %87 = tpu.concatenate %78, %82 in 1 : vector<4x1xf32>, vector<4x1xf32> -> vector<4x2xf32>
    %c0_49 = arith.constant 0 : index
    %c0_50 = arith.constant 0 : index
    %c0_51 = arith.constant 0 : index
    %88 = vector.load %arg7[%c0_49, %c0_50, %c0_51] : memref<1x4x2xf32, #tpu.memory_space<vmem>>, vector<1x4x2xf32>
    %89 = vector.shape_cast %88 : vector<1x4x2xf32> to vector<4x2xf32>
    %90 = vector.shape_cast %87 : vector<4x2xf32> to vector<1x4x2xf32>
    tpu.vector_store %arg7[%c0_49, %c0_50, %c0_51], %90 {strides = array<i32>} : memref<1x4x2xf32, #tpu.memory_space<vmem>>, vector<1x4x2xf32>,
    return
  }
  func.func @transform_0(%arg0: i32) -> (i32, i32, i32) {
    %c0_i32 = arith.constant 0 : i32
    %c0_i32_0 = arith.constant 0 : i32
    %c0_i32_1 = arith.constant 0 : i32
    return %arg0, %c0_i32, %c0_i32_0 : i32, i32, i32
  }
  func.func @transform_1(%arg0: i32) -> (i32, i32, i32) {
    %c0_i32 = arith.constant 0 : i32
    %c0_i32_0 = arith.constant 0 : i32
    %c0_i32_1 = arith.constant 0 : i32
    %c0_i32_2 = arith.constant 0 : i32
    return %c0_i32, %c0_i32_0, %c0_i32_1 : i32, i32, i32
  }
  func.func @transform_2(%arg0: i32) -> (i32, i32) {
    %c0_i32 = arith.constant 0 : i32
    %c0_i32_0 = arith.constant 0 : i32
    %c0_i32_1 = arith.constant 0 : i32
    return %c0_i32, %c0_i32_0 : i32, i32
  }
  func.func @transform_3(%arg0: i32) -> (i32, i32) {
    %c0_i32 = arith.constant 0 : i32
    %c0_i32_0 = arith.constant 0 : i32
    %c0_i32_1 = arith.constant 0 : i32
    return %c0_i32, %c0_i32_0 : i32, i32
  }
  func.func @transform_4(%arg0: i32) -> (i32, i32) {
    %c0_i32 = arith.constant 0 : i32
    %c0_i32_0 = arith.constant 0 : i32
    %c0_i32_1 = arith.constant 0 : i32
    return %c0_i32, %c0_i32_0 : i32, i32
  }
  func.func @transform_5(%arg0: i32) -> (i32, i32, i32) {
    %c0_i32 = arith.constant 0 : i32
    %c0_i32_0 = arith.constant 0 : i32
    %c0_i32_1 = arith.constant 0 : i32
    return %arg0, %c0_i32, %c0_i32_0 : i32, i32, i32
  }
  func.func @transform_6(%arg0: i32) -> (i32, i32, i32) {
    %c0_i32 = arith.constant 0 : i32
    %c0_i32_0 = arith.constant 0 : i32
    %c0_i32_1 = arith.constant 0 : i32
    return %arg0, %c0_i32, %c0_i32_0 : i32, i32, i32
  }
}

</mosaic_0001>

<llo_original>
// kernel: _lambda_.5
$region0: #{_lambda_.5}
  #allocation0 [shape = 'u32[]', space=smem, size = 0x4, offset = 0x4, fixed_abs, tag = 'smem constant byte address 0x4 - core index']
  #allocation1 [shape = 'u32[144,128]{1,0:T(1,128)}', space=vmem, size = 0x12000, scoped, tag = 'internal scratch']
  %s0 = inlined_call_operand.vmem [shape: bf16[2,4,512], index: 0, kind: input, shape index: {}]
  %s1 = inlined_call_operand.vmem [shape: bf16[2,4,512], index: 1, kind: input, shape index: {}]
  %s2 = inlined_call_operand.vmem [shape: f32[4,1], index: 2, kind: input, shape index: {}]
  %s3 = inlined_call_operand.vmem [shape: f32[4,1], index: 3, kind: input, shape index: {}]
  %s4 = inlined_call_operand.vmem [shape: f32[2,4,512], index: 4, kind: output, shape index: {}]
  %s5 = sld [smem:[#allocation0]]
  $region49: #{_lambda_.5} parent=0
    _
  %s7 = ssub.s32 1, %s5
  %s8 = scalar_select 0, %s7, %s5
  loop: start=0, step=1, limit=4
  $region2: #{_lambda_.5} parent=0 // loop_pre_header
    _
  $region3: #{_lambda_.5} parent=0 // loop_header
    %s10 = sphi 0, %s14
    %p11 = scmp.ge.s32.totalorder %s10, 4
    %s17 = sphi 0, %s29
    %s18 = sphi 0, %s25
    %s19 = sphi 0, %s17
    %s20 = sphi 0, %s18
    %s21 = sphi 0, %s19
    %s22 = sphi 0, %s20
    %s34 = sphi 0, %s36
    %s37 = sphi 0, %s34
    %s38 = sphi 0, %s37
    %s54 = sphi 0, %s38
    %s62 = sphi 0, %s64
    %s65 = sphi 0, %s62
    %s66 = sphi 0, %s65
    %s82 = sphi 0, %s66
    %s86 = sphi 0, %s86
    %s88 = sphi 0, %s86
    %s89 = sphi 0, %s88
    %s103 = sphi 0, %s89
    %s107 = sphi 0, %s107
    %s109 = sphi 0, %s107
    %s110 = sphi 0, %s109
    %s124 = sphi 0, %s110
    %s132 = sphi 0, %s134
    %s135 = sphi 0, %s132
    %s136 = sphi 0, %s135
    %s152 = sphi 0, %s136
  $region4: #{_lambda_.5} parent=0 // loop_header_branch
    %13 = sbr.rel (%p11) target = $region8
  $region5: #{_lambda_.5} parent=0 // loop_body
    %s15 = ssub.s32 %s10, 1
    %s16 = ssub.s32 %s10, 2
    %s23 = sadd.s32 1, %s18
    %p24 = scmp.ge.s32.totalorder %s23, 1
    %s25 = scalar_select %p24, 0, %s23
    %s26 = sadd.s32 1, %s17
    %s27 = scalar_select %p24, %s26, %s17
    %p28 = scmp.ge.s32.totalorder %s27, 2
    %s29 = scalar_select %p28, 0, %s27
    %s30 = ssub.s32 %s17, %s29
    %s31 = ssub.s32 %s18, %s25
    %s32 = sor.u32 %s30, %s31
    %p33 = scmp.eq.s32.totalorder %s32, 0
    %s35 = sadd.s32 %s34, 1
    %s36 = scalar_select %p33, %s34, %s35
    %p39 = pneg %p33
    %p40 = scmp.eq.s32.totalorder %s10, 1
    %p41 = por %p39, %p40
    %p42 = scmp.ne.s32.totalorder %s34, %s37
    %p43 = scmp.eq.s32.totalorder %s10, 0
    %p44 = por %p42, %p43
    %p45 = scmp.ne.s32.totalorder %s34, %s37
    %p46 = scmp.eq.s32.totalorder %s15, 1
    %p47 = por %p45, %p46
    %p48 = scmp.ne.s32.totalorder %s37, %s38
    %p49 = scmp.eq.s32.totalorder %s15, 0
    %p50 = por %p48, %p49
    %p51 = scmp.ne.s32.totalorder %s37, %s38
    %p52 = scmp.eq.s32.totalorder %s16, 1
    %p53 = por %p51, %p52
    %p55 = scmp.ne.s32.totalorder %s38, %s54
    %p56 = scmp.eq.s32.totalorder %s16, 0
    %p57 = por %p55, %p56
    %s58 = ssub.s32 %s17, %s29
    %s59 = ssub.s32 %s18, %s25
    %s60 = sor.u32 %s58, %s59
    %p61 = scmp.eq.s32.totalorder %s60, 0
    %s63 = sadd.s32 %s62, 1
    %s64 = scalar_select %p61, %s62, %s63
    %p67 = pneg %p61
    %p68 = scmp.eq.s32.totalorder %s10, 1
    %p69 = por %p67, %p68
    %p70 = scmp.ne.s32.totalorder %s62, %s65
    %p71 = scmp.eq.s32.totalorder %s10, 0
    %p72 = por %p70, %p71
    %p73 = scmp.ne.s32.totalorder %s62, %s65
    %p74 = scmp.eq.s32.totalorder %s15, 1
    %p75 = por %p73, %p74
    %p76 = scmp.ne.s32.totalorder %s65, %s66
    %p77 = scmp.eq.s32.totalorder %s15, 0
    %p78 = por %p76, %p77
    %p79 = scmp.ne.s32.totalorder %s65, %s66
    %p80 = scmp.eq.s32.totalorder %s16, 1
    %p81 = por %p79, %p80
    %p83 = scmp.ne.s32.totalorder %s66, %s82
    %p84 = scmp.eq.s32.totalorder %s16, 0
    %p85 = por %p83, %p84
    %s87 = sadd.s32 %s86, 1
    %p90 = scmp.eq.s32.totalorder %s10, 1
    %p91 = scmp.ne.s32.totalorder %s86, %s88
    %p92 = scmp.eq.s32.totalorder %s10, 0
    %p93 = por %p91, %p92
    %p94 = scmp.ne.s32.totalorder %s86, %s88
    %p95 = scmp.eq.s32.totalorder %s15, 1
    %p96 = por %p94, %p95
    %p97 = scmp.ne.s32.totalorder %s88, %s89
    %p98 = scmp.eq.s32.totalorder %s15, 0
    %p99 = por %p97, %p98
    %p100 = scmp.ne.s32.totalorder %s88, %s89
    %p101 = scmp.eq.s32.totalorder %s16, 1
    %p102 = por %p100, %p101
    %p104 = scmp.ne.s32.totalorder %s89, %s103
    %p105 = scmp.eq.s32.totalorder %s16, 0
    %p106 = por %p104, %p105
    %s108 = sadd.s32 %s107, 1
    %p111 = scmp.eq.s32.totalorder %s10, 1
    %p112 = scmp.ne.s32.totalorder %s107, %s109
    %p113 = scmp.eq.s32.totalorder %s10, 0
    %p114 = por %p112, %p113
    %p115 = scmp.ne.s32.totalorder %s107, %s109
    %p116 = scmp.eq.s32.totalorder %s15, 1
    %p117 = por %p115, %p116
    %p118 = scmp.ne.s32.totalorder %s109, %s110
    %p119 = scmp.eq.s32.totalorder %s15, 0
    %p120 = por %p118, %p119
    %p121 = scmp.ne.s32.totalorder %s109, %s110
    %p122 = scmp.eq.s32.totalorder %s16, 1
    %p123 = por %p121, %p122
    %p125 = scmp.ne.s32.totalorder %s110, %s124
    %p126 = scmp.eq.s32.totalorder %s16, 0
    %p127 = por %p125, %p126
    %s128 = ssub.s32 %s17, %s29
    %s129 = ssub.s32 %s18, %s25
    %s130 = sor.u32 %s128, %s129
    %p131 = scmp.eq.s32.totalorder %s130, 0
    %s133 = sadd.s32 %s132, 1
    %s134 = scalar_select %p131, %s132, %s133
    %p137 = pneg %p131
    %p138 = scmp.eq.s32.totalorder %s10, 1
    %p139 = por %p137, %p138
    %p140 = scmp.ne.s32.totalorder %s132, %s135
    %p141 = scmp.eq.s32.totalorder %s10, 0
    %p142 = por %p140, %p141
    %p143 = scmp.ne.s32.totalorder %s132, %s135
    %p144 = scmp.eq.s32.totalorder %s15, 1
    %p145 = por %p143, %p144
    %p146 = scmp.ne.s32.totalorder %s135, %s136
    %p147 = scmp.eq.s32.totalorder %s15, 0
    %p148 = por %p146, %p147
    %p149 = scmp.ne.s32.totalorder %s135, %s136
    %p150 = scmp.eq.s32.totalorder %s16, 1
    %p151 = por %p149, %p150
    %p153 = scmp.ne.s32.totalorder %s136, %s152
    %p154 = scmp.eq.s32.totalorder %s16, 0
    %p155 = por %p153, %p154
    %p156 = scmp.le.s32.totalorder 1, %s10
    %p157 = scmp.lt.s32.totalorder %s10, 3
    %p158 = pnand %p156, %p157
    %p159 = pneg %p158
    // Predicated region
    $region9: #{_lambda_.5} parent=5 // pred_check
      _
    $region10: #{_lambda_.5} parent=5 // pred_check_branch
      %161 = sbr.rel (%p158) target = $region12
    $region11: #{_lambda_.5} parent=5 // pred_region
      %s162 = ssub.s32 %s10, 1
      // Predicated region
      $region13: #{_lambda_.5} parent=11 // pred_check
        %p163 = pneg %p99
      $region14: #{_lambda_.5} parent=11 // pred_check_branch
        %165 = sbr.rel (%p163) target = $region16
      $region15: #{_lambda_.5} parent=11 // pred_region
        _
      $region16: #{_lambda_.5} parent=11 // pred_fallthru
        _
      // Predicated region
      $region17: #{_lambda_.5} parent=11 // pred_check
        %p166 = pneg %p120
      $region18: #{_lambda_.5} parent=11 // pred_check_branch
        %168 = sbr.rel (%p166) target = $region20
      $region19: #{_lambda_.5} parent=11 // pred_region
        _
      $region20: #{_lambda_.5} parent=11 // pred_fallthru
        _
    $region12: #{_lambda_.5} parent=5 // pred_fallthru
      _
    %p169 = scmp.lt.s32.totalorder %s10, 2
    // Predicated region
    $region21: #{_lambda_.5} parent=5 // pred_check
      %p170 = pneg %p169
    $region22: #{_lambda_.5} parent=5 // pred_check_branch
      %172 = sbr.rel (%p170) target = $region24
    $region23: #{_lambda_.5} parent=5 // pred_region
      // Predicated region
      $region25: #{_lambda_.5} parent=23 // pred_check
        %p173 = pneg %p44
      $region26: #{_lambda_.5} parent=23 // pred_check_branch
        %175 = sbr.rel (%p173) target = $region28
      $region27: #{_lambda_.5} parent=23 // pred_region
        %s176 = smul.u32 4, %s18
        %p177 = scmp.lt.s32.totalorder %s17, 1
        %s178 = scalar_select %p177, %s17, 1
        %p179 = scmp.lt.s32.totalorder %s176, 3
        %s180 = scalar_select %p179, %s176, 3
        %s181 = smul.addr %s178, 4
        %s182 = sadd.s32 %s180, %s181
        %s183 = smul.addr %s182, 2
        %s184 = scalar_lea.vmem %s0, %s183
        %s185 = smul.u32 4, %s18
      $region28: #{_lambda_.5} parent=23 // pred_fallthru
        _
      // Predicated region
      $region29: #{_lambda_.5} parent=23 // pred_check
        %p186 = pneg %p72
      $region30: #{_lambda_.5} parent=23 // pred_check_branch
        %188 = sbr.rel (%p186) target = $region32
      $region31: #{_lambda_.5} parent=23 // pred_region
        %s189 = smul.u32 4, %s18
        %p190 = scmp.lt.s32.totalorder %s17, 1
        %s191 = scalar_select %p190, %s17, 1
        %p192 = scmp.lt.s32.totalorder %s189, 3
        %s193 = scalar_select %p192, %s189, 3
        %s194 = smul.addr %s191, 4
        %s195 = sadd.s32 %s193, %s194
        %s196 = smul.addr %s195, 2
        %s197 = scalar_lea.vmem %s1, %s196
        %s198 = smul.u32 4, %s18
      $region32: #{_lambda_.5} parent=23 // pred_fallthru
        _
    $region24: #{_lambda_.5} parent=5 // pred_fallthru
      _
    %p199 = scmp.le.s32.totalorder 1, %s10
    %p200 = scmp.lt.s32.totalorder %s10, 3
    %p201 = pnand %p199, %p200
    %p202 = pneg %p201
    // Predicated region
    $region33: #{_lambda_.5} parent=5 // pred_check
      _
    $region34: #{_lambda_.5} parent=5 // pred_check_branch
      %204 = sbr.rel (%p201) target = $region36
    $region35: #{_lambda_.5} parent=5 // pred_region
      %s205 = ssub.s32 %s10, 1
      %s206 = smul.u32 4, %s20
      %p207 = scmp.lt.s32.totalorder %s19, 1
      %s208 = scalar_select %p207, %s19, 1
      %p209 = scmp.lt.s32.totalorder %s206, 3
      %s210 = scalar_select %p209, %s206, 3
      %s211 = smul.addr %s208, 4
      %s212 = sadd.s32 %s210, %s211
      %s213 = smul.addr %s212, 2
      %s214 = scalar_lea.vmem %s0, %s213
      %p215 = pneg %p50
      %p216 = pneg %p47
      %s217 = smul.u32 4, %s20
      %p218 = scmp.lt.s32.totalorder %s19, 1
      %s219 = scalar_select %p218, %s19, 1
      %p220 = scmp.lt.s32.totalorder %s217, 3
      %s221 = scalar_select %p220, %s217, 3
      %s222 = smul.addr %s219, 4
      %s223 = sadd.s32 %s221, %s222
      %s224 = smul.addr %s223, 2
      %s225 = scalar_lea.vmem %s1, %s224
      %p226 = pneg %p78
      %p227 = pneg %p75
      %p228 = pneg %p99
      %p229 = pneg %p96
      %p230 = pneg %p120
      %p231 = pneg %p117
      %p232 = pneg %p148
      %p233 = pneg %p145
      %s234 = smul.u32 4, %s20
      %p235 = scmp.lt.s32.totalorder %s19, 1
      %s236 = scalar_select %p235, %s19, 1
      %p237 = scmp.lt.s32.totalorder %s234, 3
      %s238 = scalar_select %p237, %s234, 3
      %s239 = smul.addr %s236, 4
      %s240 = sadd.s32 %s238, %s239
      %s241 = smul.addr %s240, 4
      %s242 = scalar_lea.vmem %s4, %s241
      %s243 = smul.u32 4, %s20
      %p244 = scmp.lt.s32.totalorder %s19, 1
      %s245 = scalar_select %p244, %s19, 1
      %p246 = scmp.lt.s32.totalorder %s243, 3
      %s247 = scalar_select %p246, %s243, 3
      %s248 = smul.addr %s245, 4
      %s249 = sadd.s32 %s247, %s248
      %s250 = smul.addr %s249, 2
      %s251 = scalar_lea.vmem %s0, %s250
      %s252 = smul.u32 4, %s20
      %s253 = smul.u32 4, %s20
      %p254 = scmp.lt.s32.totalorder %s19, 1
      %s255 = scalar_select %p254, %s19, 1
      %p256 = scmp.lt.s32.totalorder %s253, 3
      %s257 = scalar_select %p256, %s253, 3
      %s258 = smul.addr %s255, 4
      %s259 = sadd.s32 %s257, %s258
      %s260 = smul.addr %s259, 2
      %s261 = scalar_lea.vmem %s1, %s260
      %s262 = smul.u32 4, %s20
      %s263 = smul.u32 4, %s20
      %p264 = scmp.lt.s32.totalorder %s19, 1
      %s265 = scalar_select %p264, %s19, 1
      %p266 = scmp.lt.s32.totalorder %s263, 3
      %s267 = scalar_select %p266, %s263, 3
      %s268 = smul.addr %s265, 4
      %s269 = sadd.s32 %s267, %s268
      %s270 = smul.addr %s269, 4
      %s271 = scalar_lea.vmem %s4, %s270
      %s272 = smul.u32 4, %s20
      %v273 = vld [vmem:[%s251] sm:$0xff]
      %v274 = vunpack.c.l.bf16 %v273
      %v275 = vunpack.c.h.bf16 %v273
      %v276 = vld [vmem:[%s2] sm:$0xf]
      %278 = vset.pattern.permute.xlu0 0
      %279 = vperm.xlu0 %278, %v276
      %v280 = vpop.permute.xlu0 %279
      %v282 = vunpack.c.l.s4 839922192
      %v283 = vunpack.c.0.s8 %v282
      %v284 = vlaneseq
      %v285 = vshrl.u32 %v284, 7
      %v286 = vsub.s32 %v283, %v285
      %v287 = vrot.slane %v280, %v286
      %v289 = vmul.f32 %v274, %v287
      %v290 = vmul.f32 %v275, %v287
      %v291 = vld [vmem:[%s3] sm:$0xf]
      %293 = vset.pattern.permute.xlu0 0
      %294 = vperm.xlu0 %293, %v291
      %v295 = vpop.permute.xlu0 %294
      %v297 = vunpack.c.l.s4 839922192
      %v298 = vunpack.c.0.s8 %v297
      %v299 = vlaneseq
      %v300 = vshrl.u32 %v299, 7
      %v301 = vsub.s32 %v298, %v300
      %v302 = vrot.slane %v295, %v301
      %v304 = vadd.f32 %v289, %v302
      %v305 = vadd.f32 %v290, %v302
      %v306 = vld [vmem:[%s261] sm:$0xff]
      %v307 = vunpack.c.l.bf16 %v306
      %v308 = vunpack.c.h.bf16 %v306
      %v309 = vadd.f32 %v304, %v307
      %v310 = vadd.f32 %v305, %v308
      %v311 = vmax.f32 %v309, 0.0
      %v312 = vmax.f32 %v310, 0.0
      %313 = vst [vmem:[%s271] sm:$0xff] %v311
      %314 = vst [vmem:[%s271 + $0x8] sm:$0xff] %v312
      %s315 = smul.u32 4, %s20
      %p316 = scmp.lt.s32.totalorder %s19, 1
      %s317 = scalar_select %p316, %s19, 1
      %p318 = scmp.lt.s32.totalorder %s315, 3
      %s319 = scalar_select %p318, %s315, 3
      %s320 = smul.addr %s317, 4
      %s321 = sadd.s32 %s319, %s320
      %s322 = smul.addr %s321, 4
      %s323 = scalar_lea.vmem %s4, %s322
      // Predicated region
      $region37: #{_lambda_.5} parent=35 // pred_check
        %p324 = pneg %p145
      $region38: #{_lambda_.5} parent=35 // pred_check_branch
        %326 = sbr.rel (%p324) target = $region40
      $region39: #{_lambda_.5} parent=35 // pred_region
        %s327 = smul.u32 4, %s20
      $region40: #{_lambda_.5} parent=35 // pred_fallthru
        _
    $region36: #{_lambda_.5} parent=5 // pred_fallthru
      _
    %p328 = scmp.le.s32.totalorder 2, %s10
    // Predicated region
    $region41: #{_lambda_.5} parent=5 // pred_check
      %p329 = pneg %p328
    $region42: #{_lambda_.5} parent=5 // pred_check_branch
      %331 = sbr.rel (%p329) target = $region44
    $region43: #{_lambda_.5} parent=5 // pred_region
      %s332 = ssub.s32 %s10, 2
      // Predicated region
      $region45: #{_lambda_.5} parent=43 // pred_check
        %p333 = pneg %p151
      $region46: #{_lambda_.5} parent=43 // pred_check_branch
        %335 = sbr.rel (%p333) target = $region48
      $region47: #{_lambda_.5} parent=43 // pred_region
        %s336 = smul.u32 4, %s22
        %p337 = scmp.lt.s32.totalorder %s21, 1
        %s338 = scalar_select %p337, %s21, 1
        %p339 = scmp.lt.s32.totalorder %s336, 3
        %s340 = scalar_select %p339, %s336, 3
        %s341 = smul.addr %s338, 4
        %s342 = sadd.s32 %s340, %s341
        %s343 = smul.addr %s342, 4
        %s344 = scalar_lea.vmem %s4, %s343
      $region48: #{_lambda_.5} parent=43 // pred_fallthru
        _
    $region44: #{_lambda_.5} parent=5 // pred_fallthru
      _
  $region6: #{_lambda_.5} parent=0 // loop_footer
    %s14 = sadd.s32 1, %s10
  $region7: #{_lambda_.5} parent=0 // loop_footer_branch
    %9 = sbr.rel target = $region3
  $region8: #{_lambda_.5} parent=0 // loop_exit
    _

// kernel: _lambda_.3
$region0: #{_lambda_.3}
  #allocation0 [shape = 'u32[]', space=smem, size = 0x4, offset = 0x4, fixed_abs, tag = 'smem constant byte address 0x4 - core index']
  #allocation1 [shape = 'u32[144,128]{1,0:T(1,128)}', space=vmem, size = 0x12000, scoped, tag = 'internal scratch']
  %s0 = inlined_call_operand.vmem [shape: bf16[2,4,512], index: 0, kind: input, shape index: {}]
  %s1 = inlined_call_operand.vmem [shape: bf16[9,4,4], index: 1, kind: input, shape index: {}]
  %s2 = inlined_call_operand.vmem [shape: f32[1,512], index: 2, kind: input, shape index: {}]
  %s3 = inlined_call_operand.vmem [shape: bf16[2,4,512], index: 3, kind: output, shape index: {0}]
  %s4 = inlined_call_operand.vmem [shape: f32[2,4,2], index: 4, kind: output, shape index: {1}]
  %5 = xla_tuple %s3, %s4
  %s6 = sld [smem:[#allocation0]]
  $region53: #{_lambda_.3} parent=0
    _
  %s8 = ssub.s32 1, %s6
  %s9 = scalar_select 0, %s8, %s6
  loop: start=0, step=1, limit=4
  $region2: #{_lambda_.3} parent=0 // loop_pre_header
    _
  $region3: #{_lambda_.3} parent=0 // loop_header
    %s11 = sphi 0, %s15
    %p12 = scmp.ge.s32.totalorder %s11, 4
    %s21 = sphi 0, %s23
    %s24 = sphi 0, %s21
    %s25 = sphi 0, %s24
    %s41 = sphi 0, %s25
    %s45 = sphi 0, %s45
    %s47 = sphi 0, %s45
    %s48 = sphi 0, %s47
    %s62 = sphi 0, %s48
    %s66 = sphi 0, %s66
    %s68 = sphi 0, %s66
    %s69 = sphi 0, %s68
    %s83 = sphi 0, %s69
    %s89 = sphi 0, %s91
    %s92 = sphi 0, %s89
    %s93 = sphi 0, %s92
    %s109 = sphi 0, %s93
    %s115 = sphi 0, %s117
    %s118 = sphi 0, %s115
    %s119 = sphi 0, %s118
    %s135 = sphi 0, %s119
  $region4: #{_lambda_.3} parent=0 // loop_header_branch
    %14 = sbr.rel (%p12) target = $region8
  $region5: #{_lambda_.3} parent=0 // loop_body
    %s16 = ssub.s32 %s11, 1
    %s17 = ssub.s32 %s11, 2
    %s18 = sadd.s32 %s11, 1
    %s19 = ssub.s32 %s11, %s18
    %p20 = scmp.eq.s32.totalorder %s19, 0
    %s22 = sadd.s32 %s21, 1
    %s23 = scalar_select %p20, %s21, %s22
    %p26 = pneg %p20
    %p27 = scmp.eq.s32.totalorder %s11, 1
    %p28 = por %p26, %p27
    %p29 = scmp.ne.s32.totalorder %s21, %s24
    %p30 = scmp.eq.s32.totalorder %s11, 0
    %p31 = por %p29, %p30
    %p32 = scmp.ne.s32.totalorder %s21, %s24
    %p33 = scmp.eq.s32.totalorder %s16, 1
    %p34 = por %p32, %p33
    %p35 = scmp.ne.s32.totalorder %s24, %s25
    %p36 = scmp.eq.s32.totalorder %s16, 0
    %p37 = por %p35, %p36
    %p38 = scmp.ne.s32.totalorder %s24, %s25
    %p39 = scmp.eq.s32.totalorder %s17, 1
    %p40 = por %p38, %p39
    %p42 = scmp.ne.s32.totalorder %s25, %s41
    %p43 = scmp.eq.s32.totalorder %s17, 0
    %p44 = por %p42, %p43
    %s46 = sadd.s32 %s45, 1
    %p49 = scmp.eq.s32.totalorder %s11, 1
    %p50 = scmp.ne.s32.totalorder %s45, %s47
    %p51 = scmp.eq.s32.totalorder %s11, 0
    %p52 = por %p50, %p51
    %p53 = scmp.ne.s32.totalorder %s45, %s47
    %p54 = scmp.eq.s32.totalorder %s16, 1
    %p55 = por %p53, %p54
    %p56 = scmp.ne.s32.totalorder %s47, %s48
    %p57 = scmp.eq.s32.totalorder %s16, 0
    %p58 = por %p56, %p57
    %p59 = scmp.ne.s32.totalorder %s47, %s48
    %p60 = scmp.eq.s32.totalorder %s17, 1
    %p61 = por %p59, %p60
    %p63 = scmp.ne.s32.totalorder %s48, %s62
    %p64 = scmp.eq.s32.totalorder %s17, 0
    %p65 = por %p63, %p64
    %s67 = sadd.s32 %s66, 1
    %p70 = scmp.eq.s32.totalorder %s11, 1
    %p71 = scmp.ne.s32.totalorder %s66, %s68
    %p72 = scmp.eq.s32.totalorder %s11, 0
    %p73 = por %p71, %p72
    %p74 = scmp.ne.s32.totalorder %s66, %s68
    %p75 = scmp.eq.s32.totalorder %s16, 1
    %p76 = por %p74, %p75
    %p77 = scmp.ne.s32.totalorder %s68, %s69
    %p78 = scmp.eq.s32.totalorder %s16, 0
    %p79 = por %p77, %p78
    %p80 = scmp.ne.s32.totalorder %s68, %s69
    %p81 = scmp.eq.s32.totalorder %s17, 1
    %p82 = por %p80, %p81
    %p84 = scmp.ne.s32.totalorder %s69, %s83
    %p85 = scmp.eq.s32.totalorder %s17, 0
    %p86 = por %p84, %p85
    %s87 = ssub.s32 %s11, %s18
    %p88 = scmp.eq.s32.totalorder %s87, 0
    %s90 = sadd.s32 %s89, 1
    %s91 = scalar_select %p88, %s89, %s90
    %p94 = pneg %p88
    %p95 = scmp.eq.s32.totalorder %s11, 1
    %p96 = por %p94, %p95
    %p97 = scmp.ne.s32.totalorder %s89, %s92
    %p98 = scmp.eq.s32.totalorder %s11, 0
    %p99 = por %p97, %p98
    %p100 = scmp.ne.s32.totalorder %s89, %s92
    %p101 = scmp.eq.s32.totalorder %s16, 1
    %p102 = por %p100, %p101
    %p103 = scmp.ne.s32.totalorder %s92, %s93
    %p104 = scmp.eq.s32.totalorder %s16, 0
    %p105 = por %p103, %p104
    %p106 = scmp.ne.s32.totalorder %s92, %s93
    %p107 = scmp.eq.s32.totalorder %s17, 1
    %p108 = por %p106, %p107
    %p110 = scmp.ne.s32.totalorder %s93, %s109
    %p111 = scmp.eq.s32.totalorder %s17, 0
    %p112 = por %p110, %p111
    %s113 = ssub.s32 %s11, %s18
    %p114 = scmp.eq.s32.totalorder %s113, 0
    %s116 = sadd.s32 %s115, 1
    %s117 = scalar_select %p114, %s115, %s116
    %p120 = pneg %p114
    %p121 = scmp.eq.s32.totalorder %s11, 1
    %p122 = por %p120, %p121
    %p123 = scmp.ne.s32.totalorder %s115, %s118
    %p124 = scmp.eq.s32.totalorder %s11, 0
    %p125 = por %p123, %p124
    %p126 = scmp.ne.s32.totalorder %s115, %s118
    %p127 = scmp.eq.s32.totalorder %s16, 1
    %p128 = por %p126, %p127
    %p129 = scmp.ne.s32.totalorder %s118, %s119
    %p130 = scmp.eq.s32.totalorder %s16, 0
    %p131 = por %p129, %p130
    %p132 = scmp.ne.s32.totalorder %s118, %s119
    %p133 = scmp.eq.s32.totalorder %s17, 1
    %p134 = por %p132, %p133
    %p136 = scmp.ne.s32.totalorder %s119, %s135
    %p137 = scmp.eq.s32.totalorder %s17, 0
    %p138 = por %p136, %p137
    %p139 = scmp.le.s32.totalorder 1, %s11
    %p140 = scmp.lt.s32.totalorder %s11, 3
    %p141 = pnand %p139, %p140
    %p142 = pneg %p141
    // Predicated region
    $region9: #{_lambda_.3} parent=5 // pred_check
      _
    $region10: #{_lambda_.3} parent=5 // pred_check_branch
      %144 = sbr.rel (%p141) target = $region12
    $region11: #{_lambda_.3} parent=5 // pred_region
      %s145 = ssub.s32 %s11, 1
      // Predicated region
      $region13: #{_lambda_.3} parent=11 // pred_check
        %p146 = pneg %p58
      $region14: #{_lambda_.3} parent=11 // pred_check_branch
        %148 = sbr.rel (%p146) target = $region16
      $region15: #{_lambda_.3} parent=11 // pred_region
        _
      $region16: #{_lambda_.3} parent=11 // pred_fallthru
        _
      // Predicated region
      $region17: #{_lambda_.3} parent=11 // pred_check
        %p149 = pneg %p79
      $region18: #{_lambda_.3} parent=11 // pred_check_branch
        %151 = sbr.rel (%p149) target = $region20
      $region19: #{_lambda_.3} parent=11 // pred_region
        _
      $region20: #{_lambda_.3} parent=11 // pred_fallthru
        _
    $region12: #{_lambda_.3} parent=5 // pred_fallthru
      _
    %p152 = scmp.lt.s32.totalorder %s11, 2
    // Predicated region
    $region21: #{_lambda_.3} parent=5 // pred_check
      %p153 = pneg %p152
    $region22: #{_lambda_.3} parent=5 // pred_check_branch
      %155 = sbr.rel (%p153) target = $region24
    $region23: #{_lambda_.3} parent=5 // pred_region
      // Predicated region
      $region25: #{_lambda_.3} parent=23 // pred_check
        %p156 = pneg %p31
      $region26: #{_lambda_.3} parent=23 // pred_check_branch
        %158 = sbr.rel (%p156) target = $region28
      $region27: #{_lambda_.3} parent=23 // pred_region
        %p159 = scmp.lt.s32.totalorder %s11, 1
        %s160 = scalar_select %p159, %s11, 1
        %s161 = smul.addr %s160, 4
        %s162 = smul.addr %s161, 2
        %s163 = scalar_lea.vmem %s0, %s162
      $region28: #{_lambda_.3} parent=23 // pred_fallthru
        _
    $region24: #{_lambda_.3} parent=5 // pred_fallthru
      _
    %p164 = scmp.le.s32.totalorder 1, %s11
    %p165 = scmp.lt.s32.totalorder %s11, 3
    %p166 = pnand %p164, %p165
    %p167 = pneg %p166
    // Predicated region
    $region29: #{_lambda_.3} parent=5 // pred_check
      _
    $region30: #{_lambda_.3} parent=5 // pred_check_branch
      %169 = sbr.rel (%p166) target = $region32
    $region31: #{_lambda_.3} parent=5 // pred_region
      %s170 = ssub.s32 %s11, 1
      %p171 = scmp.lt.s32.totalorder %s16, 1
      %s172 = scalar_select %p171, %s16, 1
      %s173 = smul.addr %s172, 4
      %s174 = smul.addr %s173, 2
      %s175 = scalar_lea.vmem %s0, %s174
      %p176 = pneg %p37
      %p177 = pneg %p34
      %p178 = pneg %p58
      %p179 = pneg %p55
      %p180 = pneg %p79
      %p181 = pneg %p76
      %p182 = pneg %p105
      %p183 = pneg %p102
      %p184 = scmp.lt.s32.totalorder %s16, 1
      %s185 = scalar_select %p184, %s16, 1
      %s186 = smul.addr %s185, 4
      %s187 = smul.addr %s186, 2
      %s188 = scalar_lea.vmem %s3, %s187
      %p189 = pneg %p131
      %p190 = pneg %p128
      %p191 = scmp.lt.s32.totalorder %s16, 1
      %s192 = scalar_select %p191, %s16, 1
      %s193 = smul.addr %s192, 4
      %s194 = scalar_lea.vmem %s4, %s193
      %p195 = scmp.lt.s32.totalorder %s16, 1
      %s196 = scalar_select %p195, %s16, 1
      %s197 = smul.addr %s196, 4
      %s198 = smul.addr %s197, 2
      %s199 = scalar_lea.vmem %s0, %s198
      %p200 = scmp.lt.s32.totalorder %s16, 1
      %s201 = scalar_select %p200, %s16, 1
      %s202 = smul.addr %s201, 4
      %s203 = smul.addr %s202, 2
      %s204 = scalar_lea.vmem %s3, %s203
      %p205 = scmp.lt.s32.totalorder %s16, 1
      %s206 = scalar_select %p205, %s16, 1
      %s207 = smul.addr %s206, 4
      %s208 = scalar_lea.vmem %s4, %s207
      %vm210 = vcmask 148480
      %211 = vst.msk [vmem:[%s204] sm:$0x3] %vm210, 0
      %vm212 = vcmask 1041560
      %213 = vst.msk [vmem:[%s204 + $0x6] sm:$0x3] %vm212, 0
      %v214 = vld [vmem:[%s1] sm:$0x3]
      %v215 = vld [vmem:[%s1 + $0x2] sm:$0x3]
      %v216 = vld [vmem:[%s1 + $0x4] sm:$0x3]
      %v217 = vld [vmem:[%s1 + $0x6] sm:$0x3]
      %v218 = vld [vmem:[%s1 + $0x8] sm:$0x3]
      %v219 = vld [vmem:[%s1 + $0xa] sm:$0x3]
      %v220 = vld [vmem:[%s1 + $0xc] sm:$0x3]
      %v221 = vld [vmem:[%s1 + $0xe] sm:$0x3]
      %v222 = vld [vmem:[%s1 + $0x10] sm:$0x3]
      %v223 = vld [vmem:[%s199] sm:$0x3f]
      %v224 = vld [vmem:[%s199] sm:$0xff]
      %v226 = vcombine.high %v224, %v224
      %v228 = vunpack.c.l.s4 1983009808
      %v229 = vunpack.c.0.s8 %v228
      %v230 = vlaneseq
      %v231 = vshrl.u32 %v230, 7
      %v232 = vsub.s32 %v229, %v231
      %v233 = vrot.slane %v224, %v232
      %v235 = vunpack.c.l.s4 1983009808
      %v236 = vunpack.c.0.s8 %v235
      %v237 = vlaneseq
      %v238 = vshrl.u32 %v237, 7
      %v239 = vsub.s32 %v236, %v238
      %v240 = vrot.slane %v226, %v239
      %v241 = vcombine.high %v233, %v233
      %v242 = vcombine.high %v240, %v240
      %243 = vrot.lane.b32.xlu0 %v233, 127
      %v244 = vpop.permute.xlu0 %243
      %245 = vrot.lane.b32.xlu0 %v241, 127
      %v246 = vpop.permute.xlu0 %245
      %247 = vrot.lane.b32.xlu0 %v240, 127
      %v248 = vpop.permute.xlu0 %247
      %249 = vrot.lane.b32.xlu0 %v242, 127
      %v250 = vpop.permute.xlu0 %249
      %vm251 = vcmask 1039360
      %v252 = vsel %vm251, %v244, %v246
      %v253 = vsel %vm251, %v246, %v248
      %v254 = vsel %vm251, %v248, %v250
      %vm255 = vcmask 31744
      %v257 = vsel %vm255, %v215, 0
      %vm259 = vcmask 1041408
      %v261 = vsel %vm259, %v252, 0
      %v264 = vsel %vm259, %v253, 0
      %v267 = vsel %vm259, %v254, 0
      %269 = vmatprep.subr.bf16.mxu0 %v264
      %270 = vmatpush1.bf16.msra.mxu0 %v261
      %271 = vmatprep.subr.bf16.mxu0 0
      %272 = vmatpush1.bf16.msra.mxu0 0
      %273 = vmatprep.subr.bf16.mxu0 0
      %274 = vmatpush1.bf16.msra.mxu0 0
      %275 = vmatprep.subr.bf16.mxu0 0
      %276 = vmatpush1.bf16.msra.mxu0 0
      %277 = vmatprep.subr.bf16.mxu0 0
      %278 = vmatpush1.bf16.msra.mxu0 0
      %279 = vmatprep.subr.bf16.mxu0 0
      %280 = vmatpush1.bf16.msra.mxu0 0
      %281 = vmatprep.subr.bf16.mxu0 0
      %282 = vmatpush1.bf16.msra.mxu0 0
      %283 = vmatprep.subr.bf16.mxu0 0
      %284 = vmatpush1.bf16.msra.mxu0 0
      %285 = vmatprep.subr.bf16.mxu0 0
      %286 = vmatpush1.bf16.msra.mxu0 0
      %287 = vmatprep.subr.bf16.mxu0 0
      %288 = vmatpush1.bf16.msra.mxu0 0
      %289 = vmatprep.subr.bf16.mxu0 0
      %290 = vmatpush1.bf16.msra.mxu0 0
      %291 = vmatprep.subr.bf16.mxu0 0
      %292 = vmatpush1.bf16.msra.mxu0 0
      %293 = vmatprep.subr.bf16.mxu0 0
      %294 = vmatpush1.bf16.msra.mxu0 0
      %295 = vmatprep.subr.bf16.mxu0 0
      %296 = vmatpush1.bf16.msra.mxu0 0
      %297 = vmatprep.subr.bf16.mxu0 0
      %298 = vmatpush1.bf16.msra.mxu0 0
      %299 = vmatprep.subr.bf16.mxu0 0
      %300 = vmatpush1.bf16.msra.mxu0 0
      %301 = vmatprep.mubr.bf16.mxu0 0
      %302 = vmatmul.mubr.bf16.gmra.mrb[0].mxu0 %v257
      %v303 = vpop.f32.mrb[0].mxu0
      %v304 = vadd.f32 0.0, %v303
      %v305 = vpop.f32.mrb[0].mxu0
      %v306 = vadd.f32 0.0, %v305
      %v307 = vpop.f32.mrb[0].mxu0
      %v308 = vpop.f32.mrb[0].mxu0
      %309 = vdwg.mxu0
      %310 = vmatprep.subr.bf16.mxu0 0
      %311 = vmatpush1.bf16.msra.mxu0 %v267
      %312 = vmatprep.subr.bf16.mxu0 0
      %313 = vmatpush1.bf16.msra.mxu0 0
      %314 = vmatprep.subr.bf16.mxu0 0
      %315 = vmatpush1.bf16.msra.mxu0 0
      %316 = vmatprep.subr.bf16.mxu0 0
      %317 = vmatpush1.bf16.msra.mxu0 0
      %318 = vmatprep.subr.bf16.mxu0 0
      %319 = vmatpush1.bf16.msra.mxu0 0
      %320 = vmatprep.subr.bf16.mxu0 0
      %321 = vmatpush1.bf16.msra.mxu0 0
      %322 = vmatprep.subr.bf16.mxu0 0
      %323 = vmatpush1.bf16.msra.mxu0 0
      %324 = vmatprep.subr.bf16.mxu0 0
      %325 = vmatpush1.bf16.msra.mxu0 0
      %326 = vmatprep.subr.bf16.mxu0 0
      %327 = vmatpush1.bf16.msra.mxu0 0
      %328 = vmatprep.subr.bf16.mxu0 0
      %329 = vmatpush1.bf16.msra.mxu0 0
      %330 = vmatprep.subr.bf16.mxu0 0
      %331 = vmatpush1.bf16.msra.mxu0 0
      %332 = vmatprep.subr.bf16.mxu0 0
      %333 = vmatpush1.bf16.msra.mxu0 0
      %334 = vmatprep.subr.bf16.mxu0 0
      %335 = vmatpush1.bf16.msra.mxu0 0
      %336 = vmatprep.subr.bf16.mxu0 0
      %337 = vmatpush1.bf16.msra.mxu0 0
      %338 = vmatprep.subr.bf16.mxu0 0
      %339 = vmatpush1.bf16.msra.mxu0 0
      %340 = vmatprep.subr.bf16.mxu0 0
      %341 = vmatpush1.bf16.msra.mxu0 0
      %342 = vmatprep.mubr.bf16.mxu0 0
      %343 = vmatmul.mubr.bf16.gmra.mrb[0].mxu0 %v257
      %v344 = vpop.f32.mrb[0].mxu0
      %v345 = vadd.f32 0.0, %v344
      %v346 = vpop.f32.mrb[0].mxu0
      %v347 = vpop.f32.mrb[0].mxu0
      %v348 = vpop.f32.mrb[0].mxu0
      %349 = vdwg.mxu0
      %v351 = vcombine.high %v223, %v223
      %v353 = vunpack.c.l.s4 1983009808
      %v354 = vunpack.c.0.s8 %v353
      %v355 = vlaneseq
      %v356 = vshrl.u32 %v355, 7
      %v357 = vsub.s32 %v354, %v356
      %v358 = vrot.slane %v223, %v357
      %v360 = vunpack.c.l.s4 1983009808
      %v361 = vunpack.c.0.s8 %v360
      %v362 = vlaneseq
      %v363 = vshrl.u32 %v362, 7
      %v364 = vsub.s32 %v361, %v363
      %v365 = vrot.slane %v351, %v364
      %v366 = vcombine.high %v358, %v358
      %v368 = vsel %vm255, %v214, 0
      %v371 = vsel %vm259, %v358, 0
      %v374 = vsel %vm259, %v366, 0
      %v377 = vsel %vm259, %v365, 0
      %379 = vmatprep.subr.bf16.mxu0 %v374
      %380 = vmatpush1.bf16.msra.mxu0 %v371
      %381 = vmatprep.subr.bf16.mxu0 0
      %382 = vmatpush1.bf16.msra.mxu0 0
      %383 = vmatprep.subr.bf16.mxu0 0
      %384 = vmatpush1.bf16.msra.mxu0 0
      %385 = vmatprep.subr.bf16.mxu0 0
      %386 = vmatpush1.bf16.msra.mxu0 0
      %387 = vmatprep.subr.bf16.mxu0 0
      %388 = vmatpush1.bf16.msra.mxu0 0
      %389 = vmatprep.subr.bf16.mxu0 0
      %390 = vmatpush1.bf16.msra.mxu0 0
      %391 = vmatprep.subr.bf16.mxu0 0
      %392 = vmatpush1.bf16.msra.mxu0 0
      %393 = vmatprep.subr.bf16.mxu0 0
      %394 = vmatpush1.bf16.msra.mxu0 0
      %395 = vmatprep.subr.bf16.mxu0 0
      %396 = vmatpush1.bf16.msra.mxu0 0
      %397 = vmatprep.subr.bf16.mxu0 0
      %398 = vmatpush1.bf16.msra.mxu0 0
      %399 = vmatprep.subr.bf16.mxu0 0
      %400 = vmatpush1.bf16.msra.mxu0 0
      %401 = vmatprep.subr.bf16.mxu0 0
      %402 = vmatpush1.bf16.msra.mxu0 0
      %403 = vmatprep.subr.bf16.mxu0 0
      %404 = vmatpush1.bf16.msra.mxu0 0
      %405 = vmatprep.subr.bf16.mxu0 0
      %406 = vmatpush1.bf16.msra.mxu0 0
      %407 = vmatprep.subr.bf16.mxu0 0
      %408 = vmatpush1.bf16.msra.mxu0 0
      %409 = vmatprep.subr.bf16.mxu0 0
      %410 = vmatpush1.bf16.msra.mxu0 0
      %411 = vmatprep.mubr.bf16.mxu0 0
      %412 = vmatmul.mubr.bf16.gmra.mrb[0].mxu0 %v368
      %v413 = vpop.f32.mrb[0].mxu0
      %v414 = vadd.f32 %v304, %v413
      %v415 = vpop.f32.mrb[0].mxu0
      %v416 = vadd.f32 %v306, %v415
      %v417 = vpop.f32.mrb[0].mxu0
      %v418 = vpop.f32.mrb[0].mxu0
      %419 = vdwg.mxu0
      %420 = vmatprep.subr.bf16.mxu0 0
      %421 = vmatpush1.bf16.msra.mxu0 %v377
      %422 = vmatprep.subr.bf16.mxu0 0
      %423 = vmatpush1.bf16.msra.mxu0 0
      %424 = vmatprep.subr.bf16.mxu0 0
      %425 = vmatpush1.bf16.msra.mxu0 0
      %426 = vmatprep.subr.bf16.mxu0 0
      %427 = vmatpush1.bf16.msra.mxu0 0
      %428 = vmatprep.subr.bf16.mxu0 0
      %429 = vmatpush1.bf16.msra.mxu0 0
      %430 = vmatprep.subr.bf16.mxu0 0
      %431 = vmatpush1.bf16.msra.mxu0 0
      %432 = vmatprep.subr.bf16.mxu0 0
      %433 = vmatpush1.bf16.msra.mxu0 0
      %434 = vmatprep.subr.bf16.mxu0 0
      %435 = vmatpush1.bf16.msra.mxu0 0
      %436 = vmatprep.subr.bf16.mxu0 0
      %437 = vmatpush1.bf16.msra.mxu0 0
      %438 = vmatprep.subr.bf16.mxu0 0
      %439 = vmatpush1.bf16.msra.mxu0 0
      %440 = vmatprep.subr.bf16.mxu0 0
      %441 = vmatpush1.bf16.msra.mxu0 0
      %442 = vmatprep.subr.bf16.mxu0 0
      %443 = vmatpush1.bf16.msra.mxu0 0
      %444 = vmatprep.subr.bf16.mxu0 0
      %445 = vmatpush1.bf16.msra.mxu0 0
      %446 = vmatprep.subr.bf16.mxu0 0
      %447 = vmatpush1.bf16.msra.mxu0 0
      %448 = vmatprep.subr.bf16.mxu0 0
      %449 = vmatpush1.bf16.msra.mxu0 0
      %450 = vmatprep.subr.bf16.mxu0 0
      %451 = vmatpush1.bf16.msra.mxu0 0
      %452 = vmatprep.mubr.bf16.mxu0 0
      %453 = vmatmul.mubr.bf16.gmra.mrb[0].mxu0 %v368
      %v454 = vpop.f32.mrb[0].mxu0
      %v455 = vadd.f32 %v345, %v454
      %v456 = vpop.f32.mrb[0].mxu0
      %v457 = vpop.f32.mrb[0].mxu0
      %v458 = vpop.f32.mrb[0].mxu0
      %459 = vdwg.mxu0
      %v460 = vld [vmem:[%s199] sm:$0xff]
      %v462 = vcombine.high %v460, %v460
      %v464 = vunpack.c.l.s4 1983009808
      %v465 = vunpack.c.0.s8 %v464
      %v466 = vlaneseq
      %v467 = vshrl.u32 %v466, 7
      %v468 = vsub.s32 %v465, %v467
      %v469 = vrot.slane %v460, %v468
      %v471 = vunpack.c.l.s4 1983009808
      %v472 = vunpack.c.0.s8 %v471
      %v473 = vlaneseq
      %v474 = vshrl.u32 %v473, 7
      %v475 = vsub.s32 %v472, %v474
      %v476 = vrot.slane %v462, %v475
      %v477 = vcombine.high %v469, %v469
      %v478 = vcombine.high %v476, %v476
      %479 = vrot.lane.b32.xlu0 %v469, 126
      %v480 = vpop.permute.xlu0 %479
      %481 = vrot.lane.b32.xlu0 %v477, 126
      %v482 = vpop.permute.xlu0 %481
      %483 = vrot.lane.b32.xlu0 %v476, 126
      %v484 = vpop.permute.xlu0 %483
      %485 = vrot.lane.b32.xlu0 %v478, 126
      %v486 = vpop.permute.xlu0 %485
      %vm487 = vcmask 1031168
      %v488 = vsel %vm487, %v480, %v482
      %v489 = vsel %vm487, %v482, %v484
      %v490 = vsel %vm487, %v484, %v486
      %v492 = vsel %vm255, %v216, 0
      %v495 = vsel %vm259, %v488, 0
      %v498 = vsel %vm259, %v489, 0
      %v501 = vsel %vm259, %v490, 0
      %503 = vmatprep.subr.bf16.mxu0 %v498
      %504 = vmatpush1.bf16.msra.mxu0 %v495
      %505 = vmatprep.subr.bf16.mxu0 0
      %506 = vmatpush1.bf16.msra.mxu0 0
      %507 = vmatprep.subr.bf16.mxu0 0
      %508 = vmatpush1.bf16.msra.mxu0 0
      %509 = vmatprep.subr.bf16.mxu0 0
      %510 = vmatpush1.bf16.msra.mxu0 0
      %511 = vmatprep.subr.bf16.mxu0 0
      %512 = vmatpush1.bf16.msra.mxu0 0
      %513 = vmatprep.subr.bf16.mxu0 0
      %514 = vmatpush1.bf16.msra.mxu0 0
      %515 = vmatprep.subr.bf16.mxu0 0
      %516 = vmatpush1.bf16.msra.mxu0 0
      %517 = vmatprep.subr.bf16.mxu0 0
      %518 = vmatpush1.bf16.msra.mxu0 0
      %519 = vmatprep.subr.bf16.mxu0 0
      %520 = vmatpush1.bf16.msra.mxu0 0
      %521 = vmatprep.subr.bf16.mxu0 0
      %522 = vmatpush1.bf16.msra.mxu0 0
      %523 = vmatprep.subr.bf16.mxu0 0
      %524 = vmatpush1.bf16.msra.mxu0 0
      %525 = vmatprep.subr.bf16.mxu0 0
      %526 = vmatpush1.bf16.msra.mxu0 0
      %527 = vmatprep.subr.bf16.mxu0 0
      %528 = vmatpush1.bf16.msra.mxu0 0
      %529 = vmatprep.subr.bf16.mxu0 0
      %530 = vmatpush1.bf16.msra.mxu0 0
      %531 = vmatprep.subr.bf16.mxu0 0
      %532 = vmatpush1.bf16.msra.mxu0 0
      %533 = vmatprep.subr.bf16.mxu0 0
      %534 = vmatpush1.bf16.msra.mxu0 0
      %535 = vmatprep.mubr.bf16.mxu0 0
      %536 = vmatmul.mubr.bf16.gmra.mrb[0].mxu0 %v492
      %v537 = vpop.f32.mrb[0].mxu0
      %v538 = vadd.f32 0.0, %v537
      %v539 = vpop.f32.mrb[0].mxu0
      %v540 = vadd.f32 0.0, %v539
      %v541 = vpop.f32.mrb[0].mxu0
      %v542 = vpop.f32.mrb[0].mxu0
      %543 = vdwg.mxu0
      %544 = vmatprep.subr.bf16.mxu0 0
      %545 = vmatpush1.bf16.msra.mxu0 %v501
      %546 = vmatprep.subr.bf16.mxu0 0
      %547 = vmatpush1.bf16.msra.mxu0 0
      %548 = vmatprep.subr.bf16.mxu0 0
      %549 = vmatpush1.bf16.msra.mxu0 0
      %550 = vmatprep.subr.bf16.mxu0 0
      %551 = vmatpush1.bf16.msra.mxu0 0
      %552 = vmatprep.subr.bf16.mxu0 0
      %553 = vmatpush1.bf16.msra.mxu0 0
      %554 = vmatprep.subr.bf16.mxu0 0
      %555 = vmatpush1.bf16.msra.mxu0 0
      %556 = vmatprep.subr.bf16.mxu0 0
      %557 = vmatpush1.bf16.msra.mxu0 0
      %558 = vmatprep.subr.bf16.mxu0 0
      %559 = vmatpush1.bf16.msra.mxu0 0
      %560 = vmatprep.subr.bf16.mxu0 0
      %561 = vmatpush1.bf16.msra.mxu0 0
      %562 = vmatprep.subr.bf16.mxu0 0
      %563 = vmatpush1.bf16.msra.mxu0 0
      %564 = vmatprep.subr.bf16.mxu0 0
      %565 = vmatpush1.bf16.msra.mxu0 0
      %566 = vmatprep.subr.bf16.mxu0 0
      %567 = vmatpush1.bf16.msra.mxu0 0
      %568 = vmatprep.subr.bf16.mxu0 0
      %569 = vmatpush1.bf16.msra.mxu0 0
      %570 = vmatprep.subr.bf16.mxu0 0
      %571 = vmatpush1.bf16.msra.mxu0 0
      %572 = vmatprep.subr.bf16.mxu0 0
      %573 = vmatpush1.bf16.msra.mxu0 0
      %574 = vmatprep.subr.bf16.mxu0 0
      %575 = vmatpush1.bf16.msra.mxu0 0
      %576 = vmatprep.mubr.bf16.mxu0 0
      %577 = vmatmul.mubr.bf16.gmra.mrb[0].mxu0 %v492
      %v578 = vpop.f32.mrb[0].mxu0
      %v579 = vadd.f32 0.0, %v578
      %v580 = vpop.f32.mrb[0].mxu0
      %v581 = vpop.f32.mrb[0].mxu0
      %v582 = vpop.f32.mrb[0].mxu0
      %583 = vdwg.mxu0
      %v584 = vadd.f32 %v414, %v538
      %v585 = vadd.f32 %v416, %v540
      %v586 = vadd.f32 %v455, %v579
      %v587 = vld [vmem:[%s199] sm:$0xff]
      %v589 = vcombine.high %v587, %v587
      %v591 = vunpack.c.l.s4 1983009808
      %v592 = vunpack.c.0.s8 %v591
      %v593 = vlaneseq
      %v594 = vshrl.u32 %v593, 7
      %v595 = vsub.s32 %v592, %v594
      %v596 = vrot.slane %v587, %v595
      %v598 = vunpack.c.l.s4 1983009808
      %v599 = vunpack.c.0.s8 %v598
      %v600 = vlaneseq
      %v601 = vshrl.u32 %v600, 7
      %v602 = vsub.s32 %v599, %v601
      %v603 = vrot.slane %v589, %v602
      %v604 = vcombine.high %v596, %v596
      %v605 = vcombine.high %v603, %v603
      %606 = vrot.lane.b32.xlu0 %v596, 110
      %v607 = vpop.permute.xlu0 %606
      %608 = vrot.lane.b32.xlu0 %v604, 110
      %v609 = vpop.permute.xlu0 %608
      %610 = vrot.lane.b32.xlu0 %v603, 110
      %v611 = vpop.permute.xlu0 %610
      %612 = vrot.lane.b32.xlu0 %v605, 110
      %v613 = vpop.permute.xlu0 %612
      %vm614 = vcmask 900096
      %v615 = vsel %vm614, %v607, %v609
      %v616 = vsel %vm614, %v609, %v611
      %v617 = vsel %vm614, %v611, %v613
      %v619 = vsel %vm255, %v217, 0
      %v622 = vsel %vm259, %v615, 0
      %v625 = vsel %vm259, %v616, 0
      %v628 = vsel %vm259, %v617, 0
      %630 = vmatprep.subr.bf16.mxu0 %v625
      %631 = vmatpush1.bf16.msra.mxu0 %v622
      %632 = vmatprep.subr.bf16.mxu0 0
      %633 = vmatpush1.bf16.msra.mxu0 0
      %634 = vmatprep.subr.bf16.mxu0 0
      %635 = vmatpush1.bf16.msra.mxu0 0
      %636 = vmatprep.subr.bf16.mxu0 0
      %637 = vmatpush1.bf16.msra.mxu0 0
      %638 = vmatprep.subr.bf16.mxu0 0
      %639 = vmatpush1.bf16.msra.mxu0 0
      %640 = vmatprep.subr.bf16.mxu0 0
      %641 = vmatpush1.bf16.msra.mxu0 0
      %642 = vmatprep.subr.bf16.mxu0 0
      %643 = vmatpush1.bf16.msra.mxu0 0
      %644 = vmatprep.subr.bf16.mxu0 0
      %645 = vmatpush1.bf16.msra.mxu0 0
      %646 = vmatprep.subr.bf16.mxu0 0
      %647 = vmatpush1.bf16.msra.mxu0 0
      %648 = vmatprep.subr.bf16.mxu0 0
      %649 = vmatpush1.bf16.msra.mxu0 0
      %650 = vmatprep.subr.bf16.mxu0 0
      %651 = vmatpush1.bf16.msra.mxu0 0
      %652 = vmatprep.subr.bf16.mxu0 0
      %653 = vmatpush1.bf16.msra.mxu0 0
      %654 = vmatprep.subr.bf16.mxu0 0
      %655 = vmatpush1.bf16.msra.mxu0 0
      %656 = vmatprep.subr.bf16.mxu0 0
      %657 = vmatpush1.bf16.msra.mxu0 0
      %658 = vmatprep.subr.bf16.mxu0 0
      %659 = vmatpush1.bf16.msra.mxu0 0
      %660 = vmatprep.subr.bf16.mxu0 0
      %661 = vmatpush1.bf16.msra.mxu0 0
      %662 = vmatprep.mubr.bf16.mxu0 0
      %663 = vmatmul.mubr.bf16.gmra.mrb[0].mxu0 %v619
      %v664 = vpop.f32.mrb[0].mxu0
      %v665 = vadd.f32 0.0, %v664
      %v666 = vpop.f32.mrb[0].mxu0
      %v667 = vadd.f32 0.0, %v666
      %v668 = vpop.f32.mrb[0].mxu0
      %v669 = vpop.f32.mrb[0].mxu0
      %670 = vdwg.mxu0
      %671 = vmatprep.subr.bf16.mxu0 0
      %672 = vmatpush1.bf16.msra.mxu0 %v628
      %673 = vmatprep.subr.bf16.mxu0 0
      %674 = vmatpush1.bf16.msra.mxu0 0
      %675 = vmatprep.subr.bf16.mxu0 0
      %676 = vmatpush1.bf16.msra.mxu0 0
      %677 = vmatprep.subr.bf16.mxu0 0
      %678 = vmatpush1.bf16.msra.mxu0 0
      %679 = vmatprep.subr.bf16.mxu0 0
      %680 = vmatpush1.bf16.msra.mxu0 0
      %681 = vmatprep.subr.bf16.mxu0 0
      %682 = vmatpush1.bf16.msra.mxu0 0
      %683 = vmatprep.subr.bf16.mxu0 0
      %684 = vmatpush1.bf16.msra.mxu0 0
      %685 = vmatprep.subr.bf16.mxu0 0
      %686 = vmatpush1.bf16.msra.mxu0 0
      %687 = vmatprep.subr.bf16.mxu0 0
      %688 = vmatpush1.bf16.msra.mxu0 0
      %689 = vmatprep.subr.bf16.mxu0 0
      %690 = vmatpush1.bf16.msra.mxu0 0
      %691 = vmatprep.subr.bf16.mxu0 0
      %692 = vmatpush1.bf16.msra.mxu0 0
      %693 = vmatprep.subr.bf16.mxu0 0
      %694 = vmatpush1.bf16.msra.mxu0 0
      %695 = vmatprep.subr.bf16.mxu0 0
      %696 = vmatpush1.bf16.msra.mxu0 0
      %697 = vmatprep.subr.bf16.mxu0 0
      %698 = vmatpush1.bf16.msra.mxu0 0
      %699 = vmatprep.subr.bf16.mxu0 0
      %700 = vmatpush1.bf16.msra.mxu0 0
      %701 = vmatprep.subr.bf16.mxu0 0
      %702 = vmatpush1.bf16.msra.mxu0 0
      %703 = vmatprep.mubr.bf16.mxu0 0
      %704 = vmatmul.mubr.bf16.gmra.mrb[0].mxu0 %v619
      %v705 = vpop.f32.mrb[0].mxu0
      %v706 = vadd.f32 0.0, %v705
      %v707 = vpop.f32.mrb[0].mxu0
      %v708 = vpop.f32.mrb[0].mxu0
      %v709 = vpop.f32.mrb[0].mxu0
      %710 = vdwg.mxu0
      %v711 = vadd.f32 %v584, %v665
      %v712 = vadd.f32 %v585, %v667
      %v713 = vadd.f32 %v586, %v706
      %v714 = vld [vmem:[%s199] sm:$0xff]
      %v716 = vcombine.high %v714, %v714
      %v718 = vunpack.c.l.s4 1983009808
      %v719 = vunpack.c.0.s8 %v718
      %v720 = vlaneseq
      %v721 = vshrl.u32 %v720, 7
      %v722 = vsub.s32 %v719, %v721
      %v723 = vrot.slane %v714, %v722
      %v725 = vunpack.c.l.s4 1983009808
      %v726 = vunpack.c.0.s8 %v725
      %v727 = vlaneseq
      %v728 = vshrl.u32 %v727, 7
      %v729 = vsub.s32 %v726, %v728
      %v730 = vrot.slane %v716, %v729
      %v731 = vcombine.high %v723, %v723
      %v732 = vcombine.high %v730, %v730
      %733 = vrot.lane.b32.xlu0 %v723, 109
      %v734 = vpop.permute.xlu0 %733
      %735 = vrot.lane.b32.xlu0 %v731, 109
      %v736 = vpop.permute.xlu0 %735
      %737 = vrot.lane.b32.xlu0 %v730, 109
      %v738 = vpop.permute.xlu0 %737
      %739 = vrot.lane.b32.xlu0 %v732, 109
      %v740 = vpop.permute.xlu0 %739
      %vm741 = vcmask 891904
      %v742 = vsel %vm741, %v734, %v736
      %v743 = vsel %vm741, %v736, %v738
      %v744 = vsel %vm741, %v738, %v740
      %v746 = vsel %vm255, %v218, 0
      %v749 = vsel %vm259, %v742, 0
      %v752 = vsel %vm259, %v743, 0
      %v755 = vsel %vm259, %v744, 0
      %757 = vmatprep.subr.bf16.mxu0 %v752
      %758 = vmatpush1.bf16.msra.mxu0 %v749
      %759 = vmatprep.subr.bf16.mxu0 0
      %760 = vmatpush1.bf16.msra.mxu0 0
      %761 = vmatprep.subr.bf16.mxu0 0
      %762 = vmatpush1.bf16.msra.mxu0 0
      %763 = vmatprep.subr.bf16.mxu0 0
      %764 = vmatpush1.bf16.msra.mxu0 0
      %765 = vmatprep.subr.bf16.mxu0 0
      %766 = vmatpush1.bf16.msra.mxu0 0
      %767 = vmatprep.subr.bf16.mxu0 0
      %768 = vmatpush1.bf16.msra.mxu0 0
      %769 = vmatprep.subr.bf16.mxu0 0
      %770 = vmatpush1.bf16.msra.mxu0 0
      %771 = vmatprep.subr.bf16.mxu0 0
      %772 = vmatpush1.bf16.msra.mxu0 0
      %773 = vmatprep.subr.bf16.mxu0 0
      %774 = vmatpush1.bf16.msra.mxu0 0
      %775 = vmatprep.subr.bf16.mxu0 0
      %776 = vmatpush1.bf16.msra.mxu0 0
      %777 = vmatprep.subr.bf16.mxu0 0
      %778 = vmatpush1.bf16.msra.mxu0 0
      %779 = vmatprep.subr.bf16.mxu0 0
      %780 = vmatpush1.bf16.msra.mxu0 0
      %781 = vmatprep.subr.bf16.mxu0 0
      %782 = vmatpush1.bf16.msra.mxu0 0
      %783 = vmatprep.subr.bf16.mxu0 0
      %784 = vmatpush1.bf16.msra.mxu0 0
      %785 = vmatprep.subr.bf16.mxu0 0
      %786 = vmatpush1.bf16.msra.mxu0 0
      %787 = vmatprep.subr.bf16.mxu0 0
      %788 = vmatpush1.bf16.msra.mxu0 0
      %789 = vmatprep.mubr.bf16.mxu0 0
      %790 = vmatmul.mubr.bf16.gmra.mrb[0].mxu0 %v746
      %v791 = vpop.f32.mrb[0].mxu0
      %v792 = vadd.f32 0.0, %v791
      %v793 = vpop.f32.mrb[0].mxu0
      %v794 = vadd.f32 0.0, %v793
      %v795 = vpop.f32.mrb[0].mxu0
      %v796 = vpop.f32.mrb[0].mxu0
      %797 = vdwg.mxu0
      %798 = vmatprep.subr.bf16.mxu0 0
      %799 = vmatpush1.bf16.msra.mxu0 %v755
      %800 = vmatprep.subr.bf16.mxu0 0
      %801 = vmatpush1.bf16.msra.mxu0 0
      %802 = vmatprep.subr.bf16.mxu0 0
      %803 = vmatpush1.bf16.msra.mxu0 0
      %804 = vmatprep.subr.bf16.mxu0 0
      %805 = vmatpush1.bf16.msra.mxu0 0
      %806 = vmatprep.subr.bf16.mxu0 0
      %807 = vmatpush1.bf16.msra.mxu0 0
      %808 = vmatprep.subr.bf16.mxu0 0
      %809 = vmatpush1.bf16.msra.mxu0 0
      %810 = vmatprep.subr.bf16.mxu0 0
      %811 = vmatpush1.bf16.msra.mxu0 0
      %812 = vmatprep.subr.bf16.mxu0 0
      %813 = vmatpush1.bf16.msra.mxu0 0
      %814 = vmatprep.subr.bf16.mxu0 0
      %815 = vmatpush1.bf16.msra.mxu0 0
      %816 = vmatprep.subr.bf16.mxu0 0
      %817 = vmatpush1.bf16.msra.mxu0 0
      %818 = vmatprep.subr.bf16.mxu0 0
      %819 = vmatpush1.bf16.msra.mxu0 0
      %820 = vmatprep.subr.bf16.mxu0 0
      %821 = vmatpush1.bf16.msra.mxu0 0
      %822 = vmatprep.subr.bf16.mxu0 0
      %823 = vmatpush1.bf16.msra.mxu0 0
      %824 = vmatprep.subr.bf16.mxu0 0
      %825 = vmatpush1.bf16.msra.mxu0 0
      %826 = vmatprep.subr.bf16.mxu0 0
      %827 = vmatpush1.bf16.msra.mxu0 0
      %828 = vmatprep.subr.bf16.mxu0 0
      %829 = vmatpush1.bf16.msra.mxu0 0
      %830 = vmatprep.mubr.bf16.mxu0 0
      %831 = vmatmul.mubr.bf16.gmra.mrb[0].mxu0 %v746
      %v832 = vpop.f32.mrb[0].mxu0
      %v833 = vadd.f32 0.0, %v832
      %v834 = vpop.f32.mrb[0].mxu0
      %v835 = vpop.f32.mrb[0].mxu0
      %v836 = vpop.f32.mrb[0].mxu0
      %837 = vdwg.mxu0
      %v838 = vadd.f32 %v711, %v792
      %v839 = vadd.f32 %v712, %v794
      %v840 = vadd.f32 %v713, %v833
      %v841 = vld [vmem:[%s199] sm:$0xff]
      %v843 = vcombine.high %v841, %v841
      %v845 = vunpack.c.l.s4 1983009808
      %v846 = vunpack.c.0.s8 %v845
      %v847 = vlaneseq
      %v848 = vshrl.u32 %v847, 7
      %v849 = vsub.s32 %v846, %v848
      %v850 = vrot.slane %v841, %v849
      %v852 = vunpack.c.l.s4 1983009808
      %v853 = vunpack.c.0.s8 %v852
      %v854 = vlaneseq
      %v855 = vshrl.u32 %v854, 7
      %v856 = vsub.s32 %v853, %v855
      %v857 = vrot.slane %v843, %v856
      %v858 = vcombine.high %v850, %v850
      %v859 = vcombine.high %v857, %v857
      %860 = vrot.lane.b32.xlu0 %v850, 108
      %v861 = vpop.permute.xlu0 %860
      %862 = vrot.lane.b32.xlu0 %v858, 108
      %v863 = vpop.permute.xlu0 %862
      %864 = vrot.lane.b32.xlu0 %v857, 108
      %v865 = vpop.permute.xlu0 %864
      %866 = vrot.lane.b32.xlu0 %v859, 108
      %v867 = vpop.permute.xlu0 %866
      %vm868 = vcmask 883712
      %v869 = vsel %vm868, %v861, %v863
      %v870 = vsel %vm868, %v863, %v865
      %v871 = vsel %vm868, %v865, %v867
      %v873 = vsel %vm255, %v219, 0
      %v876 = vsel %vm259, %v869, 0
      %v879 = vsel %vm259, %v870, 0
      %v882 = vsel %vm259, %v871, 0
      %884 = vmatprep.subr.bf16.mxu0 %v879
      %885 = vmatpush1.bf16.msra.mxu0 %v876
      %886 = vmatprep.subr.bf16.mxu0 0
      %887 = vmatpush1.bf16.msra.mxu0 0
      %888 = vmatprep.subr.bf16.mxu0 0
      %889 = vmatpush1.bf16.msra.mxu0 0
      %890 = vmatprep.subr.bf16.mxu0 0
      %891 = vmatpush1.bf16.msra.mxu0 0
      %892 = vmatprep.subr.bf16.mxu0 0
      %893 = vmatpush1.bf16.msra.mxu0 0
      %894 = vmatprep.subr.bf16.mxu0 0
      %895 = vmatpush1.bf16.msra.mxu0 0
      %896 = vmatprep.subr.bf16.mxu0 0
      %897 = vmatpush1.bf16.msra.mxu0 0
      %898 = vmatprep.subr.bf16.mxu0 0
      %899 = vmatpush1.bf16.msra.mxu0 0
      %900 = vmatprep.subr.bf16.mxu0 0
      %901 = vmatpush1.bf16.msra.mxu0 0
      %902 = vmatprep.subr.bf16.mxu0 0
      %903 = vmatpush1.bf16.msra.mxu0 0
      %904 = vmatprep.subr.bf16.mxu0 0
      %905 = vmatpush1.bf16.msra.mxu0 0
      %906 = vmatprep.subr.bf16.mxu0 0
      %907 = vmatpush1.bf16.msra.mxu0 0
      %908 = vmatprep.subr.bf16.mxu0 0
      %909 = vmatpush1.bf16.msra.mxu0 0
      %910 = vmatprep.subr.bf16.mxu0 0
      %911 = vmatpush1.bf16.msra.mxu0 0
      %912 = vmatprep.subr.bf16.mxu0 0
      %913 = vmatpush1.bf16.msra.mxu0 0
      %914 = vmatprep.subr.bf16.mxu0 0
      %915 = vmatpush1.bf16.msra.mxu0 0
      %916 = vmatprep.mubr.bf16.mxu0 0
      %917 = vmatmul.mubr.bf16.gmra.mrb[0].mxu0 %v873
      %v918 = vpop.f32.mrb[0].mxu0
      %v919 = vadd.f32 0.0, %v918
      %v920 = vpop.f32.mrb[0].mxu0
      %v921 = vadd.f32 0.0, %v920
      %v922 = vpop.f32.mrb[0].mxu0
      %v923 = vpop.f32.mrb[0].mxu0
      %924 = vdwg.mxu0
      %925 = vmatprep.subr.bf16.mxu0 0
      %926 = vmatpush1.bf16.msra.mxu0 %v882
      %927 = vmatprep.subr.bf16.mxu0 0
      %928 = vmatpush1.bf16.msra.mxu0 0
      %929 = vmatprep.subr.bf16.mxu0 0
      %930 = vmatpush1.bf16.msra.mxu0 0
      %931 = vmatprep.subr.bf16.mxu0 0
      %932 = vmatpush1.bf16.msra.mxu0 0
      %933 = vmatprep.subr.bf16.mxu0 0
      %934 = vmatpush1.bf16.msra.mxu0 0
      %935 = vmatprep.subr.bf16.mxu0 0
      %936 = vmatpush1.bf16.msra.mxu0 0
      %937 = vmatprep.subr.bf16.mxu0 0
      %938 = vmatpush1.bf16.msra.mxu0 0
      %939 = vmatprep.subr.bf16.mxu0 0
      %940 = vmatpush1.bf16.msra.mxu0 0
      %941 = vmatprep.subr.bf16.mxu0 0
      %942 = vmatpush1.bf16.msra.mxu0 0
      %943 = vmatprep.subr.bf16.mxu0 0
      %944 = vmatpush1.bf16.msra.mxu0 0
      %945 = vmatprep.subr.bf16.mxu0 0
      %946 = vmatpush1.bf16.msra.mxu0 0
      %947 = vmatprep.subr.bf16.mxu0 0
      %948 = vmatpush1.bf16.msra.mxu0 0
      %949 = vmatprep.subr.bf16.mxu0 0
      %950 = vmatpush1.bf16.msra.mxu0 0
      %951 = vmatprep.subr.bf16.mxu0 0
      %952 = vmatpush1.bf16.msra.mxu0 0
      %953 = vmatprep.subr.bf16.mxu0 0
      %954 = vmatpush1.bf16.msra.mxu0 0
      %955 = vmatprep.subr.bf16.mxu0 0
      %956 = vmatpush1.bf16.msra.mxu0 0
      %957 = vmatprep.mubr.bf16.mxu0 0
      %958 = vmatmul.mubr.bf16.gmra.mrb[0].mxu0 %v873
      %v959 = vpop.f32.mrb[0].mxu0
      %v960 = vadd.f32 0.0, %v959
      %v961 = vpop.f32.mrb[0].mxu0
      %v962 = vpop.f32.mrb[0].mxu0
      %v963 = vpop.f32.mrb[0].mxu0
      %964 = vdwg.mxu0
      %v965 = vadd.f32 %v838, %v919
      %v966 = vadd.f32 %v839, %v921
      %v967 = vadd.f32 %v840, %v960
      %v968 = vld [vmem:[%s199] sm:$0xff]
      %v970 = vcombine.high %v968, %v968
      %v972 = vunpack.c.l.s4 1983009808
      %v973 = vunpack.c.0.s8 %v972
      %v974 = vlaneseq
      %v975 = vshrl.u32 %v974, 7
      %v976 = vsub.s32 %v973, %v975
      %v977 = vrot.slane %v968, %v976
      %v979 = vunpack.c.l.s4 1983009808
      %v980 = vunpack.c.0.s8 %v979
      %v981 = vlaneseq
      %v982 = vshrl.u32 %v981, 7
      %v983 = vsub.s32 %v980, %v982
      %v984 = vrot.slane %v970, %v983
      %v985 = vcombine.high %v977, %v977
      %v986 = vcombine.high %v984, %v984
      %987 = vrot.lane.b32.xlu0 %v977, 92
      %v988 = vpop.permute.xlu0 %987
      %989 = vrot.lane.b32.xlu0 %v985, 92
      %v990 = vpop.permute.xlu0 %989
      %991 = vrot.lane.b32.xlu0 %v984, 92
      %v992 = vpop.permute.xlu0 %991
      %993 = vrot.lane.b32.xlu0 %v986, 92
      %v994 = vpop.permute.xlu0 %993
      %vm995 = vcmask 752640
      %v996 = vsel %vm995, %v988, %v990
      %v997 = vsel %vm995, %v990, %v992
      %v998 = vsel %vm995, %v992, %v994
      %v1000 = vsel %vm255, %v220, 0
      %v1003 = vsel %vm259, %v996, 0
      %v1006 = vsel %vm259, %v997, 0
      %v1009 = vsel %vm259, %v998, 0
      %1011 = vmatprep.subr.bf16.mxu0 %v1006
      %1012 = vmatpush1.bf16.msra.mxu0 %v1003
      %1013 = vmatprep.subr.bf16.mxu0 0
      %1014 = vmatpush1.bf16.msra.mxu0 0
      %1015 = vmatprep.subr.bf16.mxu0 0
      %1016 = vmatpush1.bf16.msra.mxu0 0
      %1017 = vmatprep.subr.bf16.mxu0 0
      %1018 = vmatpush1.bf16.msra.mxu0 0
      %1019 = vmatprep.subr.bf16.mxu0 0
      %1020 = vmatpush1.bf16.msra.mxu0 0
      %1021 = vmatprep.subr.bf16.mxu0 0
      %1022 = vmatpush1.bf16.msra.mxu0 0
      %1023 = vmatprep.subr.bf16.mxu0 0
      %1024 = vmatpush1.bf16.msra.mxu0 0
      %1025 = vmatprep.subr.bf16.mxu0 0
      %1026 = vmatpush1.bf16.msra.mxu0 0
      %1027 = vmatprep.subr.bf16.mxu0 0
      %1028 = vmatpush1.bf16.msra.mxu0 0
      %1029 = vmatprep.subr.bf16.mxu0 0
      %1030 = vmatpush1.bf16.msra.mxu0 0
      %1031 = vmatprep.subr.bf16.mxu0 0
      %1032 = vmatpush1.bf16.msra.mxu0 0
      %1033 = vmatprep.subr.bf16.mxu0 0
      %1034 = vmatpush1.bf16.msra.mxu0 0
      %1035 = vmatprep.subr.bf16.mxu0 0
      %1036 = vmatpush1.bf16.msra.mxu0 0
      %1037 = vmatprep.subr.bf16.mxu0 0
      %1038 = vmatpush1.bf16.msra.mxu0 0
      %1039 = vmatprep.subr.bf16.mxu0 0
      %1040 = vmatpush1.bf16.msra.mxu0 0
      %1041 = vmatprep.subr.bf16.mxu0 0
      %1042 = vmatpush1.bf16.msra.mxu0 0
      %1043 = vmatprep.mubr.bf16.mxu0 0
      %1044 = vmatmul.mubr.bf16.gmra.mrb[0].mxu0 %v1000
      %v1045 = vpop.f32.mrb[0].mxu0
      %v1046 = vadd.f32 0.0, %v1045
      %v1047 = vpop.f32.mrb[0].mxu0
      %v1048 = vadd.f32 0.0, %v1047
      %v1049 = vpop.f32.mrb[0].mxu0
      %v1050 = vpop.f32.mrb[0].mxu0
      %1051 = vdwg.mxu0
      %1052 = vmatprep.subr.bf16.mxu0 0
      %1053 = vmatpush1.bf16.msra.mxu0 %v1009
      %1054 = vmatprep.subr.bf16.mxu0 0
      %1055 = vmatpush1.bf16.msra.mxu0 0
      %1056 = vmatprep.subr.bf16.mxu0 0
      %1057 = vmatpush1.bf16.msra.mxu0 0
      %1058 = vmatprep.subr.bf16.mxu0 0
      %1059 = vmatpush1.bf16.msra.mxu0 0
      %1060 = vmatprep.subr.bf16.mxu0 0
      %1061 = vmatpush1.bf16.msra.mxu0 0
      %1062 = vmatprep.subr.bf16.mxu0 0
      %1063 = vmatpush1.bf16.msra.mxu0 0
      %1064 = vmatprep.subr.bf16.mxu0 0
      %1065 = vmatpush1.bf16.msra.mxu0 0
      %1066 = vmatprep.subr.bf16.mxu0 0
      %1067 = vmatpush1.bf16.msra.mxu0 0
      %1068 = vmatprep.subr.bf16.mxu0 0
      %1069 = vmatpush1.bf16.msra.mxu0 0
      %1070 = vmatprep.subr.bf16.mxu0 0
      %1071 = vmatpush1.bf16.msra.mxu0 0
      %1072 = vmatprep.subr.bf16.mxu0 0
      %1073 = vmatpush1.bf16.msra.mxu0 0
      %1074 = vmatprep.subr.bf16.mxu0 0
      %1075 = vmatpush1.bf16.msra.mxu0 0
      %1076 = vmatprep.subr.bf16.mxu0 0
      %1077 = vmatpush1.bf16.msra.mxu0 0
      %1078 = vmatprep.subr.bf16.mxu0 0
      %1079 = vmatpush1.bf16.msra.mxu0 0
      %1080 = vmatprep.subr.bf16.mxu0 0
      %1081 = vmatpush1.bf16.msra.mxu0 0
      %1082 = vmatprep.subr.bf16.mxu0 0
      %1083 = vmatpush1.bf16.msra.mxu0 0
      %1084 = vmatprep.mubr.bf16.mxu0 0
      %1085 = vmatmul.mubr.bf16.gmra.mrb[0].mxu0 %v1000
      %v1086 = vpop.f32.mrb[0].mxu0
      %v1087 = vadd.f32 0.0, %v1086
      %v1088 = vpop.f32.mrb[0].mxu0
      %v1089 = vpop.f32.mrb[0].mxu0
      %v1090 = vpop.f32.mrb[0].mxu0
      %1091 = vdwg.mxu0
      %v1092 = vadd.f32 %v965, %v1046
      %v1093 = vadd.f32 %v966, %v1048
      %v1094 = vadd.f32 %v967, %v1087
      %v1095 = vld [vmem:[%s199] sm:$0xff]
      %v1097 = vcombine.high %v1095, %v1095
      %v1099 = vunpack.c.l.s4 1983009808
      %v1100 = vunpack.c.0.s8 %v1099
      %v1101 = vlaneseq
      %v1102 = vshrl.u32 %v1101, 7
      %v1103 = vsub.s32 %v1100, %v1102
      %v1104 = vrot.slane %v1095, %v1103
      %v1106 = vunpack.c.l.s4 1983009808
      %v1107 = vunpack.c.0.s8 %v1106
      %v1108 = vlaneseq
      %v1109 = vshrl.u32 %v1108, 7
      %v1110 = vsub.s32 %v1107, %v1109
      %v1111 = vrot.slane %v1097, %v1110
      %v1112 = vcombine.high %v1104, %v1104
      %v1113 = vcombine.high %v1111, %v1111
      %1114 = vrot.lane.b32.xlu0 %v1104, 91
      %v1115 = vpop.permute.xlu0 %1114
      %1116 = vrot.lane.b32.xlu0 %v1112, 91
      %v1117 = vpop.permute.xlu0 %1116
      %1118 = vrot.lane.b32.xlu0 %v1111, 91
      %v1119 = vpop.permute.xlu0 %1118
      %1120 = vrot.lane.b32.xlu0 %v1113, 91
      %v1121 = vpop.permute.xlu0 %1120
      %vm1122 = vcmask 744448
      %v1123 = vsel %vm1122, %v1115, %v1117
      %v1124 = vsel %vm1122, %v1117, %v1119
      %v1125 = vsel %vm1122, %v1119, %v1121
      %v1127 = vsel %vm255, %v221, 0
      %v1130 = vsel %vm259, %v1123, 0
      %v1133 = vsel %vm259, %v1124, 0
      %v1136 = vsel %vm259, %v1125, 0
      %1138 = vmatprep.subr.bf16.mxu0 %v1133
      %1139 = vmatpush1.bf16.msra.mxu0 %v1130
      %1140 = vmatprep.subr.bf16.mxu0 0
      %1141 = vmatpush1.bf16.msra.mxu0 0
      %1142 = vmatprep.subr.bf16.mxu0 0
      %1143 = vmatpush1.bf16.msra.mxu0 0
      %1144 = vmatprep.subr.bf16.mxu0 0
      %1145 = vmatpush1.bf16.msra.mxu0 0
      %1146 = vmatprep.subr.bf16.mxu0 0
      %1147 = vmatpush1.bf16.msra.mxu0 0
      %1148 = vmatprep.subr.bf16.mxu0 0
      %1149 = vmatpush1.bf16.msra.mxu0 0
      %1150 = vmatprep.subr.bf16.mxu0 0
      %1151 = vmatpush1.bf16.msra.mxu0 0
      %1152 = vmatprep.subr.bf16.mxu0 0
      %1153 = vmatpush1.bf16.msra.mxu0 0
      %1154 = vmatprep.subr.bf16.mxu0 0
      %1155 = vmatpush1.bf16.msra.mxu0 0
      %1156 = vmatprep.subr.bf16.mxu0 0
      %1157 = vmatpush1.bf16.msra.mxu0 0
      %1158 = vmatprep.subr.bf16.mxu0 0
      %1159 = vmatpush1.bf16.msra.mxu0 0
      %1160 = vmatprep.subr.bf16.mxu0 0
      %1161 = vmatpush1.bf16.msra.mxu0 0
      %1162 = vmatprep.subr.bf16.mxu0 0
      %1163 = vmatpush1.bf16.msra.mxu0 0
      %1164 = vmatprep.subr.bf16.mxu0 0
      %1165 = vmatpush1.bf16.msra.mxu0 0
      %1166 = vmatprep.subr.bf16.mxu0 0
      %1167 = vmatpush1.bf16.msra.mxu0 0
      %1168 = vmatprep.subr.bf16.mxu0 0
      %1169 = vmatpush1.bf16.msra.mxu0 0
      %1170 = vmatprep.mubr.bf16.mxu0 0
      %1171 = vmatmul.mubr.bf16.gmra.mrb[0].mxu0 %v1127
      %v1172 = vpop.f32.mrb[0].mxu0
      %v1173 = vadd.f32 0.0, %v1172
      %v1174 = vpop.f32.mrb[0].mxu0
      %v1175 = vadd.f32 0.0, %v1174
      %v1176 = vpop.f32.mrb[0].mxu0
      %v1177 = vpop.f32.mrb[0].mxu0
      %1178 = vdwg.mxu0
      %1179 = vmatprep.subr.bf16.mxu0 0
      %1180 = vmatpush1.bf16.msra.mxu0 %v1136
      %1181 = vmatprep.subr.bf16.mxu0 0
      %1182 = vmatpush1.bf16.msra.mxu0 0
      %1183 = vmatprep.subr.bf16.mxu0 0
      %1184 = vmatpush1.bf16.msra.mxu0 0
      %1185 = vmatprep.subr.bf16.mxu0 0
      %1186 = vmatpush1.bf16.msra.mxu0 0
      %1187 = vmatprep.subr.bf16.mxu0 0
      %1188 = vmatpush1.bf16.msra.mxu0 0
      %1189 = vmatprep.subr.bf16.mxu0 0
      %1190 = vmatpush1.bf16.msra.mxu0 0
      %1191 = vmatprep.subr.bf16.mxu0 0
      %1192 = vmatpush1.bf16.msra.mxu0 0
      %1193 = vmatprep.subr.bf16.mxu0 0
      %1194 = vmatpush1.bf16.msra.mxu0 0
      %1195 = vmatprep.subr.bf16.mxu0 0
      %1196 = vmatpush1.bf16.msra.mxu0 0
      %1197 = vmatprep.subr.bf16.mxu0 0
      %1198 = vmatpush1.bf16.msra.mxu0 0
      %1199 = vmatprep.subr.bf16.mxu0 0
      %1200 = vmatpush1.bf16.msra.mxu0 0
      %1201 = vmatprep.subr.bf16.mxu0 0
      %1202 = vmatpush1.bf16.msra.mxu0 0
      %1203 = vmatprep.subr.bf16.mxu0 0
      %1204 = vmatpush1.bf16.msra.mxu0 0
      %1205 = vmatprep.subr.bf16.mxu0 0
      %1206 = vmatpush1.bf16.msra.mxu0 0
      %1207 = vmatprep.subr.bf16.mxu0 0
      %1208 = vmatpush1.bf16.msra.mxu0 0
      %1209 = vmatprep.subr.bf16.mxu0 0
      %1210 = vmatpush1.bf16.msra.mxu0 0
      %1211 = vmatprep.mubr.bf16.mxu0 0
      %1212 = vmatmul.mubr.bf16.gmra.mrb[0].mxu0 %v1127
      %v1213 = vpop.f32.mrb[0].mxu0
      %v1214 = vadd.f32 0.0, %v1213
      %v1215 = vpop.f32.mrb[0].mxu0
      %v1216 = vpop.f32.mrb[0].mxu0
      %v1217 = vpop.f32.mrb[0].mxu0
      %1218 = vdwg.mxu0
      %v1219 = vadd.f32 %v1092, %v1173
      %v1220 = vadd.f32 %v1093, %v1175
      %v1221 = vadd.f32 %v1094, %v1214
      %v1222 = vld [vmem:[%s199] sm:$0xff]
      %v1224 = vcombine.high %v1222, %v1222
      %v1226 = vunpack.c.l.s4 1983009808
      %v1227 = vunpack.c.0.s8 %v1226
      %v1228 = vlaneseq
      %v1229 = vshrl.u32 %v1228, 7
      %v1230 = vsub.s32 %v1227, %v1229
      %v1231 = vrot.slane %v1222, %v1230
      %v1233 = vunpack.c.l.s4 1983009808
      %v1234 = vunpack.c.0.s8 %v1233
      %v1235 = vlaneseq
      %v1236 = vshrl.u32 %v1235, 7
      %v1237 = vsub.s32 %v1234, %v1236
      %v1238 = vrot.slane %v1224, %v1237
      %v1239 = vcombine.high %v1231, %v1231
      %v1240 = vcombine.high %v1238, %v1238
      %1241 = vrot.lane.b32.xlu0 %v1231, 90
      %v1242 = vpop.permute.xlu0 %1241
      %1243 = vrot.lane.b32.xlu0 %v1239, 90
      %v1244 = vpop.permute.xlu0 %1243
      %1245 = vrot.lane.b32.xlu0 %v1238, 90
      %v1246 = vpop.permute.xlu0 %1245
      %1247 = vrot.lane.b32.xlu0 %v1240, 90
      %v1248 = vpop.permute.xlu0 %1247
      %vm1249 = vcmask 736256
      %v1250 = vsel %vm1249, %v1242, %v1244
      %v1251 = vsel %vm1249, %v1244, %v1246
      %v1252 = vsel %vm1249, %v1246, %v1248
      %v1254 = vsel %vm255, %v222, 0
      %v1257 = vsel %vm259, %v1250, 0
      %v1260 = vsel %vm259, %v1251, 0
      %v1263 = vsel %vm259, %v1252, 0
      %1265 = vmatprep.subr.bf16.mxu0 %v1260
      %1266 = vmatpush1.bf16.msra.mxu0 %v1257
      %1267 = vmatprep.subr.bf16.mxu0 0
      %1268 = vmatpush1.bf16.msra.mxu0 0
      %1269 = vmatprep.subr.bf16.mxu0 0
      %1270 = vmatpush1.bf16.msra.mxu0 0
      %1271 = vmatprep.subr.bf16.mxu0 0
      %1272 = vmatpush1.bf16.msra.mxu0 0
      %1273 = vmatprep.subr.bf16.mxu0 0
      %1274 = vmatpush1.bf16.msra.mxu0 0
      %1275 = vmatprep.subr.bf16.mxu0 0
      %1276 = vmatpush1.bf16.msra.mxu0 0
      %1277 = vmatprep.subr.bf16.mxu0 0
      %1278 = vmatpush1.bf16.msra.mxu0 0
      %1279 = vmatprep.subr.bf16.mxu0 0
      %1280 = vmatpush1.bf16.msra.mxu0 0
      %1281 = vmatprep.subr.bf16.mxu0 0
      %1282 = vmatpush1.bf16.msra.mxu0 0
      %1283 = vmatprep.subr.bf16.mxu0 0
      %1284 = vmatpush1.bf16.msra.mxu0 0
      %1285 = vmatprep.subr.bf16.mxu0 0
      %1286 = vmatpush1.bf16.msra.mxu0 0
      %1287 = vmatprep.subr.bf16.mxu0 0
      %1288 = vmatpush1.bf16.msra.mxu0 0
      %1289 = vmatprep.subr.bf16.mxu0 0
      %1290 = vmatpush1.bf16.msra.mxu0 0
      %1291 = vmatprep.subr.bf16.mxu0 0
      %1292 = vmatpush1.bf16.msra.mxu0 0
      %1293 = vmatprep.subr.bf16.mxu0 0
      %1294 = vmatpush1.bf16.msra.mxu0 0
      %1295 = vmatprep.subr.bf16.mxu0 0
      %1296 = vmatpush1.bf16.msra.mxu0 0
      %1297 = vmatprep.mubr.bf16.mxu0 0
      %1298 = vmatmul.mubr.bf16.gmra.mrb[0].mxu0 %v1254
      %v1299 = vpop.f32.mrb[0].mxu0
      %v1300 = vadd.f32 0.0, %v1299
      %v1301 = vpop.f32.mrb[0].mxu0
      %v1302 = vadd.f32 0.0, %v1301
      %v1303 = vpop.f32.mrb[0].mxu0
      %v1304 = vpop.f32.mrb[0].mxu0
      %1305 = vdwg.mxu0
      %1306 = vmatprep.subr.bf16.mxu0 0
      %1307 = vmatpush1.bf16.msra.mxu0 %v1263
      %1308 = vmatprep.subr.bf16.mxu0 0
      %1309 = vmatpush1.bf16.msra.mxu0 0
      %1310 = vmatprep.subr.bf16.mxu0 0
      %1311 = vmatpush1.bf16.msra.mxu0 0
      %1312 = vmatprep.subr.bf16.mxu0 0
      %1313 = vmatpush1.bf16.msra.mxu0 0
      %1314 = vmatprep.subr.bf16.mxu0 0
      %1315 = vmatpush1.bf16.msra.mxu0 0
      %1316 = vmatprep.subr.bf16.mxu0 0
      %1317 = vmatpush1.bf16.msra.mxu0 0
      %1318 = vmatprep.subr.bf16.mxu0 0
      %1319 = vmatpush1.bf16.msra.mxu0 0
      %1320 = vmatprep.subr.bf16.mxu0 0
      %1321 = vmatpush1.bf16.msra.mxu0 0
      %1322 = vmatprep.subr.bf16.mxu0 0
      %1323 = vmatpush1.bf16.msra.mxu0 0
      %1324 = vmatprep.subr.bf16.mxu0 0
      %1325 = vmatpush1.bf16.msra.mxu0 0
      %1326 = vmatprep.subr.bf16.mxu0 0
      %1327 = vmatpush1.bf16.msra.mxu0 0
      %1328 = vmatprep.subr.bf16.mxu0 0
      %1329 = vmatpush1.bf16.msra.mxu0 0
      %1330 = vmatprep.subr.bf16.mxu0 0
      %1331 = vmatpush1.bf16.msra.mxu0 0
      %1332 = vmatprep.subr.bf16.mxu0 0
      %1333 = vmatpush1.bf16.msra.mxu0 0
      %1334 = vmatprep.subr.bf16.mxu0 0
      %1335 = vmatpush1.bf16.msra.mxu0 0
      %1336 = vmatprep.subr.bf16.mxu0 0
      %1337 = vmatpush1.bf16.msra.mxu0 0
      %1338 = vmatprep.mubr.bf16.mxu0 0
      %1339 = vmatmul.mubr.bf16.gmra.mrb[0].mxu0 %v1254
      %v1340 = vpop.f32.mrb[0].mxu0
      %v1341 = vadd.f32 0.0, %v1340
      %v1342 = vpop.f32.mrb[0].mxu0
      %v1343 = vpop.f32.mrb[0].mxu0
      %v1344 = vpop.f32.mrb[0].mxu0
      %1345 = vdwg.mxu0
      %v1346 = vadd.f32 %v1219, %v1300
      %v1347 = vadd.f32 %v1220, %v1302
      %v1348 = vadd.f32 %v1221, %v1341
      %v1349 = vld [vmem:[%s2] sm:$0xf]
      %v1351 = vlaneseq
      %v1352 = vshrl.u32 %v1351, 7
      %v1353 = vsub.s32 0, %v1352
      %v1354 = vrot.slane %v1349, %v1353
      %v1355 = vlaneseq
      %v1356 = vshrl.u32 %v1355, 7
      %v1357 = vsub.s32 1, %v1356
      %v1358 = vrot.slane %v1349, %v1357
      %v1359 = vlaneseq
      %v1360 = vshrl.u32 %v1359, 7
      %v1361 = vsub.s32 2, %v1360
      %v1362 = vrot.slane %v1349, %v1361
      %v1363 = vlaneseq
      %v1364 = vshrl.u32 %v1363, 7
      %v1365 = vsub.s32 3, %v1364
      %v1366 = vrot.slane %v1349, %v1365
      %1367 = vrot.lane.b32.xlu0 %v1354, 109
      %v1368 = vpop.permute.xlu0 %1367
      %1369 = vrot.lane.b32.xlu0 %v1358, 109
      %v1370 = vpop.permute.xlu0 %1369
      %1371 = vrot.lane.b32.xlu0 %v1362, 109
      %v1372 = vpop.permute.xlu0 %1371
      %1373 = vrot.lane.b32.xlu0 %v1366, 109
      %v1374 = vpop.permute.xlu0 %1373
      %vm1375 = vcmask 891904
      %v1376 = vsel %vm1375, %v1368, %v1370
      %v1377 = vsel %vm1375, %v1370, %v1372
      %v1378 = vsel %vm1375, %v1372, %v1374
      %v1382 = vmul.f32 %v1346, %v1376
      %v1383 = vmul.f32 %v1347, %v1377
      %v1384 = vmul.f32 %v1348, %v1378
      %vm1385 = vcmask 1043456
      %v1386 = vsel %vm1385, %v1382, 0.0
      %v1387 = vsel %vm1385, %v1383, 0.0
      %v1388 = vadd.f32 %v1386, %v1387
      %v1389 = vsel %vm1385, %v1384, 0.0
      %v1390 = vadd.f32 %v1388, %v1389
      %1391 = vadd.xlane.f32.xlu0 %v1390
      %v1392 = vpop.xlane.xlu0 %1391
      %v1393 = vadd.f32 %v1392, 0.0
      %v1394 = vmul.f32 %v1382, %v1346
      %v1395 = vmul.f32 %v1383, %v1347
      %v1396 = vmul.f32 %v1384, %v1348
      %v1397 = vsel %vm1385, %v1394, 0.0
      %v1398 = vsel %vm1385, %v1395, 0.0
      %v1399 = vadd.f32 %v1397, %v1398
      %v1400 = vsel %vm1385, %v1396, 0.0
      %v1401 = vadd.f32 %v1399, %v1400
      %1402 = vadd.xlane.f32.xlu0 %v1401
      %v1403 = vpop.xlane.xlu0 %1402
      %v1404 = vadd.f32 %v1403, 0.0
      %v1405 = vpack.c.bf16 %v1346, %v1346
      %v1406 = vpack.c.bf16 %v1347, %v1347
      %v1407 = vpack.c.bf16 %v1348, %v1348
      %v1411 = vcombine.low %v1405, %v1406
      %v1413 = vunpack.c.l.s4 1983009808
      %v1414 = vunpack.c.0.s8 %v1413
      %v1415 = vlaneseq
      %v1416 = vshrl.u32 %v1415, 7
      %v1417 = vsub.s32 %v1414, %v1416
      %v1418 = vrot.slane %v1411, %v1417
      %v1420 = vunpack.c.l.s4 1983009808
      %v1421 = vunpack.c.0.s8 %v1420
      %v1422 = vlaneseq
      %v1423 = vshrl.u32 %v1422, 7
      %v1424 = vsub.s32 %v1421, %v1423
      %v1425 = vrot.slane %v1407, %v1424
      %v1426 = vcombine.low %v1418, %v1425
      %1427 = vrot.lane.b32.xlu0 %v1426, 19
      %v1428 = vpop.permute.xlu0 %1427
      %v1429 = vrot.slane %v1428, 6
      %vm1430 = vcmask 154624
      %v1431 = vsel %vm1430, %v1429, %v1428
      %vm1433 = vcmask 1043458
      %vm1434 = vmor %vm1433, %vm212
      %vm1435 = vcmask 1045508
      %vm1436 = vmor %vm1435, %vm1434
      %vm1437 = vcmask 154630
      %vm1438 = vmor %vm1437, %vm1436
      %1439 = vst.msk [vmem:[%s204] sm:$0xff] %vm1438, %v1431
      %vm1440 = vcmask 7168
      %v1441 = vsel %vm1440, %v1393, %v1404
      %vm1442 = vcmask 11264
      %1443 = vst.msk [vmem:[%s208] sm:$0xf] %vm1442, %v1441
      %p1444 = scmp.lt.s32.totalorder %s16, 1
      %s1445 = scalar_select %p1444, %s16, 1
      %s1446 = smul.addr %s1445, 4
      %s1447 = smul.addr %s1446, 2
      %s1448 = scalar_lea.vmem %s3, %s1447
      %p1449 = scmp.lt.s32.totalorder %s16, 1
      %s1450 = scalar_select %p1449, %s16, 1
      %s1451 = smul.addr %s1450, 4
      %s1452 = scalar_lea.vmem %s4, %s1451
      // Predicated region
      $region33: #{_lambda_.3} parent=31 // pred_check
        %p1453 = pneg %p102
      $region34: #{_lambda_.3} parent=31 // pred_check_branch
        %1455 = sbr.rel (%p1453) target = $region36
      $region35: #{_lambda_.3} parent=31 // pred_region
        _
      $region36: #{_lambda_.3} parent=31 // pred_fallthru
        _
      // Predicated region
      $region37: #{_lambda_.3} parent=31 // pred_check
        %p1456 = pneg %p128
      $region38: #{_lambda_.3} parent=31 // pred_check_branch
        %1458 = sbr.rel (%p1456) target = $region40
      $region39: #{_lambda_.3} parent=31 // pred_region
        _
      $region40: #{_lambda_.3} parent=31 // pred_fallthru
        _
    $region32: #{_lambda_.3} parent=5 // pred_fallthru
      _
    %p1459 = scmp.le.s32.totalorder 2, %s11
    // Predicated region
    $region41: #{_lambda_.3} parent=5 // pred_check
      %p1460 = pneg %p1459
    $region42: #{_lambda_.3} parent=5 // pred_check_branch
      %1462 = sbr.rel (%p1460) target = $region44
    $region43: #{_lambda_.3} parent=5 // pred_region
      %s1463 = ssub.s32 %s11, 2
      // Predicated region
      $region45: #{_lambda_.3} parent=43 // pred_check
        %p1464 = pneg %p108
      $region46: #{_lambda_.3} parent=43 // pred_check_branch
        %1466 = sbr.rel (%p1464) target = $region48
      $region47: #{_lambda_.3} parent=43 // pred_region
        %p1467 = scmp.lt.s32.totalorder %s17, 1
        %s1468 = scalar_select %p1467, %s17, 1
        %s1469 = smul.addr %s1468, 4
        %s1470 = smul.addr %s1469, 2
        %s1471 = scalar_lea.vmem %s3, %s1470
      $region48: #{_lambda_.3} parent=43 // pred_fallthru
        _
      // Predicated region
      $region49: #{_lambda_.3} parent=43 // pred_check
        %p1472 = pneg %p134
      $region50: #{_lambda_.3} parent=43 // pred_check_branch
        %1474 = sbr.rel (%p1472) target = $region52
      $region51: #{_lambda_.3} parent=43 // pred_region
        %p1475 = scmp.lt.s32.totalorder %s17, 1
        %s1476 = scalar_select %p1475, %s17, 1
        %s1477 = smul.addr %s1476, 4
        %s1478 = scalar_lea.vmem %s4, %s1477
      $region52: #{_lambda_.3} parent=43 // pred_fallthru
        _
    $region44: #{_lambda_.3} parent=5 // pred_fallthru
      _
  $region6: #{_lambda_.3} parent=0 // loop_footer
    %s15 = sadd.s32 1, %s11
  $region7: #{_lambda_.3} parent=0 // loop_footer_branch
    %10 = sbr.rel target = $region3
  $region8: #{_lambda_.3} parent=0 // loop_exit
    _

// kernel: _lambda_.4
$region0: #{_lambda_.4}
  #allocation0 [shape = 'u32[]', space=smem, size = 0x4, offset = 0x4, fixed_abs, tag = 'smem constant byte address 0x4 - core index']
  #allocation1 [shape = 'u32[144,128]{1,0:T(1,128)}', space=vmem, size = 0x12000, scoped, tag = 'internal scratch']
  #allocation2 [shape = 'bf16[4,512]{1,0:T(4,128)(2,1)}', space=vmem, size = 0x1000, scoped, tag = 'scratch operand']
  %s0 = inlined_call_operand.vmem [shape: bf16[2,4,512], index: 0, kind: input, shape index: {}]
  %s1 = inlined_call_operand.vmem [shape: bf16[9,4,4], index: 1, kind: input, shape index: {}]
  %s2 = inlined_call_operand.vmem [shape: f32[1,512], index: 2, kind: input, shape index: {}]
  %s3 = inlined_call_operand.vmem [shape: f32[4,1], index: 3, kind: input, shape index: {}]
  %s4 = inlined_call_operand.vmem [shape: f32[4,1], index: 4, kind: input, shape index: {}]
  %s5 = inlined_call_operand.vmem [shape: bf16[2,4,512], index: 5, kind: output, shape index: {0}]
  %s6 = inlined_call_operand.vmem [shape: f32[2,4,2], index: 6, kind: output, shape index: {1}]
  %7 = xla_tuple %s5, %s6
  %s8 = sld [smem:[#allocation0]]
  $region61: #{_lambda_.4} parent=0
    _
  %s10 = ssub.s32 1, %s8
  %s11 = scalar_select 0, %s10, %s8
  loop: start=0, step=1, limit=4
  $region2: #{_lambda_.4} parent=0 // loop_pre_header
    _
  $region3: #{_lambda_.4} parent=0 // loop_header
    %s13 = sphi 0, %s17
    %p14 = scmp.ge.s32.totalorder %s13, 4
    %s23 = sphi 0, %s25
    %s26 = sphi 0, %s23
    %s27 = sphi 0, %s26
    %s43 = sphi 0, %s27
    %s47 = sphi 0, %s47
    %s49 = sphi 0, %s47
    %s50 = sphi 0, %s49
    %s64 = sphi 0, %s50
    %s68 = sphi 0, %s68
    %s70 = sphi 0, %s68
    %s71 = sphi 0, %s70
    %s85 = sphi 0, %s71
    %s89 = sphi 0, %s89
    %s91 = sphi 0, %s89
    %s92 = sphi 0, %s91
    %s106 = sphi 0, %s92
    %s110 = sphi 0, %s110
    %s112 = sphi 0, %s110
    %s113 = sphi 0, %s112
    %s127 = sphi 0, %s113
    %s133 = sphi 0, %s135
    %s136 = sphi 0, %s133
    %s137 = sphi 0, %s136
    %s153 = sphi 0, %s137
    %s159 = sphi 0, %s161
    %s162 = sphi 0, %s159
    %s163 = sphi 0, %s162
    %s179 = sphi 0, %s163
  $region4: #{_lambda_.4} parent=0 // loop_header_branch
    %16 = sbr.rel (%p14) target = $region8
  $region5: #{_lambda_.4} parent=0 // loop_body
    %s18 = ssub.s32 %s13, 1
    %s19 = ssub.s32 %s13, 2
    %s20 = sadd.s32 %s13, 1
    %s21 = ssub.s32 %s13, %s20
    %p22 = scmp.eq.s32.totalorder %s21, 0
    %s24 = sadd.s32 %s23, 1
    %s25 = scalar_select %p22, %s23, %s24
    %p28 = pneg %p22
    %p29 = scmp.eq.s32.totalorder %s13, 1
    %p30 = por %p28, %p29
    %p31 = scmp.ne.s32.totalorder %s23, %s26
    %p32 = scmp.eq.s32.totalorder %s13, 0
    %p33 = por %p31, %p32
    %p34 = scmp.ne.s32.totalorder %s23, %s26
    %p35 = scmp.eq.s32.totalorder %s18, 1
    %p36 = por %p34, %p35
    %p37 = scmp.ne.s32.totalorder %s26, %s27
    %p38 = scmp.eq.s32.totalorder %s18, 0
    %p39 = por %p37, %p38
    %p40 = scmp.ne.s32.totalorder %s26, %s27
    %p41 = scmp.eq.s32.totalorder %s19, 1
    %p42 = por %p40, %p41
    %p44 = scmp.ne.s32.totalorder %s27, %s43
    %p45 = scmp.eq.s32.totalorder %s19, 0
    %p46 = por %p44, %p45
    %s48 = sadd.s32 %s47, 1
    %p51 = scmp.eq.s32.totalorder %s13, 1
    %p52 = scmp.ne.s32.totalorder %s47, %s49
    %p53 = scmp.eq.s32.totalorder %s13, 0
    %p54 = por %p52, %p53
    %p55 = scmp.ne.s32.totalorder %s47, %s49
    %p56 = scmp.eq.s32.totalorder %s18, 1
    %p57 = por %p55, %p56
    %p58 = scmp.ne.s32.totalorder %s49, %s50
    %p59 = scmp.eq.s32.totalorder %s18, 0
    %p60 = por %p58, %p59
    %p61 = scmp.ne.s32.totalorder %s49, %s50
    %p62 = scmp.eq.s32.totalorder %s19, 1
    %p63 = por %p61, %p62
    %p65 = scmp.ne.s32.totalorder %s50, %s64
    %p66 = scmp.eq.s32.totalorder %s19, 0
    %p67 = por %p65, %p66
    %s69 = sadd.s32 %s68, 1
    %p72 = scmp.eq.s32.totalorder %s13, 1
    %p73 = scmp.ne.s32.totalorder %s68, %s70
    %p74 = scmp.eq.s32.totalorder %s13, 0
    %p75 = por %p73, %p74
    %p76 = scmp.ne.s32.totalorder %s68, %s70
    %p77 = scmp.eq.s32.totalorder %s18, 1
    %p78 = por %p76, %p77
    %p79 = scmp.ne.s32.totalorder %s70, %s71
    %p80 = scmp.eq.s32.totalorder %s18, 0
    %p81 = por %p79, %p80
    %p82 = scmp.ne.s32.totalorder %s70, %s71
    %p83 = scmp.eq.s32.totalorder %s19, 1
    %p84 = por %p82, %p83
    %p86 = scmp.ne.s32.totalorder %s71, %s85
    %p87 = scmp.eq.s32.totalorder %s19, 0
    %p88 = por %p86, %p87
    %s90 = sadd.s32 %s89, 1
    %p93 = scmp.eq.s32.totalorder %s13, 1
    %p94 = scmp.ne.s32.totalorder %s89, %s91
    %p95 = scmp.eq.s32.totalorder %s13, 0
    %p96 = por %p94, %p95
    %p97 = scmp.ne.s32.totalorder %s89, %s91
    %p98 = scmp.eq.s32.totalorder %s18, 1
    %p99 = por %p97, %p98
    %p100 = scmp.ne.s32.totalorder %s91, %s92
    %p101 = scmp.eq.s32.totalorder %s18, 0
    %p102 = por %p100, %p101
    %p103 = scmp.ne.s32.totalorder %s91, %s92
    %p104 = scmp.eq.s32.totalorder %s19, 1
    %p105 = por %p103, %p104
    %p107 = scmp.ne.s32.totalorder %s92, %s106
    %p108 = scmp.eq.s32.totalorder %s19, 0
    %p109 = por %p107, %p108
    %s111 = sadd.s32 %s110, 1
    %p114 = scmp.eq.s32.totalorder %s13, 1
    %p115 = scmp.ne.s32.totalorder %s110, %s112
    %p116 = scmp.eq.s32.totalorder %s13, 0
    %p117 = por %p115, %p116
    %p118 = scmp.ne.s32.totalorder %s110, %s112
    %p119 = scmp.eq.s32.totalorder %s18, 1
    %p120 = por %p118, %p119
    %p121 = scmp.ne.s32.totalorder %s112, %s113
    %p122 = scmp.eq.s32.totalorder %s18, 0
    %p123 = por %p121, %p122
    %p124 = scmp.ne.s32.totalorder %s112, %s113
    %p125 = scmp.eq.s32.totalorder %s19, 1
    %p126 = por %p124, %p125
    %p128 = scmp.ne.s32.totalorder %s113, %s127
    %p129 = scmp.eq.s32.totalorder %s19, 0
    %p130 = por %p128, %p129
    %s131 = ssub.s32 %s13, %s20
    %p132 = scmp.eq.s32.totalorder %s131, 0
    %s134 = sadd.s32 %s133, 1
    %s135 = scalar_select %p132, %s133, %s134
    %p138 = pneg %p132
    %p139 = scmp.eq.s32.totalorder %s13, 1
    %p140 = por %p138, %p139
    %p141 = scmp.ne.s32.totalorder %s133, %s136
    %p142 = scmp.eq.s32.totalorder %s13, 0
    %p143 = por %p141, %p142
    %p144 = scmp.ne.s32.totalorder %s133, %s136
    %p145 = scmp.eq.s32.totalorder %s18, 1
    %p146 = por %p144, %p145
    %p147 = scmp.ne.s32.totalorder %s136, %s137
    %p148 = scmp.eq.s32.totalorder %s18, 0
    %p149 = por %p147, %p148
    %p150 = scmp.ne.s32.totalorder %s136, %s137
    %p151 = scmp.eq.s32.totalorder %s19, 1
    %p152 = por %p150, %p151
    %p154 = scmp.ne.s32.totalorder %s137, %s153
    %p155 = scmp.eq.s32.totalorder %s19, 0
    %p156 = por %p154, %p155
    %s157 = ssub.s32 %s13, %s20
    %p158 = scmp.eq.s32.totalorder %s157, 0
    %s160 = sadd.s32 %s159, 1
    %s161 = scalar_select %p158, %s159, %s160
    %p164 = pneg %p158
    %p165 = scmp.eq.s32.totalorder %s13, 1
    %p166 = por %p164, %p165
    %p167 = scmp.ne.s32.totalorder %s159, %s162
    %p168 = scmp.eq.s32.totalorder %s13, 0
    %p169 = por %p167, %p168
    %p170 = scmp.ne.s32.totalorder %s159, %s162
    %p171 = scmp.eq.s32.totalorder %s18, 1
    %p172 = por %p170, %p171
    %p173 = scmp.ne.s32.totalorder %s162, %s163
    %p174 = scmp.eq.s32.totalorder %s18, 0
    %p175 = por %p173, %p174
    %p176 = scmp.ne.s32.totalorder %s162, %s163
    %p177 = scmp.eq.s32.totalorder %s19, 1
    %p178 = por %p176, %p177
    %p180 = scmp.ne.s32.totalorder %s163, %s179
    %p181 = scmp.eq.s32.totalorder %s19, 0
    %p182 = por %p180, %p181
    %p183 = scmp.le.s32.totalorder 1, %s13
    %p184 = scmp.lt.s32.totalorder %s13, 3
    %p185 = pnand %p183, %p184
    %p186 = pneg %p185
    // Predicated region
    $region9: #{_lambda_.4} parent=5 // pred_check
      _
    $region10: #{_lambda_.4} parent=5 // pred_check_branch
      %188 = sbr.rel (%p185) target = $region12
    $region11: #{_lambda_.4} parent=5 // pred_region
      %s189 = ssub.s32 %s13, 1
      // Predicated region
      $region13: #{_lambda_.4} parent=11 // pred_check
        %p190 = pneg %p60
      $region14: #{_lambda_.4} parent=11 // pred_check_branch
        %192 = sbr.rel (%p190) target = $region16
      $region15: #{_lambda_.4} parent=11 // pred_region
        _
      $region16: #{_lambda_.4} parent=11 // pred_fallthru
        _
      // Predicated region
      $region17: #{_lambda_.4} parent=11 // pred_check
        %p193 = pneg %p81
      $region18: #{_lambda_.4} parent=11 // pred_check_branch
        %195 = sbr.rel (%p193) target = $region20
      $region19: #{_lambda_.4} parent=11 // pred_region
        _
      $region20: #{_lambda_.4} parent=11 // pred_fallthru
        _
      // Predicated region
      $region21: #{_lambda_.4} parent=11 // pred_check
        %p196 = pneg %p102
      $region22: #{_lambda_.4} parent=11 // pred_check_branch
        %198 = sbr.rel (%p196) target = $region24
      $region23: #{_lambda_.4} parent=11 // pred_region
        _
      $region24: #{_lambda_.4} parent=11 // pred_fallthru
        _
      // Predicated region
      $region25: #{_lambda_.4} parent=11 // pred_check
        %p199 = pneg %p123
      $region26: #{_lambda_.4} parent=11 // pred_check_branch
        %201 = sbr.rel (%p199) target = $region28
      $region27: #{_lambda_.4} parent=11 // pred_region
        _
      $region28: #{_lambda_.4} parent=11 // pred_fallthru
        _
    $region12: #{_lambda_.4} parent=5 // pred_fallthru
      _
    %p202 = scmp.lt.s32.totalorder %s13, 2
    // Predicated region
    $region29: #{_lambda_.4} parent=5 // pred_check
      %p203 = pneg %p202
    $region30: #{_lambda_.4} parent=5 // pred_check_branch
      %205 = sbr.rel (%p203) target = $region32
    $region31: #{_lambda_.4} parent=5 // pred_region
      // Predicated region
      $region33: #{_lambda_.4} parent=31 // pred_check
        %p206 = pneg %p33
      $region34: #{_lambda_.4} parent=31 // pred_check_branch
        %208 = sbr.rel (%p206) target = $region36
      $region35: #{_lambda_.4} parent=31 // pred_region
        %p209 = scmp.lt.s32.totalorder %s13, 1
        %s210 = scalar_select %p209, %s13, 1
        %s211 = smul.addr %s210, 4
        %s212 = smul.addr %s211, 2
        %s213 = scalar_lea.vmem %s0, %s212
      $region36: #{_lambda_.4} parent=31 // pred_fallthru
        _
    $region32: #{_lambda_.4} parent=5 // pred_fallthru
      _
    %p214 = scmp.le.s32.totalorder 1, %s13
    %p215 = scmp.lt.s32.totalorder %s13, 3
    %p216 = pnand %p214, %p215
    %p217 = pneg %p216
    // Predicated region
    $region37: #{_lambda_.4} parent=5 // pred_check
      _
    $region38: #{_lambda_.4} parent=5 // pred_check_branch
      %219 = sbr.rel (%p216) target = $region40
    $region39: #{_lambda_.4} parent=5 // pred_region
      %s220 = ssub.s32 %s13, 1
      %p221 = scmp.lt.s32.totalorder %s18, 1
      %s222 = scalar_select %p221, %s18, 1
      %s223 = smul.addr %s222, 4
      %s224 = smul.addr %s223, 2
      %s225 = scalar_lea.vmem %s0, %s224
      %p226 = pneg %p39
      %p227 = pneg %p36
      %p228 = pneg %p60
      %p229 = pneg %p57
      %p230 = pneg %p81
      %p231 = pneg %p78
      %p232 = pneg %p102
      %p233 = pneg %p99
      %p234 = pneg %p123
      %p235 = pneg %p120
      %p236 = pneg %p149
      %p237 = pneg %p146
      %p238 = scmp.lt.s32.totalorder %s18, 1
      %s239 = scalar_select %p238, %s18, 1
      %s240 = smul.addr %s239, 4
      %s241 = smul.addr %s240, 2
      %s242 = scalar_lea.vmem %s5, %s241
      %p243 = pneg %p175
      %p244 = pneg %p172
      %p245 = scmp.lt.s32.totalorder %s18, 1
      %s246 = scalar_select %p245, %s18, 1
      %s247 = smul.addr %s246, 4
      %s248 = scalar_lea.vmem %s6, %s247
      %p249 = scmp.lt.s32.totalorder %s18, 1
      %s250 = scalar_select %p249, %s18, 1
      %s251 = smul.addr %s250, 4
      %s252 = smul.addr %s251, 2
      %s253 = scalar_lea.vmem %s0, %s252
      %p254 = scmp.lt.s32.totalorder %s18, 1
      %s255 = scalar_select %p254, %s18, 1
      %s256 = smul.addr %s255, 4
      %s257 = smul.addr %s256, 2
      %s258 = scalar_lea.vmem %s5, %s257
      %p259 = scmp.lt.s32.totalorder %s18, 1
      %s260 = scalar_select %p259, %s18, 1
      %s261 = smul.addr %s260, 4
      %s262 = scalar_lea.vmem %s6, %s261
      %v264 = vld [vmem:[%s253] sm:$0xff]
      %v265 = vunpack.c.l.bf16 %v264
      %v266 = vunpack.c.h.bf16 %v264
      %v267 = vld [vmem:[%s3] sm:$0xf]
      %269 = vset.pattern.permute.xlu0 0
      %270 = vperm.xlu0 %269, %v267
      %v271 = vpop.permute.xlu0 %270
      %v273 = vunpack.c.l.s4 839922192
      %v274 = vunpack.c.0.s8 %v273
      %v275 = vlaneseq
      %v276 = vshrl.u32 %v275, 7
      %v277 = vsub.s32 %v274, %v276
      %v278 = vrot.slane %v271, %v277
      %v280 = vmul.f32 %v265, %v278
      %v281 = vmul.f32 %v266, %v278
      %v282 = vld [vmem:[%s4] sm:$0xf]
      %284 = vset.pattern.permute.xlu0 0
      %285 = vperm.xlu0 %284, %v282
      %v286 = vpop.permute.xlu0 %285
      %v288 = vunpack.c.l.s4 839922192
      %v289 = vunpack.c.0.s8 %v288
      %v290 = vlaneseq
      %v291 = vshrl.u32 %v290, 7
      %v292 = vsub.s32 %v289, %v291
      %v293 = vrot.slane %v286, %v292
      %v295 = vadd.f32 %v280, %v293
      %v296 = vadd.f32 %v281, %v293
      %v297 = vmax.f32 %v295, 0.0
      %v298 = vmax.f32 %v296, 0.0
      %v299 = vld [vmem:[%s2] sm:$0xf]
      %v301 = vlaneseq
      %v302 = vshrl.u32 %v301, 7
      %v303 = vsub.s32 0, %v302
      %v304 = vrot.slane %v299, %v303
      %v305 = vlaneseq
      %v306 = vshrl.u32 %v305, 7
      %v307 = vsub.s32 1, %v306
      %v308 = vrot.slane %v299, %v307
      %v309 = vlaneseq
      %v310 = vshrl.u32 %v309, 7
      %v311 = vsub.s32 2, %v310
      %v312 = vrot.slane %v299, %v311
      %v313 = vlaneseq
      %v314 = vshrl.u32 %v313, 7
      %v315 = vsub.s32 3, %v314
      %v316 = vrot.slane %v299, %v315
      %v317 = vcombine.low %v304, %v308
      %v318 = vcombine.low %v312, %v316
      %v321 = vmul.f32 %v297, %v317
      %v322 = vmul.f32 %v298, %v318
      %v325 = vcombine.high %v321, %v321
      %v326 = vcombine.high %v322, %v322
      %v329 = vpack.c.bf16 %v321, %v321
      %v330 = vpack.c.bf16 %v325, %v325
      %v331 = vpack.c.bf16 %v322, %v322
      %v332 = vpack.c.bf16 %v326, %v326
      %v337 = vcombine.low %v329, %v330
      %v338 = vcombine.low %v331, %v332
      %v340 = vunpack.c.l.s4 1983009808
      %v341 = vunpack.c.0.s8 %v340
      %v342 = vlaneseq
      %v343 = vshrl.u32 %v342, 7
      %v344 = vsub.s32 %v341, %v343
      %v345 = vrot.slane %v337, %v344
      %v347 = vunpack.c.l.s4 1983009808
      %v348 = vunpack.c.0.s8 %v347
      %v349 = vlaneseq
      %v350 = vshrl.u32 %v349, 7
      %v351 = vsub.s32 %v348, %v350
      %v352 = vrot.slane %v338, %v351
      %v353 = vcombine.low %v345, %v352
      %355 = vst [vmem:[#allocation2] sm:$0xff] %v353
      %vm356 = vcmask 148480
      %357 = vst.msk [vmem:[%s258] sm:$0x3] %vm356, 0
      %vm358 = vcmask 1041560
      %359 = vst.msk [vmem:[%s258 + $0x6] sm:$0x3] %vm358, 0
      %v360 = vld [vmem:[%s1] sm:$0x3]
      %v361 = vld [vmem:[%s1 + $0x2] sm:$0x3]
      %v362 = vld [vmem:[%s1 + $0x4] sm:$0x3]
      %v363 = vld [vmem:[%s1 + $0x6] sm:$0x3]
      %v364 = vld [vmem:[%s1 + $0x8] sm:$0x3]
      %v365 = vld [vmem:[%s1 + $0xa] sm:$0x3]
      %v366 = vld [vmem:[%s1 + $0xc] sm:$0x3]
      %v367 = vld [vmem:[%s1 + $0xe] sm:$0x3]
      %v368 = vld [vmem:[%s1 + $0x10] sm:$0x3]
      %v369 = vld [vmem:[#allocation2] sm:$0x3f]
      %v370 = vld [vmem:[#allocation2] sm:$0xff]
      %v372 = vcombine.high %v370, %v370
      %v374 = vunpack.c.l.s4 1983009808
      %v375 = vunpack.c.0.s8 %v374
      %v376 = vlaneseq
      %v377 = vshrl.u32 %v376, 7
      %v378 = vsub.s32 %v375, %v377
      %v379 = vrot.slane %v370, %v378
      %v381 = vunpack.c.l.s4 1983009808
      %v382 = vunpack.c.0.s8 %v381
      %v383 = vlaneseq
      %v384 = vshrl.u32 %v383, 7
      %v385 = vsub.s32 %v382, %v384
      %v386 = vrot.slane %v372, %v385
      %v387 = vcombine.high %v379, %v379
      %v388 = vcombine.high %v386, %v386
      %389 = vrot.lane.b32.xlu0 %v379, 127
      %v390 = vpop.permute.xlu0 %389
      %391 = vrot.lane.b32.xlu0 %v387, 127
      %v392 = vpop.permute.xlu0 %391
      %393 = vrot.lane.b32.xlu0 %v386, 127
      %v394 = vpop.permute.xlu0 %393
      %395 = vrot.lane.b32.xlu0 %v388, 127
      %v396 = vpop.permute.xlu0 %395
      %vm397 = vcmask 1039360
      %v398 = vsel %vm397, %v390, %v392
      %v399 = vsel %vm397, %v392, %v394
      %v400 = vsel %vm397, %v394, %v396
      %vm401 = vcmask 31744
      %v403 = vsel %vm401, %v361, 0
      %vm405 = vcmask 1041408
      %v407 = vsel %vm405, %v398, 0
      %v410 = vsel %vm405, %v399, 0
      %v413 = vsel %vm405, %v400, 0
      %415 = vmatprep.subr.bf16.mxu0 %v410
      %416 = vmatpush1.bf16.msra.mxu0 %v407
      %417 = vmatprep.subr.bf16.mxu0 0
      %418 = vmatpush1.bf16.msra.mxu0 0
      %419 = vmatprep.subr.bf16.mxu0 0
      %420 = vmatpush1.bf16.msra.mxu0 0
      %421 = vmatprep.subr.bf16.mxu0 0
      %422 = vmatpush1.bf16.msra.mxu0 0
      %423 = vmatprep.subr.bf16.mxu0 0
      %424 = vmatpush1.bf16.msra.mxu0 0
      %425 = vmatprep.subr.bf16.mxu0 0
      %426 = vmatpush1.bf16.msra.mxu0 0
      %427 = vmatprep.subr.bf16.mxu0 0
      %428 = vmatpush1.bf16.msra.mxu0 0
      %429 = vmatprep.subr.bf16.mxu0 0
      %430 = vmatpush1.bf16.msra.mxu0 0
      %431 = vmatprep.subr.bf16.mxu0 0
      %432 = vmatpush1.bf16.msra.mxu0 0
      %433 = vmatprep.subr.bf16.mxu0 0
      %434 = vmatpush1.bf16.msra.mxu0 0
      %435 = vmatprep.subr.bf16.mxu0 0
      %436 = vmatpush1.bf16.msra.mxu0 0
      %437 = vmatprep.subr.bf16.mxu0 0
      %438 = vmatpush1.bf16.msra.mxu0 0
      %439 = vmatprep.subr.bf16.mxu0 0
      %440 = vmatpush1.bf16.msra.mxu0 0
      %441 = vmatprep.subr.bf16.mxu0 0
      %442 = vmatpush1.bf16.msra.mxu0 0
      %443 = vmatprep.subr.bf16.mxu0 0
      %444 = vmatpush1.bf16.msra.mxu0 0
      %445 = vmatprep.subr.bf16.mxu0 0
      %446 = vmatpush1.bf16.msra.mxu0 0
      %447 = vmatprep.mubr.bf16.mxu0 0
      %448 = vmatmul.mubr.bf16.gmra.mrb[0].mxu0 %v403
      %v449 = vpop.f32.mrb[0].mxu0
      %v450 = vadd.f32 0.0, %v449
      %v451 = vpop.f32.mrb[0].mxu0
      %v452 = vadd.f32 0.0, %v451
      %v453 = vpop.f32.mrb[0].mxu0
      %v454 = vpop.f32.mrb[0].mxu0
      %455 = vdwg.mxu0
      %456 = vmatprep.subr.bf16.mxu0 0
      %457 = vmatpush1.bf16.msra.mxu0 %v413
      %458 = vmatprep.subr.bf16.mxu0 0
      %459 = vmatpush1.bf16.msra.mxu0 0
      %460 = vmatprep.subr.bf16.mxu0 0
      %461 = vmatpush1.bf16.msra.mxu0 0
      %462 = vmatprep.subr.bf16.mxu0 0
      %463 = vmatpush1.bf16.msra.mxu0 0
      %464 = vmatprep.subr.bf16.mxu0 0
      %465 = vmatpush1.bf16.msra.mxu0 0
      %466 = vmatprep.subr.bf16.mxu0 0
      %467 = vmatpush1.bf16.msra.mxu0 0
      %468 = vmatprep.subr.bf16.mxu0 0
      %469 = vmatpush1.bf16.msra.mxu0 0
      %470 = vmatprep.subr.bf16.mxu0 0
      %471 = vmatpush1.bf16.msra.mxu0 0
      %472 = vmatprep.subr.bf16.mxu0 0
      %473 = vmatpush1.bf16.msra.mxu0 0
      %474 = vmatprep.subr.bf16.mxu0 0
      %475 = vmatpush1.bf16.msra.mxu0 0
      %476 = vmatprep.subr.bf16.mxu0 0
      %477 = vmatpush1.bf16.msra.mxu0 0
      %478 = vmatprep.subr.bf16.mxu0 0
      %479 = vmatpush1.bf16.msra.mxu0 0
      %480 = vmatprep.subr.bf16.mxu0 0
      %481 = vmatpush1.bf16.msra.mxu0 0
      %482 = vmatprep.subr.bf16.mxu0 0
      %483 = vmatpush1.bf16.msra.mxu0 0
      %484 = vmatprep.subr.bf16.mxu0 0
      %485 = vmatpush1.bf16.msra.mxu0 0
      %486 = vmatprep.subr.bf16.mxu0 0
      %487 = vmatpush1.bf16.msra.mxu0 0
      %488 = vmatprep.mubr.bf16.mxu0 0
      %489 = vmatmul.mubr.bf16.gmra.mrb[0].mxu0 %v403
      %v490 = vpop.f32.mrb[0].mxu0
      %v491 = vadd.f32 0.0, %v490
      %v492 = vpop.f32.mrb[0].mxu0
      %v493 = vpop.f32.mrb[0].mxu0
      %v494 = vpop.f32.mrb[0].mxu0
      %495 = vdwg.mxu0
      %v497 = vcombine.high %v369, %v369
      %v499 = vunpack.c.l.s4 1983009808
      %v500 = vunpack.c.0.s8 %v499
      %v501 = vlaneseq
      %v502 = vshrl.u32 %v501, 7
      %v503 = vsub.s32 %v500, %v502
      %v504 = vrot.slane %v369, %v503
      %v506 = vunpack.c.l.s4 1983009808
      %v507 = vunpack.c.0.s8 %v506
      %v508 = vlaneseq
      %v509 = vshrl.u32 %v508, 7
      %v510 = vsub.s32 %v507, %v509
      %v511 = vrot.slane %v497, %v510
      %v512 = vcombine.high %v504, %v504
      %v514 = vsel %vm401, %v360, 0
      %v517 = vsel %vm405, %v504, 0
      %v520 = vsel %vm405, %v512, 0
      %v523 = vsel %vm405, %v511, 0
      %525 = vmatprep.subr.bf16.mxu0 %v520
      %526 = vmatpush1.bf16.msra.mxu0 %v517
      %527 = vmatprep.subr.bf16.mxu0 0
      %528 = vmatpush1.bf16.msra.mxu0 0
      %529 = vmatprep.subr.bf16.mxu0 0
      %530 = vmatpush1.bf16.msra.mxu0 0
      %531 = vmatprep.subr.bf16.mxu0 0
      %532 = vmatpush1.bf16.msra.mxu0 0
      %533 = vmatprep.subr.bf16.mxu0 0
      %534 = vmatpush1.bf16.msra.mxu0 0
      %535 = vmatprep.subr.bf16.mxu0 0
      %536 = vmatpush1.bf16.msra.mxu0 0
      %537 = vmatprep.subr.bf16.mxu0 0
      %538 = vmatpush1.bf16.msra.mxu0 0
      %539 = vmatprep.subr.bf16.mxu0 0
      %540 = vmatpush1.bf16.msra.mxu0 0
      %541 = vmatprep.subr.bf16.mxu0 0
      %542 = vmatpush1.bf16.msra.mxu0 0
      %543 = vmatprep.subr.bf16.mxu0 0
      %544 = vmatpush1.bf16.msra.mxu0 0
      %545 = vmatprep.subr.bf16.mxu0 0
      %546 = vmatpush1.bf16.msra.mxu0 0
      %547 = vmatprep.subr.bf16.mxu0 0
      %548 = vmatpush1.bf16.msra.mxu0 0
      %549 = vmatprep.subr.bf16.mxu0 0
      %550 = vmatpush1.bf16.msra.mxu0 0
      %551 = vmatprep.subr.bf16.mxu0 0
      %552 = vmatpush1.bf16.msra.mxu0 0
      %553 = vmatprep.subr.bf16.mxu0 0
      %554 = vmatpush1.bf16.msra.mxu0 0
      %555 = vmatprep.subr.bf16.mxu0 0
      %556 = vmatpush1.bf16.msra.mxu0 0
      %557 = vmatprep.mubr.bf16.mxu0 0
      %558 = vmatmul.mubr.bf16.gmra.mrb[0].mxu0 %v514
      %v559 = vpop.f32.mrb[0].mxu0
      %v560 = vadd.f32 %v450, %v559
      %v561 = vpop.f32.mrb[0].mxu0
      %v562 = vadd.f32 %v452, %v561
      %v563 = vpop.f32.mrb[0].mxu0
      %v564 = vpop.f32.mrb[0].mxu0
      %565 = vdwg.mxu0
      %566 = vmatprep.subr.bf16.mxu0 0
      %567 = vmatpush1.bf16.msra.mxu0 %v523
      %568 = vmatprep.subr.bf16.mxu0 0
      %569 = vmatpush1.bf16.msra.mxu0 0
      %570 = vmatprep.subr.bf16.mxu0 0
      %571 = vmatpush1.bf16.msra.mxu0 0
      %572 = vmatprep.subr.bf16.mxu0 0
      %573 = vmatpush1.bf16.msra.mxu0 0
      %574 = vmatprep.subr.bf16.mxu0 0
      %575 = vmatpush1.bf16.msra.mxu0 0
      %576 = vmatprep.subr.bf16.mxu0 0
      %577 = vmatpush1.bf16.msra.mxu0 0
      %578 = vmatprep.subr.bf16.mxu0 0
      %579 = vmatpush1.bf16.msra.mxu0 0
      %580 = vmatprep.subr.bf16.mxu0 0
      %581 = vmatpush1.bf16.msra.mxu0 0
      %582 = vmatprep.subr.bf16.mxu0 0
      %583 = vmatpush1.bf16.msra.mxu0 0
      %584 = vmatprep.subr.bf16.mxu0 0
      %585 = vmatpush1.bf16.msra.mxu0 0
      %586 = vmatprep.subr.bf16.mxu0 0
      %587 = vmatpush1.bf16.msra.mxu0 0
      %588 = vmatprep.subr.bf16.mxu0 0
      %589 = vmatpush1.bf16.msra.mxu0 0
      %590 = vmatprep.subr.bf16.mxu0 0
      %591 = vmatpush1.bf16.msra.mxu0 0
      %592 = vmatprep.subr.bf16.mxu0 0
      %593 = vmatpush1.bf16.msra.mxu0 0
      %594 = vmatprep.subr.bf16.mxu0 0
      %595 = vmatpush1.bf16.msra.mxu0 0
      %596 = vmatprep.subr.bf16.mxu0 0
      %597 = vmatpush1.bf16.msra.mxu0 0
      %598 = vmatprep.mubr.bf16.mxu0 0
      %599 = vmatmul.mubr.bf16.gmra.mrb[0].mxu0 %v514
      %v600 = vpop.f32.mrb[0].mxu0
      %v601 = vadd.f32 %v491, %v600
      %v602 = vpop.f32.mrb[0].mxu0
      %v603 = vpop.f32.mrb[0].mxu0
      %v604 = vpop.f32.mrb[0].mxu0
      %605 = vdwg.mxu0
      %v606 = vld [vmem:[#allocation2] sm:$0xff]
      %v608 = vcombine.high %v606, %v606
      %v610 = vunpack.c.l.s4 1983009808
      %v611 = vunpack.c.0.s8 %v610
      %v612 = vlaneseq
      %v613 = vshrl.u32 %v612, 7
      %v614 = vsub.s32 %v611, %v613
      %v615 = vrot.slane %v606, %v614
      %v617 = vunpack.c.l.s4 1983009808
      %v618 = vunpack.c.0.s8 %v617
      %v619 = vlaneseq
      %v620 = vshrl.u32 %v619, 7
      %v621 = vsub.s32 %v618, %v620
      %v622 = vrot.slane %v608, %v621
      %v623 = vcombine.high %v615, %v615
      %v624 = vcombine.high %v622, %v622
      %625 = vrot.lane.b32.xlu0 %v615, 126
      %v626 = vpop.permute.xlu0 %625
      %627 = vrot.lane.b32.xlu0 %v623, 126
      %v628 = vpop.permute.xlu0 %627
      %629 = vrot.lane.b32.xlu0 %v622, 126
      %v630 = vpop.permute.xlu0 %629
      %631 = vrot.lane.b32.xlu0 %v624, 126
      %v632 = vpop.permute.xlu0 %631
      %vm633 = vcmask 1031168
      %v634 = vsel %vm633, %v626, %v628
      %v635 = vsel %vm633, %v628, %v630
      %v636 = vsel %vm633, %v630, %v632
      %v638 = vsel %vm401, %v362, 0
      %v641 = vsel %vm405, %v634, 0
      %v644 = vsel %vm405, %v635, 0
      %v647 = vsel %vm405, %v636, 0
      %649 = vmatprep.subr.bf16.mxu0 %v644
      %650 = vmatpush1.bf16.msra.mxu0 %v641
      %651 = vmatprep.subr.bf16.mxu0 0
      %652 = vmatpush1.bf16.msra.mxu0 0
      %653 = vmatprep.subr.bf16.mxu0 0
      %654 = vmatpush1.bf16.msra.mxu0 0
      %655 = vmatprep.subr.bf16.mxu0 0
      %656 = vmatpush1.bf16.msra.mxu0 0
      %657 = vmatprep.subr.bf16.mxu0 0
      %658 = vmatpush1.bf16.msra.mxu0 0
      %659 = vmatprep.subr.bf16.mxu0 0
      %660 = vmatpush1.bf16.msra.mxu0 0
      %661 = vmatprep.subr.bf16.mxu0 0
      %662 = vmatpush1.bf16.msra.mxu0 0
      %663 = vmatprep.subr.bf16.mxu0 0
      %664 = vmatpush1.bf16.msra.mxu0 0
      %665 = vmatprep.subr.bf16.mxu0 0
      %666 = vmatpush1.bf16.msra.mxu0 0
      %667 = vmatprep.subr.bf16.mxu0 0
      %668 = vmatpush1.bf16.msra.mxu0 0
      %669 = vmatprep.subr.bf16.mxu0 0
      %670 = vmatpush1.bf16.msra.mxu0 0
      %671 = vmatprep.subr.bf16.mxu0 0
      %672 = vmatpush1.bf16.msra.mxu0 0
      %673 = vmatprep.subr.bf16.mxu0 0
      %674 = vmatpush1.bf16.msra.mxu0 0
      %675 = vmatprep.subr.bf16.mxu0 0
      %676 = vmatpush1.bf16.msra.mxu0 0
      %677 = vmatprep.subr.bf16.mxu0 0
      %678 = vmatpush1.bf16.msra.mxu0 0
      %679 = vmatprep.subr.bf16.mxu0 0
      %680 = vmatpush1.bf16.msra.mxu0 0
      %681 = vmatprep.mubr.bf16.mxu0 0
      %682 = vmatmul.mubr.bf16.gmra.mrb[0].mxu0 %v638
      %v683 = vpop.f32.mrb[0].mxu0
      %v684 = vadd.f32 0.0, %v683
      %v685 = vpop.f32.mrb[0].mxu0
      %v686 = vadd.f32 0.0, %v685
      %v687 = vpop.f32.mrb[0].mxu0
      %v688 = vpop.f32.mrb[0].mxu0
      %689 = vdwg.mxu0
      %690 = vmatprep.subr.bf16.mxu0 0
      %691 = vmatpush1.bf16.msra.mxu0 %v647
      %692 = vmatprep.subr.bf16.mxu0 0
      %693 = vmatpush1.bf16.msra.mxu0 0
      %694 = vmatprep.subr.bf16.mxu0 0
      %695 = vmatpush1.bf16.msra.mxu0 0
      %696 = vmatprep.subr.bf16.mxu0 0
      %697 = vmatpush1.bf16.msra.mxu0 0
      %698 = vmatprep.subr.bf16.mxu0 0
      %699 = vmatpush1.bf16.msra.mxu0 0
      %700 = vmatprep.subr.bf16.mxu0 0
      %701 = vmatpush1.bf16.msra.mxu0 0
      %702 = vmatprep.subr.bf16.mxu0 0
      %703 = vmatpush1.bf16.msra.mxu0 0
      %704 = vmatprep.subr.bf16.mxu0 0
      %705 = vmatpush1.bf16.msra.mxu0 0
      %706 = vmatprep.subr.bf16.mxu0 0
      %707 = vmatpush1.bf16.msra.mxu0 0
      %708 = vmatprep.subr.bf16.mxu0 0
      %709 = vmatpush1.bf16.msra.mxu0 0
      %710 = vmatprep.subr.bf16.mxu0 0
      %711 = vmatpush1.bf16.msra.mxu0 0
      %712 = vmatprep.subr.bf16.mxu0 0
      %713 = vmatpush1.bf16.msra.mxu0 0
      %714 = vmatprep.subr.bf16.mxu0 0
      %715 = vmatpush1.bf16.msra.mxu0 0
      %716 = vmatprep.subr.bf16.mxu0 0
      %717 = vmatpush1.bf16.msra.mxu0 0
      %718 = vmatprep.subr.bf16.mxu0 0
      %719 = vmatpush1.bf16.msra.mxu0 0
      %720 = vmatprep.subr.bf16.mxu0 0
      %721 = vmatpush1.bf16.msra.mxu0 0
      %722 = vmatprep.mubr.bf16.mxu0 0
      %723 = vmatmul.mubr.bf16.gmra.mrb[0].mxu0 %v638
      %v724 = vpop.f32.mrb[0].mxu0
      %v725 = vadd.f32 0.0, %v724
      %v726 = vpop.f32.mrb[0].mxu0
      %v727 = vpop.f32.mrb[0].mxu0
      %v728 = vpop.f32.mrb[0].mxu0
      %729 = vdwg.mxu0
      %v730 = vadd.f32 %v560, %v684
      %v731 = vadd.f32 %v562, %v686
      %v732 = vadd.f32 %v601, %v725
      %v733 = vld [vmem:[#allocation2] sm:$0xff]
      %v735 = vcombine.high %v733, %v733
      %v737 = vunpack.c.l.s4 1983009808
      %v738 = vunpack.c.0.s8 %v737
      %v739 = vlaneseq
      %v740 = vshrl.u32 %v739, 7
      %v741 = vsub.s32 %v738, %v740
      %v742 = vrot.slane %v733, %v741
      %v744 = vunpack.c.l.s4 1983009808
      %v745 = vunpack.c.0.s8 %v744
      %v746 = vlaneseq
      %v747 = vshrl.u32 %v746, 7
      %v748 = vsub.s32 %v745, %v747
      %v749 = vrot.slane %v735, %v748
      %v750 = vcombine.high %v742, %v742
      %v751 = vcombine.high %v749, %v749
      %752 = vrot.lane.b32.xlu0 %v742, 110
      %v753 = vpop.permute.xlu0 %752
      %754 = vrot.lane.b32.xlu0 %v750, 110
      %v755 = vpop.permute.xlu0 %754
      %756 = vrot.lane.b32.xlu0 %v749, 110
      %v757 = vpop.permute.xlu0 %756
      %758 = vrot.lane.b32.xlu0 %v751, 110
      %v759 = vpop.permute.xlu0 %758
      %vm760 = vcmask 900096
      %v761 = vsel %vm760, %v753, %v755
      %v762 = vsel %vm760, %v755, %v757
      %v763 = vsel %vm760, %v757, %v759
      %v765 = vsel %vm401, %v363, 0
      %v768 = vsel %vm405, %v761, 0
      %v771 = vsel %vm405, %v762, 0
      %v774 = vsel %vm405, %v763, 0
      %776 = vmatprep.subr.bf16.mxu0 %v771
      %777 = vmatpush1.bf16.msra.mxu0 %v768
      %778 = vmatprep.subr.bf16.mxu0 0
      %779 = vmatpush1.bf16.msra.mxu0 0
      %780 = vmatprep.subr.bf16.mxu0 0
      %781 = vmatpush1.bf16.msra.mxu0 0
      %782 = vmatprep.subr.bf16.mxu0 0
      %783 = vmatpush1.bf16.msra.mxu0 0
      %784 = vmatprep.subr.bf16.mxu0 0
      %785 = vmatpush1.bf16.msra.mxu0 0
      %786 = vmatprep.subr.bf16.mxu0 0
      %787 = vmatpush1.bf16.msra.mxu0 0
      %788 = vmatprep.subr.bf16.mxu0 0
      %789 = vmatpush1.bf16.msra.mxu0 0
      %790 = vmatprep.subr.bf16.mxu0 0
      %791 = vmatpush1.bf16.msra.mxu0 0
      %792 = vmatprep.subr.bf16.mxu0 0
      %793 = vmatpush1.bf16.msra.mxu0 0
      %794 = vmatprep.subr.bf16.mxu0 0
      %795 = vmatpush1.bf16.msra.mxu0 0
      %796 = vmatprep.subr.bf16.mxu0 0
      %797 = vmatpush1.bf16.msra.mxu0 0
      %798 = vmatprep.subr.bf16.mxu0 0
      %799 = vmatpush1.bf16.msra.mxu0 0
      %800 = vmatprep.subr.bf16.mxu0 0
      %801 = vmatpush1.bf16.msra.mxu0 0
      %802 = vmatprep.subr.bf16.mxu0 0
      %803 = vmatpush1.bf16.msra.mxu0 0
      %804 = vmatprep.subr.bf16.mxu0 0
      %805 = vmatpush1.bf16.msra.mxu0 0
      %806 = vmatprep.subr.bf16.mxu0 0
      %807 = vmatpush1.bf16.msra.mxu0 0
      %808 = vmatprep.mubr.bf16.mxu0 0
      %809 = vmatmul.mubr.bf16.gmra.mrb[0].mxu0 %v765
      %v810 = vpop.f32.mrb[0].mxu0
      %v811 = vadd.f32 0.0, %v810
      %v812 = vpop.f32.mrb[0].mxu0
      %v813 = vadd.f32 0.0, %v812
      %v814 = vpop.f32.mrb[0].mxu0
      %v815 = vpop.f32.mrb[0].mxu0
      %816 = vdwg.mxu0
      %817 = vmatprep.subr.bf16.mxu0 0
      %818 = vmatpush1.bf16.msra.mxu0 %v774
      %819 = vmatprep.subr.bf16.mxu0 0
      %820 = vmatpush1.bf16.msra.mxu0 0
      %821 = vmatprep.subr.bf16.mxu0 0
      %822 = vmatpush1.bf16.msra.mxu0 0
      %823 = vmatprep.subr.bf16.mxu0 0
      %824 = vmatpush1.bf16.msra.mxu0 0
      %825 = vmatprep.subr.bf16.mxu0 0
      %826 = vmatpush1.bf16.msra.mxu0 0
      %827 = vmatprep.subr.bf16.mxu0 0
      %828 = vmatpush1.bf16.msra.mxu0 0
      %829 = vmatprep.subr.bf16.mxu0 0
      %830 = vmatpush1.bf16.msra.mxu0 0
      %831 = vmatprep.subr.bf16.mxu0 0
      %832 = vmatpush1.bf16.msra.mxu0 0
      %833 = vmatprep.subr.bf16.mxu0 0
      %834 = vmatpush1.bf16.msra.mxu0 0
      %835 = vmatprep.subr.bf16.mxu0 0
      %836 = vmatpush1.bf16.msra.mxu0 0
      %837 = vmatprep.subr.bf16.mxu0 0
      %838 = vmatpush1.bf16.msra.mxu0 0
      %839 = vmatprep.subr.bf16.mxu0 0
      %840 = vmatpush1.bf16.msra.mxu0 0
      %841 = vmatprep.subr.bf16.mxu0 0
      %842 = vmatpush1.bf16.msra.mxu0 0
      %843 = vmatprep.subr.bf16.mxu0 0
      %844 = vmatpush1.bf16.msra.mxu0 0
      %845 = vmatprep.subr.bf16.mxu0 0
      %846 = vmatpush1.bf16.msra.mxu0 0
      %847 = vmatprep.subr.bf16.mxu0 0
      %848 = vmatpush1.bf16.msra.mxu0 0
      %849 = vmatprep.mubr.bf16.mxu0 0
      %850 = vmatmul.mubr.bf16.gmra.mrb[0].mxu0 %v765
      %v851 = vpop.f32.mrb[0].mxu0
      %v852 = vadd.f32 0.0, %v851
      %v853 = vpop.f32.mrb[0].mxu0
      %v854 = vpop.f32.mrb[0].mxu0
      %v855 = vpop.f32.mrb[0].mxu0
      %856 = vdwg.mxu0
      %v857 = vadd.f32 %v730, %v811
      %v858 = vadd.f32 %v731, %v813
      %v859 = vadd.f32 %v732, %v852
      %v860 = vld [vmem:[#allocation2] sm:$0xff]
      %v862 = vcombine.high %v860, %v860
      %v864 = vunpack.c.l.s4 1983009808
      %v865 = vunpack.c.0.s8 %v864
      %v866 = vlaneseq
      %v867 = vshrl.u32 %v866, 7
      %v868 = vsub.s32 %v865, %v867
      %v869 = vrot.slane %v860, %v868
      %v871 = vunpack.c.l.s4 1983009808
      %v872 = vunpack.c.0.s8 %v871
      %v873 = vlaneseq
      %v874 = vshrl.u32 %v873, 7
      %v875 = vsub.s32 %v872, %v874
      %v876 = vrot.slane %v862, %v875
      %v877 = vcombine.high %v869, %v869
      %v878 = vcombine.high %v876, %v876
      %879 = vrot.lane.b32.xlu0 %v869, 109
      %v880 = vpop.permute.xlu0 %879
      %881 = vrot.lane.b32.xlu0 %v877, 109
      %v882 = vpop.permute.xlu0 %881
      %883 = vrot.lane.b32.xlu0 %v876, 109
      %v884 = vpop.permute.xlu0 %883
      %885 = vrot.lane.b32.xlu0 %v878, 109
      %v886 = vpop.permute.xlu0 %885
      %vm887 = vcmask 891904
      %v888 = vsel %vm887, %v880, %v882
      %v889 = vsel %vm887, %v882, %v884
      %v890 = vsel %vm887, %v884, %v886
      %v892 = vsel %vm401, %v364, 0
      %v895 = vsel %vm405, %v888, 0
      %v898 = vsel %vm405, %v889, 0
      %v901 = vsel %vm405, %v890, 0
      %903 = vmatprep.subr.bf16.mxu0 %v898
      %904 = vmatpush1.bf16.msra.mxu0 %v895
      %905 = vmatprep.subr.bf16.mxu0 0
      %906 = vmatpush1.bf16.msra.mxu0 0
      %907 = vmatprep.subr.bf16.mxu0 0
      %908 = vmatpush1.bf16.msra.mxu0 0
      %909 = vmatprep.subr.bf16.mxu0 0
      %910 = vmatpush1.bf16.msra.mxu0 0
      %911 = vmatprep.subr.bf16.mxu0 0
      %912 = vmatpush1.bf16.msra.mxu0 0
      %913 = vmatprep.subr.bf16.mxu0 0
      %914 = vmatpush1.bf16.msra.mxu0 0
      %915 = vmatprep.subr.bf16.mxu0 0
      %916 = vmatpush1.bf16.msra.mxu0 0
      %917 = vmatprep.subr.bf16.mxu0 0
      %918 = vmatpush1.bf16.msra.mxu0 0
      %919 = vmatprep.subr.bf16.mxu0 0
      %920 = vmatpush1.bf16.msra.mxu0 0
      %921 = vmatprep.subr.bf16.mxu0 0
      %922 = vmatpush1.bf16.msra.mxu0 0
      %923 = vmatprep.subr.bf16.mxu0 0
      %924 = vmatpush1.bf16.msra.mxu0 0
      %925 = vmatprep.subr.bf16.mxu0 0
      %926 = vmatpush1.bf16.msra.mxu0 0
      %927 = vmatprep.subr.bf16.mxu0 0
      %928 = vmatpush1.bf16.msra.mxu0 0
      %929 = vmatprep.subr.bf16.mxu0 0
      %930 = vmatpush1.bf16.msra.mxu0 0
      %931 = vmatprep.subr.bf16.mxu0 0
      %932 = vmatpush1.bf16.msra.mxu0 0
      %933 = vmatprep.subr.bf16.mxu0 0
      %934 = vmatpush1.bf16.msra.mxu0 0
      %935 = vmatprep.mubr.bf16.mxu0 0
      %936 = vmatmul.mubr.bf16.gmra.mrb[0].mxu0 %v892
      %v937 = vpop.f32.mrb[0].mxu0
      %v938 = vadd.f32 0.0, %v937
      %v939 = vpop.f32.mrb[0].mxu0
      %v940 = vadd.f32 0.0, %v939
      %v941 = vpop.f32.mrb[0].mxu0
      %v942 = vpop.f32.mrb[0].mxu0
      %943 = vdwg.mxu0
      %944 = vmatprep.subr.bf16.mxu0 0
      %945 = vmatpush1.bf16.msra.mxu0 %v901
      %946 = vmatprep.subr.bf16.mxu0 0
      %947 = vmatpush1.bf16.msra.mxu0 0
      %948 = vmatprep.subr.bf16.mxu0 0
      %949 = vmatpush1.bf16.msra.mxu0 0
      %950 = vmatprep.subr.bf16.mxu0 0
      %951 = vmatpush1.bf16.msra.mxu0 0
      %952 = vmatprep.subr.bf16.mxu0 0
      %953 = vmatpush1.bf16.msra.mxu0 0
      %954 = vmatprep.subr.bf16.mxu0 0
      %955 = vmatpush1.bf16.msra.mxu0 0
      %956 = vmatprep.subr.bf16.mxu0 0
      %957 = vmatpush1.bf16.msra.mxu0 0
      %958 = vmatprep.subr.bf16.mxu0 0
      %959 = vmatpush1.bf16.msra.mxu0 0
      %960 = vmatprep.subr.bf16.mxu0 0
      %961 = vmatpush1.bf16.msra.mxu0 0
      %962 = vmatprep.subr.bf16.mxu0 0
      %963 = vmatpush1.bf16.msra.mxu0 0
      %964 = vmatprep.subr.bf16.mxu0 0
      %965 = vmatpush1.bf16.msra.mxu0 0
      %966 = vmatprep.subr.bf16.mxu0 0
      %967 = vmatpush1.bf16.msra.mxu0 0
      %968 = vmatprep.subr.bf16.mxu0 0
      %969 = vmatpush1.bf16.msra.mxu0 0
      %970 = vmatprep.subr.bf16.mxu0 0
      %971 = vmatpush1.bf16.msra.mxu0 0
      %972 = vmatprep.subr.bf16.mxu0 0
      %973 = vmatpush1.bf16.msra.mxu0 0
      %974 = vmatprep.subr.bf16.mxu0 0
      %975 = vmatpush1.bf16.msra.mxu0 0
      %976 = vmatprep.mubr.bf16.mxu0 0
      %977 = vmatmul.mubr.bf16.gmra.mrb[0].mxu0 %v892
      %v978 = vpop.f32.mrb[0].mxu0
      %v979 = vadd.f32 0.0, %v978
      %v980 = vpop.f32.mrb[0].mxu0
      %v981 = vpop.f32.mrb[0].mxu0
      %v982 = vpop.f32.mrb[0].mxu0
      %983 = vdwg.mxu0
      %v984 = vadd.f32 %v857, %v938
      %v985 = vadd.f32 %v858, %v940
      %v986 = vadd.f32 %v859, %v979
      %v987 = vld [vmem:[#allocation2] sm:$0xff]
      %v989 = vcombine.high %v987, %v987
      %v991 = vunpack.c.l.s4 1983009808
      %v992 = vunpack.c.0.s8 %v991
      %v993 = vlaneseq
      %v994 = vshrl.u32 %v993, 7
      %v995 = vsub.s32 %v992, %v994
      %v996 = vrot.slane %v987, %v995
      %v998 = vunpack.c.l.s4 1983009808
      %v999 = vunpack.c.0.s8 %v998
      %v1000 = vlaneseq
      %v1001 = vshrl.u32 %v1000, 7
      %v1002 = vsub.s32 %v999, %v1001
      %v1003 = vrot.slane %v989, %v1002
      %v1004 = vcombine.high %v996, %v996
      %v1005 = vcombine.high %v1003, %v1003
      %1006 = vrot.lane.b32.xlu0 %v996, 108
      %v1007 = vpop.permute.xlu0 %1006
      %1008 = vrot.lane.b32.xlu0 %v1004, 108
      %v1009 = vpop.permute.xlu0 %1008
      %1010 = vrot.lane.b32.xlu0 %v1003, 108
      %v1011 = vpop.permute.xlu0 %1010
      %1012 = vrot.lane.b32.xlu0 %v1005, 108
      %v1013 = vpop.permute.xlu0 %1012
      %vm1014 = vcmask 883712
      %v1015 = vsel %vm1014, %v1007, %v1009
      %v1016 = vsel %vm1014, %v1009, %v1011
      %v1017 = vsel %vm1014, %v1011, %v1013
      %v1019 = vsel %vm401, %v365, 0
      %v1022 = vsel %vm405, %v1015, 0
      %v1025 = vsel %vm405, %v1016, 0
      %v1028 = vsel %vm405, %v1017, 0
      %1030 = vmatprep.subr.bf16.mxu0 %v1025
      %1031 = vmatpush1.bf16.msra.mxu0 %v1022
      %1032 = vmatprep.subr.bf16.mxu0 0
      %1033 = vmatpush1.bf16.msra.mxu0 0
      %1034 = vmatprep.subr.bf16.mxu0 0
      %1035 = vmatpush1.bf16.msra.mxu0 0
      %1036 = vmatprep.subr.bf16.mxu0 0
      %1037 = vmatpush1.bf16.msra.mxu0 0
      %1038 = vmatprep.subr.bf16.mxu0 0
      %1039 = vmatpush1.bf16.msra.mxu0 0
      %1040 = vmatprep.subr.bf16.mxu0 0
      %1041 = vmatpush1.bf16.msra.mxu0 0
      %1042 = vmatprep.subr.bf16.mxu0 0
      %1043 = vmatpush1.bf16.msra.mxu0 0
      %1044 = vmatprep.subr.bf16.mxu0 0
      %1045 = vmatpush1.bf16.msra.mxu0 0
      %1046 = vmatprep.subr.bf16.mxu0 0
      %1047 = vmatpush1.bf16.msra.mxu0 0
      %1048 = vmatprep.subr.bf16.mxu0 0
      %1049 = vmatpush1.bf16.msra.mxu0 0
      %1050 = vmatprep.subr.bf16.mxu0 0
      %1051 = vmatpush1.bf16.msra.mxu0 0
      %1052 = vmatprep.subr.bf16.mxu0 0
      %1053 = vmatpush1.bf16.msra.mxu0 0
      %1054 = vmatprep.subr.bf16.mxu0 0
      %1055 = vmatpush1.bf16.msra.mxu0 0
      %1056 = vmatprep.subr.bf16.mxu0 0
      %1057 = vmatpush1.bf16.msra.mxu0 0
      %1058 = vmatprep.subr.bf16.mxu0 0
      %1059 = vmatpush1.bf16.msra.mxu0 0
      %1060 = vmatprep.subr.bf16.mxu0 0
      %1061 = vmatpush1.bf16.msra.mxu0 0
      %1062 = vmatprep.mubr.bf16.mxu0 0
      %1063 = vmatmul.mubr.bf16.gmra.mrb[0].mxu0 %v1019
      %v1064 = vpop.f32.mrb[0].mxu0
      %v1065 = vadd.f32 0.0, %v1064
      %v1066 = vpop.f32.mrb[0].mxu0
      %v1067 = vadd.f32 0.0, %v1066
      %v1068 = vpop.f32.mrb[0].mxu0
      %v1069 = vpop.f32.mrb[0].mxu0
      %1070 = vdwg.mxu0
      %1071 = vmatprep.subr.bf16.mxu0 0
      %1072 = vmatpush1.bf16.msra.mxu0 %v1028
      %1073 = vmatprep.subr.bf16.mxu0 0
      %1074 = vmatpush1.bf16.msra.mxu0 0
      %1075 = vmatprep.subr.bf16.mxu0 0
      %1076 = vmatpush1.bf16.msra.mxu0 0
      %1077 = vmatprep.subr.bf16.mxu0 0
      %1078 = vmatpush1.bf16.msra.mxu0 0
      %1079 = vmatprep.subr.bf16.mxu0 0
      %1080 = vmatpush1.bf16.msra.mxu0 0
      %1081 = vmatprep.subr.bf16.mxu0 0
      %1082 = vmatpush1.bf16.msra.mxu0 0
      %1083 = vmatprep.subr.bf16.mxu0 0
      %1084 = vmatpush1.bf16.msra.mxu0 0
      %1085 = vmatprep.subr.bf16.mxu0 0
      %1086 = vmatpush1.bf16.msra.mxu0 0
      %1087 = vmatprep.subr.bf16.mxu0 0
      %1088 = vmatpush1.bf16.msra.mxu0 0
      %1089 = vmatprep.subr.bf16.mxu0 0
      %1090 = vmatpush1.bf16.msra.mxu0 0
      %1091 = vmatprep.subr.bf16.mxu0 0
      %1092 = vmatpush1.bf16.msra.mxu0 0
      %1093 = vmatprep.subr.bf16.mxu0 0
      %1094 = vmatpush1.bf16.msra.mxu0 0
      %1095 = vmatprep.subr.bf16.mxu0 0
      %1096 = vmatpush1.bf16.msra.mxu0 0
      %1097 = vmatprep.subr.bf16.mxu0 0
      %1098 = vmatpush1.bf16.msra.mxu0 0
      %1099 = vmatprep.subr.bf16.mxu0 0
      %1100 = vmatpush1.bf16.msra.mxu0 0
      %1101 = vmatprep.subr.bf16.mxu0 0
      %1102 = vmatpush1.bf16.msra.mxu0 0
      %1103 = vmatprep.mubr.bf16.mxu0 0
      %1104 = vmatmul.mubr.bf16.gmra.mrb[0].mxu0 %v1019
      %v1105 = vpop.f32.mrb[0].mxu0
      %v1106 = vadd.f32 0.0, %v1105
      %v1107 = vpop.f32.mrb[0].mxu0
      %v1108 = vpop.f32.mrb[0].mxu0
      %v1109 = vpop.f32.mrb[0].mxu0
      %1110 = vdwg.mxu0
      %v1111 = vadd.f32 %v984, %v1065
      %v1112 = vadd.f32 %v985, %v1067
      %v1113 = vadd.f32 %v986, %v1106
      %v1114 = vld [vmem:[#allocation2] sm:$0xff]
      %v1116 = vcombine.high %v1114, %v1114
      %v1118 = vunpack.c.l.s4 1983009808
      %v1119 = vunpack.c.0.s8 %v1118
      %v1120 = vlaneseq
      %v1121 = vshrl.u32 %v1120, 7
      %v1122 = vsub.s32 %v1119, %v1121
      %v1123 = vrot.slane %v1114, %v1122
      %v1125 = vunpack.c.l.s4 1983009808
      %v1126 = vunpack.c.0.s8 %v1125
      %v1127 = vlaneseq
      %v1128 = vshrl.u32 %v1127, 7
      %v1129 = vsub.s32 %v1126, %v1128
      %v1130 = vrot.slane %v1116, %v1129
      %v1131 = vcombine.high %v1123, %v1123
      %v1132 = vcombine.high %v1130, %v1130
      %1133 = vrot.lane.b32.xlu0 %v1123, 92
      %v1134 = vpop.permute.xlu0 %1133
      %1135 = vrot.lane.b32.xlu0 %v1131, 92
      %v1136 = vpop.permute.xlu0 %1135
      %1137 = vrot.lane.b32.xlu0 %v1130, 92
      %v1138 = vpop.permute.xlu0 %1137
      %1139 = vrot.lane.b32.xlu0 %v1132, 92
      %v1140 = vpop.permute.xlu0 %1139
      %vm1141 = vcmask 752640
      %v1142 = vsel %vm1141, %v1134, %v1136
      %v1143 = vsel %vm1141, %v1136, %v1138
      %v1144 = vsel %vm1141, %v1138, %v1140
      %v1146 = vsel %vm401, %v366, 0
      %v1149 = vsel %vm405, %v1142, 0
      %v1152 = vsel %vm405, %v1143, 0
      %v1155 = vsel %vm405, %v1144, 0
      %1157 = vmatprep.subr.bf16.mxu0 %v1152
      %1158 = vmatpush1.bf16.msra.mxu0 %v1149
      %1159 = vmatprep.subr.bf16.mxu0 0
      %1160 = vmatpush1.bf16.msra.mxu0 0
      %1161 = vmatprep.subr.bf16.mxu0 0
      %1162 = vmatpush1.bf16.msra.mxu0 0
      %1163 = vmatprep.subr.bf16.mxu0 0
      %1164 = vmatpush1.bf16.msra.mxu0 0
      %1165 = vmatprep.subr.bf16.mxu0 0
      %1166 = vmatpush1.bf16.msra.mxu0 0
      %1167 = vmatprep.subr.bf16.mxu0 0
      %1168 = vmatpush1.bf16.msra.mxu0 0
      %1169 = vmatprep.subr.bf16.mxu0 0
      %1170 = vmatpush1.bf16.msra.mxu0 0
      %1171 = vmatprep.subr.bf16.mxu0 0
      %1172 = vmatpush1.bf16.msra.mxu0 0
      %1173 = vmatprep.subr.bf16.mxu0 0
      %1174 = vmatpush1.bf16.msra.mxu0 0
      %1175 = vmatprep.subr.bf16.mxu0 0
      %1176 = vmatpush1.bf16.msra.mxu0 0
      %1177 = vmatprep.subr.bf16.mxu0 0
      %1178 = vmatpush1.bf16.msra.mxu0 0
      %1179 = vmatprep.subr.bf16.mxu0 0
      %1180 = vmatpush1.bf16.msra.mxu0 0
      %1181 = vmatprep.subr.bf16.mxu0 0
      %1182 = vmatpush1.bf16.msra.mxu0 0
      %1183 = vmatprep.subr.bf16.mxu0 0
      %1184 = vmatpush1.bf16.msra.mxu0 0
      %1185 = vmatprep.subr.bf16.mxu0 0
      %1186 = vmatpush1.bf16.msra.mxu0 0
      %1187 = vmatprep.subr.bf16.mxu0 0
      %1188 = vmatpush1.bf16.msra.mxu0 0
      %1189 = vmatprep.mubr.bf16.mxu0 0
      %1190 = vmatmul.mubr.bf16.gmra.mrb[0].mxu0 %v1146
      %v1191 = vpop.f32.mrb[0].mxu0
      %v1192 = vadd.f32 0.0, %v1191
      %v1193 = vpop.f32.mrb[0].mxu0
      %v1194 = vadd.f32 0.0, %v1193
      %v1195 = vpop.f32.mrb[0].mxu0
      %v1196 = vpop.f32.mrb[0].mxu0
      %1197 = vdwg.mxu0
      %1198 = vmatprep.subr.bf16.mxu0 0
      %1199 = vmatpush1.bf16.msra.mxu0 %v1155
      %1200 = vmatprep.subr.bf16.mxu0 0
      %1201 = vmatpush1.bf16.msra.mxu0 0
      %1202 = vmatprep.subr.bf16.mxu0 0
      %1203 = vmatpush1.bf16.msra.mxu0 0
      %1204 = vmatprep.subr.bf16.mxu0 0
      %1205 = vmatpush1.bf16.msra.mxu0 0
      %1206 = vmatprep.subr.bf16.mxu0 0
      %1207 = vmatpush1.bf16.msra.mxu0 0
      %1208 = vmatprep.subr.bf16.mxu0 0
      %1209 = vmatpush1.bf16.msra.mxu0 0
      %1210 = vmatprep.subr.bf16.mxu0 0
      %1211 = vmatpush1.bf16.msra.mxu0 0
      %1212 = vmatprep.subr.bf16.mxu0 0
      %1213 = vmatpush1.bf16.msra.mxu0 0
      %1214 = vmatprep.subr.bf16.mxu0 0
      %1215 = vmatpush1.bf16.msra.mxu0 0
      %1216 = vmatprep.subr.bf16.mxu0 0
      %1217 = vmatpush1.bf16.msra.mxu0 0
      %1218 = vmatprep.subr.bf16.mxu0 0
      %1219 = vmatpush1.bf16.msra.mxu0 0
      %1220 = vmatprep.subr.bf16.mxu0 0
      %1221 = vmatpush1.bf16.msra.mxu0 0
      %1222 = vmatprep.subr.bf16.mxu0 0
      %1223 = vmatpush1.bf16.msra.mxu0 0
      %1224 = vmatprep.subr.bf16.mxu0 0
      %1225 = vmatpush1.bf16.msra.mxu0 0
      %1226 = vmatprep.subr.bf16.mxu0 0
      %1227 = vmatpush1.bf16.msra.mxu0 0
      %1228 = vmatprep.subr.bf16.mxu0 0
      %1229 = vmatpush1.bf16.msra.mxu0 0
      %1230 = vmatprep.mubr.bf16.mxu0 0
      %1231 = vmatmul.mubr.bf16.gmra.mrb[0].mxu0 %v1146
      %v1232 = vpop.f32.mrb[0].mxu0
      %v1233 = vadd.f32 0.0, %v1232
      %v1234 = vpop.f32.mrb[0].mxu0
      %v1235 = vpop.f32.mrb[0].mxu0
      %v1236 = vpop.f32.mrb[0].mxu0
      %1237 = vdwg.mxu0
      %v1238 = vadd.f32 %v1111, %v1192
      %v1239 = vadd.f32 %v1112, %v1194
      %v1240 = vadd.f32 %v1113, %v1233
      %v1241 = vld [vmem:[#allocation2] sm:$0xff]
      %v1243 = vcombine.high %v1241, %v1241
      %v1245 = vunpack.c.l.s4 1983009808
      %v1246 = vunpack.c.0.s8 %v1245
      %v1247 = vlaneseq
      %v1248 = vshrl.u32 %v1247, 7
      %v1249 = vsub.s32 %v1246, %v1248
      %v1250 = vrot.slane %v1241, %v1249
      %v1252 = vunpack.c.l.s4 1983009808
      %v1253 = vunpack.c.0.s8 %v1252
      %v1254 = vlaneseq
      %v1255 = vshrl.u32 %v1254, 7
      %v1256 = vsub.s32 %v1253, %v1255
      %v1257 = vrot.slane %v1243, %v1256
      %v1258 = vcombine.high %v1250, %v1250
      %v1259 = vcombine.high %v1257, %v1257
      %1260 = vrot.lane.b32.xlu0 %v1250, 91
      %v1261 = vpop.permute.xlu0 %1260
      %1262 = vrot.lane.b32.xlu0 %v1258, 91
      %v1263 = vpop.permute.xlu0 %1262
      %1264 = vrot.lane.b32.xlu0 %v1257, 91
      %v1265 = vpop.permute.xlu0 %1264
      %1266 = vrot.lane.b32.xlu0 %v1259, 91
      %v1267 = vpop.permute.xlu0 %1266
      %vm1268 = vcmask 744448
      %v1269 = vsel %vm1268, %v1261, %v1263
      %v1270 = vsel %vm1268, %v1263, %v1265
      %v1271 = vsel %vm1268, %v1265, %v1267
      %v1273 = vsel %vm401, %v367, 0
      %v1276 = vsel %vm405, %v1269, 0
      %v1279 = vsel %vm405, %v1270, 0
      %v1282 = vsel %vm405, %v1271, 0
      %1284 = vmatprep.subr.bf16.mxu0 %v1279
      %1285 = vmatpush1.bf16.msra.mxu0 %v1276
      %1286 = vmatprep.subr.bf16.mxu0 0
      %1287 = vmatpush1.bf16.msra.mxu0 0
      %1288 = vmatprep.subr.bf16.mxu0 0
      %1289 = vmatpush1.bf16.msra.mxu0 0
      %1290 = vmatprep.subr.bf16.mxu0 0
      %1291 = vmatpush1.bf16.msra.mxu0 0
      %1292 = vmatprep.subr.bf16.mxu0 0
      %1293 = vmatpush1.bf16.msra.mxu0 0
      %1294 = vmatprep.subr.bf16.mxu0 0
      %1295 = vmatpush1.bf16.msra.mxu0 0
      %1296 = vmatprep.subr.bf16.mxu0 0
      %1297 = vmatpush1.bf16.msra.mxu0 0
      %1298 = vmatprep.subr.bf16.mxu0 0
      %1299 = vmatpush1.bf16.msra.mxu0 0
      %1300 = vmatprep.subr.bf16.mxu0 0
      %1301 = vmatpush1.bf16.msra.mxu0 0
      %1302 = vmatprep.subr.bf16.mxu0 0
      %1303 = vmatpush1.bf16.msra.mxu0 0
      %1304 = vmatprep.subr.bf16.mxu0 0
      %1305 = vmatpush1.bf16.msra.mxu0 0
      %1306 = vmatprep.subr.bf16.mxu0 0
      %1307 = vmatpush1.bf16.msra.mxu0 0
      %1308 = vmatprep.subr.bf16.mxu0 0
      %1309 = vmatpush1.bf16.msra.mxu0 0
      %1310 = vmatprep.subr.bf16.mxu0 0
      %1311 = vmatpush1.bf16.msra.mxu0 0
      %1312 = vmatprep.subr.bf16.mxu0 0
      %1313 = vmatpush1.bf16.msra.mxu0 0
      %1314 = vmatprep.subr.bf16.mxu0 0
      %1315 = vmatpush1.bf16.msra.mxu0 0
      %1316 = vmatprep.mubr.bf16.mxu0 0
      %1317 = vmatmul.mubr.bf16.gmra.mrb[0].mxu0 %v1273
      %v1318 = vpop.f32.mrb[0].mxu0
      %v1319 = vadd.f32 0.0, %v1318
      %v1320 = vpop.f32.mrb[0].mxu0
      %v1321 = vadd.f32 0.0, %v1320
      %v1322 = vpop.f32.mrb[0].mxu0
      %v1323 = vpop.f32.mrb[0].mxu0
      %1324 = vdwg.mxu0
      %1325 = vmatprep.subr.bf16.mxu0 0
      %1326 = vmatpush1.bf16.msra.mxu0 %v1282
      %1327 = vmatprep.subr.bf16.mxu0 0
      %1328 = vmatpush1.bf16.msra.mxu0 0
      %1329 = vmatprep.subr.bf16.mxu0 0
      %1330 = vmatpush1.bf16.msra.mxu0 0
      %1331 = vmatprep.subr.bf16.mxu0 0
      %1332 = vmatpush1.bf16.msra.mxu0 0
      %1333 = vmatprep.subr.bf16.mxu0 0
      %1334 = vmatpush1.bf16.msra.mxu0 0
      %1335 = vmatprep.subr.bf16.mxu0 0
      %1336 = vmatpush1.bf16.msra.mxu0 0
      %1337 = vmatprep.subr.bf16.mxu0 0
      %1338 = vmatpush1.bf16.msra.mxu0 0
      %1339 = vmatprep.subr.bf16.mxu0 0
      %1340 = vmatpush1.bf16.msra.mxu0 0
      %1341 = vmatprep.subr.bf16.mxu0 0
      %1342 = vmatpush1.bf16.msra.mxu0 0
      %1343 = vmatprep.subr.bf16.mxu0 0
      %1344 = vmatpush1.bf16.msra.mxu0 0
      %1345 = vmatprep.subr.bf16.mxu0 0
      %1346 = vmatpush1.bf16.msra.mxu0 0
      %1347 = vmatprep.subr.bf16.mxu0 0
      %1348 = vmatpush1.bf16.msra.mxu0 0
      %1349 = vmatprep.subr.bf16.mxu0 0
      %1350 = vmatpush1.bf16.msra.mxu0 0
      %1351 = vmatprep.subr.bf16.mxu0 0
      %1352 = vmatpush1.bf16.msra.mxu0 0
      %1353 = vmatprep.subr.bf16.mxu0 0
      %1354 = vmatpush1.bf16.msra.mxu0 0
      %1355 = vmatprep.subr.bf16.mxu0 0
      %1356 = vmatpush1.bf16.msra.mxu0 0
      %1357 = vmatprep.mubr.bf16.mxu0 0
      %1358 = vmatmul.mubr.bf16.gmra.mrb[0].mxu0 %v1273
      %v1359 = vpop.f32.mrb[0].mxu0
      %v1360 = vadd.f32 0.0, %v1359
      %v1361 = vpop.f32.mrb[0].mxu0
      %v1362 = vpop.f32.mrb[0].mxu0
      %v1363 = vpop.f32.mrb[0].mxu0
      %1364 = vdwg.mxu0
      %v1365 = vadd.f32 %v1238, %v1319
      %v1366 = vadd.f32 %v1239, %v1321
      %v1367 = vadd.f32 %v1240, %v1360
      %v1368 = vld [vmem:[#allocation2] sm:$0xff]
      %v1370 = vcombine.high %v1368, %v1368
      %v1372 = vunpack.c.l.s4 1983009808
      %v1373 = vunpack.c.0.s8 %v1372
      %v1374 = vlaneseq
      %v1375 = vshrl.u32 %v1374, 7
      %v1376 = vsub.s32 %v1373, %v1375
      %v1377 = vrot.slane %v1368, %v1376
      %v1379 = vunpack.c.l.s4 1983009808
      %v1380 = vunpack.c.0.s8 %v1379
      %v1381 = vlaneseq
      %v1382 = vshrl.u32 %v1381, 7
      %v1383 = vsub.s32 %v1380, %v1382
      %v1384 = vrot.slane %v1370, %v1383
      %v1385 = vcombine.high %v1377, %v1377
      %v1386 = vcombine.high %v1384, %v1384
      %1387 = vrot.lane.b32.xlu0 %v1377, 90
      %v1388 = vpop.permute.xlu0 %1387
      %1389 = vrot.lane.b32.xlu0 %v1385, 90
      %v1390 = vpop.permute.xlu0 %1389
      %1391 = vrot.lane.b32.xlu0 %v1384, 90
      %v1392 = vpop.permute.xlu0 %1391
      %1393 = vrot.lane.b32.xlu0 %v1386, 90
      %v1394 = vpop.permute.xlu0 %1393
      %vm1395 = vcmask 736256
      %v1396 = vsel %vm1395, %v1388, %v1390
      %v1397 = vsel %vm1395, %v1390, %v1392
      %v1398 = vsel %vm1395, %v1392, %v1394
      %v1400 = vsel %vm401, %v368, 0
      %v1403 = vsel %vm405, %v1396, 0
      %v1406 = vsel %vm405, %v1397, 0
      %v1409 = vsel %vm405, %v1398, 0
      %1411 = vmatprep.subr.bf16.mxu0 %v1406
      %1412 = vmatpush1.bf16.msra.mxu0 %v1403
      %1413 = vmatprep.subr.bf16.mxu0 0
      %1414 = vmatpush1.bf16.msra.mxu0 0
      %1415 = vmatprep.subr.bf16.mxu0 0
      %1416 = vmatpush1.bf16.msra.mxu0 0
      %1417 = vmatprep.subr.bf16.mxu0 0
      %1418 = vmatpush1.bf16.msra.mxu0 0
      %1419 = vmatprep.subr.bf16.mxu0 0
      %1420 = vmatpush1.bf16.msra.mxu0 0
      %1421 = vmatprep.subr.bf16.mxu0 0
      %1422 = vmatpush1.bf16.msra.mxu0 0
      %1423 = vmatprep.subr.bf16.mxu0 0
      %1424 = vmatpush1.bf16.msra.mxu0 0
      %1425 = vmatprep.subr.bf16.mxu0 0
      %1426 = vmatpush1.bf16.msra.mxu0 0
      %1427 = vmatprep.subr.bf16.mxu0 0
      %1428 = vmatpush1.bf16.msra.mxu0 0
      %1429 = vmatprep.subr.bf16.mxu0 0
      %1430 = vmatpush1.bf16.msra.mxu0 0
      %1431 = vmatprep.subr.bf16.mxu0 0
      %1432 = vmatpush1.bf16.msra.mxu0 0
      %1433 = vmatprep.subr.bf16.mxu0 0
      %1434 = vmatpush1.bf16.msra.mxu0 0
      %1435 = vmatprep.subr.bf16.mxu0 0
      %1436 = vmatpush1.bf16.msra.mxu0 0
      %1437 = vmatprep.subr.bf16.mxu0 0
      %1438 = vmatpush1.bf16.msra.mxu0 0
      %1439 = vmatprep.subr.bf16.mxu0 0
      %1440 = vmatpush1.bf16.msra.mxu0 0
      %1441 = vmatprep.subr.bf16.mxu0 0
      %1442 = vmatpush1.bf16.msra.mxu0 0
      %1443 = vmatprep.mubr.bf16.mxu0 0
      %1444 = vmatmul.mubr.bf16.gmra.mrb[0].mxu0 %v1400
      %v1445 = vpop.f32.mrb[0].mxu0
      %v1446 = vadd.f32 0.0, %v1445
      %v1447 = vpop.f32.mrb[0].mxu0
      %v1448 = vadd.f32 0.0, %v1447
      %v1449 = vpop.f32.mrb[0].mxu0
      %v1450 = vpop.f32.mrb[0].mxu0
      %1451 = vdwg.mxu0
      %1452 = vmatprep.subr.bf16.mxu0 0
      %1453 = vmatpush1.bf16.msra.mxu0 %v1409
      %1454 = vmatprep.subr.bf16.mxu0 0
      %1455 = vmatpush1.bf16.msra.mxu0 0
      %1456 = vmatprep.subr.bf16.mxu0 0
      %1457 = vmatpush1.bf16.msra.mxu0 0
      %1458 = vmatprep.subr.bf16.mxu0 0
      %1459 = vmatpush1.bf16.msra.mxu0 0
      %1460 = vmatprep.subr.bf16.mxu0 0
      %1461 = vmatpush1.bf16.msra.mxu0 0
      %1462 = vmatprep.subr.bf16.mxu0 0
      %1463 = vmatpush1.bf16.msra.mxu0 0
      %1464 = vmatprep.subr.bf16.mxu0 0
      %1465 = vmatpush1.bf16.msra.mxu0 0
      %1466 = vmatprep.subr.bf16.mxu0 0
      %1467 = vmatpush1.bf16.msra.mxu0 0
      %1468 = vmatprep.subr.bf16.mxu0 0
      %1469 = vmatpush1.bf16.msra.mxu0 0
      %1470 = vmatprep.subr.bf16.mxu0 0
      %1471 = vmatpush1.bf16.msra.mxu0 0
      %1472 = vmatprep.subr.bf16.mxu0 0
      %1473 = vmatpush1.bf16.msra.mxu0 0
      %1474 = vmatprep.subr.bf16.mxu0 0
      %1475 = vmatpush1.bf16.msra.mxu0 0
      %1476 = vmatprep.subr.bf16.mxu0 0
      %1477 = vmatpush1.bf16.msra.mxu0 0
      %1478 = vmatprep.subr.bf16.mxu0 0
      %1479 = vmatpush1.bf16.msra.mxu0 0
      %1480 = vmatprep.subr.bf16.mxu0 0
      %1481 = vmatpush1.bf16.msra.mxu0 0
      %1482 = vmatprep.subr.bf16.mxu0 0
      %1483 = vmatpush1.bf16.msra.mxu0 0
      %1484 = vmatprep.mubr.bf16.mxu0 0
      %1485 = vmatmul.mubr.bf16.gmra.mrb[0].mxu0 %v1400
      %v1486 = vpop.f32.mrb[0].mxu0
      %v1487 = vadd.f32 0.0, %v1486
      %v1488 = vpop.f32.mrb[0].mxu0
      %v1489 = vpop.f32.mrb[0].mxu0
      %v1490 = vpop.f32.mrb[0].mxu0
      %1491 = vdwg.mxu0
      %v1492 = vadd.f32 %v1365, %v1446
      %v1493 = vadd.f32 %v1366, %v1448
      %v1494 = vadd.f32 %v1367, %v1487
      %v1495 = vld [vmem:[%s2] sm:$0xf]
      %v1497 = vlaneseq
      %v1498 = vshrl.u32 %v1497, 7
      %v1499 = vsub.s32 0, %v1498
      %v1500 = vrot.slane %v1495, %v1499
      %v1501 = vlaneseq
      %v1502 = vshrl.u32 %v1501, 7
      %v1503 = vsub.s32 1, %v1502
      %v1504 = vrot.slane %v1495, %v1503
      %v1505 = vlaneseq
      %v1506 = vshrl.u32 %v1505, 7
      %v1507 = vsub.s32 2, %v1506
      %v1508 = vrot.slane %v1495, %v1507
      %v1509 = vlaneseq
      %v1510 = vshrl.u32 %v1509, 7
      %v1511 = vsub.s32 3, %v1510
      %v1512 = vrot.slane %v1495, %v1511
      %1513 = vrot.lane.b32.xlu0 %v1500, 109
      %v1514 = vpop.permute.xlu0 %1513
      %1515 = vrot.lane.b32.xlu0 %v1504, 109
      %v1516 = vpop.permute.xlu0 %1515
      %1517 = vrot.lane.b32.xlu0 %v1508, 109
      %v1518 = vpop.permute.xlu0 %1517
      %1519 = vrot.lane.b32.xlu0 %v1512, 109
      %v1520 = vpop.permute.xlu0 %1519
      %vm1521 = vcmask 891904
      %v1522 = vsel %vm1521, %v1514, %v1516
      %v1523 = vsel %vm1521, %v1516, %v1518
      %v1524 = vsel %vm1521, %v1518, %v1520
      %v1528 = vmul.f32 %v1492, %v1522
      %v1529 = vmul.f32 %v1493, %v1523
      %v1530 = vmul.f32 %v1494, %v1524
      %vm1531 = vcmask 1043456
      %v1532 = vsel %vm1531, %v1528, 0.0
      %v1533 = vsel %vm1531, %v1529, 0.0
      %v1534 = vadd.f32 %v1532, %v1533
      %v1535 = vsel %vm1531, %v1530, 0.0
      %v1536 = vadd.f32 %v1534, %v1535
      %1537 = vadd.xlane.f32.xlu0 %v1536
      %v1538 = vpop.xlane.xlu0 %1537
      %v1539 = vadd.f32 %v1538, 0.0
      %v1540 = vmul.f32 %v1528, %v1492
      %v1541 = vmul.f32 %v1529, %v1493
      %v1542 = vmul.f32 %v1530, %v1494
      %v1543 = vsel %vm1531, %v1540, 0.0
      %v1544 = vsel %vm1531, %v1541, 0.0
      %v1545 = vadd.f32 %v1543, %v1544
      %v1546 = vsel %vm1531, %v1542, 0.0
      %v1547 = vadd.f32 %v1545, %v1546
      %1548 = vadd.xlane.f32.xlu0 %v1547
      %v1549 = vpop.xlane.xlu0 %1548
      %v1550 = vadd.f32 %v1549, 0.0
      %v1551 = vpack.c.bf16 %v1492, %v1492
      %v1552 = vpack.c.bf16 %v1493, %v1493
      %v1553 = vpack.c.bf16 %v1494, %v1494
      %v1557 = vcombine.low %v1551, %v1552
      %v1559 = vunpack.c.l.s4 1983009808
      %v1560 = vunpack.c.0.s8 %v1559
      %v1561 = vlaneseq
      %v1562 = vshrl.u32 %v1561, 7
      %v1563 = vsub.s32 %v1560, %v1562
      %v1564 = vrot.slane %v1557, %v1563
      %v1566 = vunpack.c.l.s4 1983009808
      %v1567 = vunpack.c.0.s8 %v1566
      %v1568 = vlaneseq
      %v1569 = vshrl.u32 %v1568, 7
      %v1570 = vsub.s32 %v1567, %v1569
      %v1571 = vrot.slane %v1553, %v1570
      %v1572 = vcombine.low %v1564, %v1571
      %1573 = vrot.lane.b32.xlu0 %v1572, 19
      %v1574 = vpop.permute.xlu0 %1573
      %v1575 = vrot.slane %v1574, 6
      %vm1576 = vcmask 154624
      %v1577 = vsel %vm1576, %v1575, %v1574
      %vm1579 = vcmask 1043458
      %vm1580 = vmor %vm1579, %vm358
      %vm1581 = vcmask 1045508
      %vm1582 = vmor %vm1581, %vm1580
      %vm1583 = vcmask 154630
      %vm1584 = vmor %vm1583, %vm1582
      %1585 = vst.msk [vmem:[%s258] sm:$0xff] %vm1584, %v1577
      %vm1586 = vcmask 7168
      %v1587 = vsel %vm1586, %v1539, %v1550
      %vm1588 = vcmask 11264
      %1589 = vst.msk [vmem:[%s262] sm:$0xf] %vm1588, %v1587
      %p1590 = scmp.lt.s32.totalorder %s18, 1
      %s1591 = scalar_select %p1590, %s18, 1
      %s1592 = smul.addr %s1591, 4
      %s1593 = smul.addr %s1592, 2
      %s1594 = scalar_lea.vmem %s5, %s1593
      %p1595 = scmp.lt.s32.totalorder %s18, 1
      %s1596 = scalar_select %p1595, %s18, 1
      %s1597 = smul.addr %s1596, 4
      %s1598 = scalar_lea.vmem %s6, %s1597
      // Predicated region
      $region41: #{_lambda_.4} parent=39 // pred_check
        %p1599 = pneg %p146
      $region42: #{_lambda_.4} parent=39 // pred_check_branch
        %1601 = sbr.rel (%p1599) target = $region44
      $region43: #{_lambda_.4} parent=39 // pred_region
        _
      $region44: #{_lambda_.4} parent=39 // pred_fallthru
        _
      // Predicated region
      $region45: #{_lambda_.4} parent=39 // pred_check
        %p1602 = pneg %p172
      $region46: #{_lambda_.4} parent=39 // pred_check_branch
        %1604 = sbr.rel (%p1602) target = $region48
      $region47: #{_lambda_.4} parent=39 // pred_region
        _
      $region48: #{_lambda_.4} parent=39 // pred_fallthru
        _
    $region40: #{_lambda_.4} parent=5 // pred_fallthru
      _
    %p1605 = scmp.le.s32.totalorder 2, %s13
    // Predicated region
    $region49: #{_lambda_.4} parent=5 // pred_check
      %p1606 = pneg %p1605
    $region50: #{_lambda_.4} parent=5 // pred_check_branch
      %1608 = sbr.rel (%p1606) target = $region52
    $region51: #{_lambda_.4} parent=5 // pred_region
      %s1609 = ssub.s32 %s13, 2
      // Predicated region
      $region53: #{_lambda_.4} parent=51 // pred_check
        %p1610 = pneg %p152
      $region54: #{_lambda_.4} parent=51 // pred_check_branch
        %1612 = sbr.rel (%p1610) target = $region56
      $region55: #{_lambda_.4} parent=51 // pred_region
        %p1613 = scmp.lt.s32.totalorder %s19, 1
        %s1614 = scalar_select %p1613, %s19, 1
        %s1615 = smul.addr %s1614, 4
        %s1616 = smul.addr %s1615, 2
        %s1617 = scalar_lea.vmem %s5, %s1616
      $region56: #{_lambda_.4} parent=51 // pred_fallthru
        _
      // Predicated region
      $region57: #{_lambda_.4} parent=51 // pred_check
        %p1618 = pneg %p178
      $region58: #{_lambda_.4} parent=51 // pred_check_branch
        %1620 = sbr.rel (%p1618) target = $region60
      $region59: #{_lambda_.4} parent=51 // pred_region
        %p1621 = scmp.lt.s32.totalorder %s19, 1
        %s1622 = scalar_select %p1621, %s19, 1
        %s1623 = smul.addr %s1622, 4
        %s1624 = scalar_lea.vmem %s6, %s1623
      $region60: #{_lambda_.4} parent=51 // pred_fallthru
        _
    $region52: #{_lambda_.4} parent=5 // pred_fallthru
      _
  $region6: #{_lambda_.4} parent=0 // loop_footer
    %s17 = sadd.s32 1, %s13
  $region7: #{_lambda_.4} parent=0 // loop_footer_branch
    %12 = sbr.rel target = $region3
  $region8: #{_lambda_.4} parent=0 // loop_exit
    _

</llo_original>
